<compile_context>
chip_gen: v5e
topology: v5e:2x2
jax: 0.10.0
libtpu: 0.0.40
codegen_flags: <defaults>
</compile_context>

<pallas_src>
import functools
import math

import jax
import jax.numpy as jnp
from jax.experimental import pallas as pl
from jax.experimental.pallas import tpu as pltpu


# ----------------------------- small helpers --------------------------------------

_VMEM = pl.BlockSpec(memory_space=pltpu.MemorySpace.VMEM)
_PAR1 = pltpu.CompilerParams(dimension_semantics=("parallel",))


def _rup(x, m):
    return ((x + m - 1) // m) * m


def _ln_lastdim(x):
    # F.layer_norm over the last axis, no affine, eps=1e-5
    mu = jnp.mean(x, axis=-1, keepdims=True)
    var = jnp.mean(jnp.square(x - mu), axis=-1, keepdims=True)
    return (x - mu) * jax.lax.rsqrt(var + 1e-5)


def _sigmoid(x):
    # divide goes to the EUP reciprocal slot instead of the VALU
    return pl.reciprocal(1.0 + jnp.exp(-x), approx=True)


def _row_grid(R, D):
    """Row-blocked spec for (R, D) elementwise/LN kernels (full lane dim per block)."""
    br = next((b for b in (512, 256, 128, 64, 32, 16, 8) if R % b == 0), R)
    return pl.BlockSpec((br, D), lambda i: (i, 0)), (R // br,)


# ----------------------------- Pallas kernels -------------------------------------

def _bmm_bias_kernel(w_ref, p_ref, b_ref, o_ref, acc_ref):
    """out[b] = w @ p[b] + bias ; bf16 operands, f32 MXU accumulation."""
    @pl.when(pl.program_id(3) == 0)
    def _():
        acc_ref[...] = jnp.zeros_like(acc_ref)

    acc_ref[...] += jnp.dot(w_ref[...], p_ref[...],
                            preferred_element_type=jnp.float32)

    @pl.when(pl.program_id(3) == pl.num_programs(3) - 1)
    def _():
        o_ref[...] = acc_ref[...] + b_ref[...]


def _rig_kernel(sr_ref, si_ref, sg_ref, r_ref, ig_ref):
    # r = sigmoid(LN(xr+hr)), i = sigmoid(LN(xi+hi)), g = tanh(LN(xg+hg)); emit r and i*g
    r_ref[...] = _sigmoid(_ln_lastdim(sr_ref[...]))
    i = _sigmoid(_ln_lastdim(si_ref[...]))
    g = jnp.tanh(_ln_lastdim(sg_ref[...]))
    ig_ref[...] = i * g


def _attn_c_kernel(r_ref, ch_ref, ig_ref, g_ref, b_ref, c_ref, *, tau, scale):
    """recall = self_attention_fast(r, c_history) (softmax over the batch axis,
    faithful to the reference's F.softmax(scores, dim=0)), then
    c = i*g + LayerNorm_affine(c_history[-1] + recall)."""
    r = r_ref[...]                                               # (B, N)
    recall = jnp.zeros_like(r)
    for l in range(tau):                                         # loop avoids (tau,B,N) temps
        ch_l = ch_ref[l]                                         # (B, N)
        s_l = jnp.sum(r * ch_l, axis=-1, keepdims=True) * scale  # (B, 1) scores column l
        s_l = s_l - jnp.max(s_l, axis=0, keepdims=True)          # softmax over batch axis
        e_l = jnp.exp(s_l)
        att_l = e_l * pl.reciprocal(jnp.sum(e_l, axis=0, keepdims=True), approx=True)
        recall = recall + att_l * ch_l
    y = ch_ref[tau - 1] + recall
    mu = jnp.mean(y, axis=-1, keepdims=True)
    var = jnp.mean(jnp.square(y - mu), axis=-1, keepdims=True)
    ln = (y - mu) * jax.lax.rsqrt(var + 1e-5) * g_ref[...] + b_ref[...]
    c_ref[...] = ig_ref[...] + ln


def _m_kernel(si_ref, sg_ref, sf_ref, m_ref, out_ref):
    # m_new = sigmoid(LN(.)) * tanh(LN(.)) + sigmoid(LN(.)) * m
    i_p = _sigmoid(_ln_lastdim(si_ref[...]))
    g_p = jnp.tanh(_ln_lastdim(sg_ref[...]))
    f_p = _sigmoid(_ln_lastdim(sf_ref[...]))
    out_ref[...] = i_p * g_p + f_p * m_ref[...]


def _oh_kernel(so_ref, sc_ref, z_ref, h_ref):
    # o = sigmoid(LN(xo+ho + co+mo)); h = o * tanh(w111([c, m]))
    o = _sigmoid(_ln_lastdim(so_ref[...] + sc_ref[...]))
    h_ref[...] = o * jnp.tanh(z_ref[...])


# ----------------------------- Pallas wrappers ------------------------------------

def bmm_bias(w, p, bias):
    """out[b] = w @ p[b] + bias.

    w: (M, K) bf16, p: (B, K, N) bf16, bias: (M, 1) f32.
    Returns (B, M, Np) f32 with Np = N rounded up to a lane-dense multiple of 128;
    callers only consume the first N columns (padded columns are never read).
    """
    M, K = w.shape
    B, _, N = p.shape

    Mp = _rup(M, 8)
    tm = Mp if Mp <= 128 else 128
    Mp = _rup(M, tm)
    Kp = _rup(K, 128)
    tk = Kp if Kp <= 512 else 512
    Kp = _rup(K, tk)
    Np = _rup(N, 128)
    tn = Np if Np <= 512 else 512
    Np = _rup(N, tn)

    if (Mp, Kp) != (M, K):
        w = jnp.pad(w, ((0, Mp - M), (0, Kp - K)))
    if Mp != M:
        bias = jnp.pad(bias, ((0, Mp - M), (0, 0)))
    if (Kp, Np) != (K, N):
        p = jnp.pad(p, ((0, 0), (0, Kp - K), (0, Np - N)))

    out = pl.pallas_call(
        _bmm_bias_kernel,
        grid=(B, Mp // tm, Np // tn, Kp // tk),
        in_specs=[
            pl.BlockSpec((tm, tk), lambda b, i, j, k: (i, k)),         # weight (stationary in b)
            pl.BlockSpec((None, tk, tn), lambda b, i, j, k: (b, k, j)),  # patches
            pl.BlockSpec((tm, 1), lambda b, i, j, k: (i, 0)),           # per-row bias
        ],
        out_specs=pl.BlockSpec((None, tm, tn), lambda b, i, j, k: (b, i, j)),
        out_shape=jax.ShapeDtypeStruct((B, Mp, Np), jnp.float32),
        scratch_shapes=[pltpu.VMEM((tm, tn), jnp.float32)],
        compiler_params=pltpu.CompilerParams(
            dimension_semantics=("parallel", "parallel", "parallel", "arbitrary")),
    )(w, p, bias)
    if Mp != M:
        out = out[:, :M, :]
    return out


def fused_rig(s_r, s_i, s_g):
    R, D = s_r.shape
    spec, grid = _row_grid(R, D)
    r2, ig2 = pl.pallas_call(
        _rig_kernel,
        grid=grid,
        in_specs=[spec, spec, spec],
        out_specs=(spec, spec),
        out_shape=(jax.ShapeDtypeStruct((R, D), jnp.float32),
                   jax.ShapeDtypeStruct((R, D), jnp.float32)),
        compiler_params=_PAR1,
    )(s_r, s_i, s_g)
    return r2, ig2


def fused_attn_c(r2, ch, ig2, gamma, beta, *, tau, scale):
    B, N = r2.shape
    return pl.pallas_call(
        functools.partial(_attn_c_kernel, tau=tau, scale=scale),
        in_specs=[_VMEM] * 5,
        out_specs=_VMEM,
        out_shape=jax.ShapeDtypeStruct((B, N), jnp.float32),
    )(r2, ch, ig2, gamma, beta)


def fused_m(s_i, s_g, s_f, m):
    R, D = s_i.shape
    spec, grid = _row_grid(R, D)
    return pl.pallas_call(
        _m_kernel,
        grid=grid,
        in_specs=[spec] * 4,
        out_specs=spec,
        out_shape=jax.ShapeDtypeStruct((R, D), jnp.float32),
        compiler_params=_PAR1,
    )(s_i, s_g, s_f, m)


def fused_oh(s_o, s_c, z):
    R, D = s_o.shape
    spec, grid = _row_grid(R, D)
    return pl.pallas_call(
        _oh_kernel,
        grid=grid,
        in_specs=[spec] * 3,
        out_specs=spec,
        out_shape=jax.ShapeDtypeStruct((R, D), jnp.float32),
        compiler_params=_PAR1,
    )(s_o, s_c, z)


# ----------------------------- conv glue (data movement only) ---------------------

def _extract_patches(x, ksz):
    """x: (B, C, T, H, W) -> (B, C*ksz^3, Tp*Hp*Wp); K ordered (c, dz, dy, dx)
    to match w.reshape(Cout, C*ksz^3)."""
    B, C, T, H, W = x.shape
    Tp, Hp, Wp = T - ksz + 1, H - ksz + 1, W - ksz + 1
    cols = []
    for dz in range(ksz):
        for dy in range(ksz):
            for dx in range(ksz):
                cols.append(x[:, :, dz:dz + Tp, dy:dy + Hp, dx:dx + Wp])
    p = jnp.stack(cols, axis=2)                       # (B, C, k^3, Tp, Hp, Wp)
    return p.reshape(B, C * ksz ** 3, Tp * Hp * Wp), (Tp, Hp, Wp)


def _nearest_flat_idx(src, dst):
    """Flat lane indices realizing F.interpolate(mode='nearest') from src to dst."""
    Tp, Hp, Wp = src
    T, H, W = dst
    it = (jnp.arange(T) * Tp) // T
    ih = (jnp.arange(H) * Hp) // H
    iw = (jnp.arange(W) * Wp) // W
    return (it[:, None, None] * (Hp * Wp) + ih[None, :, None] * Wp
            + iw[None, None, :]).reshape(T * H * W)


def conv_deconv_group(w, patches, bias, idx):
    """Fused ConvDeconv3d group: matmul conv then nearest-resize gather."""
    y = bmm_bias(w, patches, bias)        # (B, M, Np) -- padded lanes never gathered
    return jnp.take(y, idx, axis=2)       # (B, M, T*H*W)


# ----------------------------- E3DLSTM cell ----------------------------------------

def cell_forward(params, x, c_history, m, h, *, hidden, ksz):
    """Faithful E3DLSTMCell.forward(x, c_history, m, h) -> (c_history, m, h)."""
    B, Cin, T, H, W = x.shape
    tau = c_history.shape[0]
    THW = T * H * W
    N = hidden * THW

    # bf16 matmul operands (f32 accumulation inside the kernels)
    xb = x.astype(jnp.bfloat16)
    hb = h.astype(jnp.bfloat16)
    mb = m.astype(jnp.bfloat16)
    px, src = _extract_patches(xb, ksz)
    ph, _ = _extract_patches(hb, ksz)
    pm, _ = _extract_patches(mb, ksz)
    idx = _nearest_flat_idx(src, (T, H, W))

    # Grouped gate convolutions (conv(x;Wx)+conv(h;Wh) == conv(cat(x,h); cat(Wx,Wh)))
    sA = conv_deconv_group(params["wA"], jnp.concatenate([px, ph], axis=1),
                           params["bA"], idx)          # (B, 4*hidden, THW): r,i,g,o sums
    sB = conv_deconv_group(params["wB"], jnp.concatenate([px, pm], axis=1),
                           params["bB"], idx)          # (B, 3*hidden, THW): i',g',f' sums

    def rows(t):                                       # (B, hidden, THW) -> (B*hidden, THW)
        return t.reshape(B * hidden, THW)

    s_r, s_i, s_g, s_o = (sA[:, k * hidden:(k + 1) * hidden] for k in range(4))
    r2, ig2 = fused_rig(rows(s_r), rows(s_i), rows(s_g))

    # recall + affine LayerNorm + c, fused in one kernel
    c2 = fused_attn_c(r2.reshape(B, N), c_history.reshape(tau, B, N), ig2.reshape(B, N),
                      params["ln_gamma"], params["ln_beta"],
                      tau=tau, scale=1.0 / math.sqrt(THW))
    c = c2.reshape(B, hidden, T, H, W)

    # m' path
    s_ip, s_gp, s_fp = (sB[:, k * hidden:(k + 1) * hidden] for k in range(3))
    m2 = fused_m(rows(s_ip), rows(s_gp), rows(s_fp), m.reshape(B * hidden, THW))
    m_new = m2.reshape(B, hidden, T, H, W)

    # o / h path: co(c)+mo(m_new) fused into one conv, 1x1x1 conv as a plain matmul
    cb = c.astype(jnp.bfloat16)
    mnb = m_new.astype(jnp.bfloat16)
    cm5 = jnp.concatenate([cb, mnb], axis=1)           # (B, 2*hidden, T, H, W)
    pcm, _ = _extract_patches(cm5, ksz)
    sC = conv_deconv_group(params["wC"], pcm, params["bC"], idx)      # co(c)+mo(m_new)

    z = bmm_bias(params["w111"], cm5.reshape(B, 2 * hidden, THW), params["b111"])
    z = z[:, :, :THW]                                  # no-op unless THW was lane-padded

    h2 = fused_oh(rows(s_o), rows(sC), rows(z))
    h_new = h2.reshape(B, hidden, T, H, W)

    c_history_new = jnp.concatenate([c_history[1:], c[None]], axis=0)
    return c_history_new, m_new, h_new


# ----------------------------- parameters ------------------------------------------

def init_cell_params(key, in_channels, hidden, ksz):
    """Per-gate Conv3d weights/biases, laid out like the PyTorch module."""
    x_names = ["xr", "xi", "xg", "xo", "xi_p", "xg_p", "xf_p"]     # ConvDeconv3d(Cin, hidden) w/ bias
    hm_names = ["hr", "hi", "hg", "ho", "mi_p", "mg_p", "mf_p",    # ConvDeconv3d(hidden, hidden, bias=False)
                "co", "mo"]
    keys = iter(jax.random.split(key, 2 * len(x_names) + len(hm_names) + 2))
    raw = {}
    for n in x_names:
        raw[n] = 0.1 * jax.random.normal(next(keys), (hidden, in_channels, ksz, ksz, ksz), jnp.float32)
        raw["b_" + n] = 0.1 * jax.random.normal(next(keys), (hidden,), jnp.float32)
    for n in hm_names:
        raw[n] = 0.1 * jax.random.normal(next(keys), (hidden, hidden, ksz, ksz, ksz), jnp.float32)
    raw["w111"] = 0.1 * jax.random.normal(next(keys), (hidden, 2 * hidden, 1, 1, 1), jnp.float32)
    raw["b111"] = 0.1 * jax.random.normal(next(keys), (hidden,), jnp.float32)
    return raw


def pack_cell_params(raw, hidden, spatial):
    """Pack per-gate weights into the grouped, bf16 matmul matrices used by the kernels."""
    T, H, W = spatial

    def block(x_name, o_name):  # cat over input channels, flatten to (hidden, K)
        return jnp.concatenate([raw[x_name], raw[o_name]], axis=1).reshape(hidden, -1)

    wA = jnp.concatenate([block("xr", "hr"), block("xi", "hi"),
                          block("xg", "hg"), block("xo", "ho")], axis=0)
    bA = jnp.concatenate([raw["b_xr"], raw["b_xi"], raw["b_xg"], raw["b_xo"]])[:, None]
    wB = jnp.concatenate([block("xi_p", "mi_p"), block("xg_p", "mg_p"),
                          block("xf_p", "mf_p")], axis=0)
    bB = jnp.concatenate([raw["b_xi_p"], raw["b_xg_p"], raw["b_xf_p"]])[:, None]
    wC = jnp.concatenate([raw["co"], raw["mo"]], axis=1).reshape(hidden, -1)
    return {
        "wA": wA.astype(jnp.bfloat16), "bA": bA,
        "wB": wB.astype(jnp.bfloat16), "bB": bB,
        "wC": wC.astype(jnp.bfloat16), "bC": jnp.zeros((hidden, 1), jnp.float32),
        "w111": raw["w111"].reshape(hidden, 2 * hidden).astype(jnp.bfloat16),
        "b111": raw["b111"][:, None],
        # nn.LayerNorm((hidden, T, H, W)) affine params (default ones / zeros)
        "ln_gamma": jnp.ones((1, hidden * T * H * W), jnp.float32),
        "ln_beta": jnp.zeros((1, hidden * T * H * W), jnp.float32),
    }


# ----------------------------- main -------------------------------------------------

if __name__ == "__main__":
    seq, B, Cin, T, H, W = 2, 2, 4, 4, 8, 8
    hidden, ksz, tau = 8, 3, 4

    key = jax.random.PRNGKey(0)
    k_x, k_p = jax.random.split(key)
    xs = jax.random.normal(k_x, (seq, B, Cin, T, H, W), jnp.float32)
    raw = init_cell_params(k_p, Cin, hidden, ksz)
    params = pack_cell_params(raw, hidden, (T, H, W))

    # init_hidden
    c_hist = jnp.zeros((tau, B, hidden, T, H, W), jnp.float32)
    m = jnp.zeros((B, hidden, T, H, W), jnp.float32)
    h = jnp.zeros((B, hidden, T, H, W), jnp.float32)

    step = jax.jit(functools.partial(cell_forward, hidden=hidden, ksz=ksz))
    for t in range(seq):
        c_hist, m, h = step(params, xs[t], c_hist, m, h)
    jax.block_until_ready(h)

    assert h.shape == (B, hidden, T, H, W), h.shape
    assert m.shape == (B, hidden, T, H, W), m.shape
    assert c_hist.shape == (tau, B, hidden, T, H, W), c_hist.shape
    assert bool(jnp.all(jnp.isfinite(h)))
    assert bool(jnp.all(jnp.isfinite(m)))
    assert bool(jnp.all(jnp.isfinite(c_hist)))
    print("KERNEL_OK")
</pallas_src>

<mosaic_0001>
module attributes {stable_mosaic.version = 11 : i64} {
  func.func @_bmm_bias_kernel(%arg0: i32, %arg1: i32, %arg2: i32, %arg3: i32, %arg4: memref<24x384xbf16, #tpu.memory_space<vmem>>, %arg5: memref<1x384x128xbf16, #tpu.memory_space<vmem>>, %arg6: memref<24x1xf32, #tpu.memory_space<vmem>>, %arg7: memref<1x24x128xf32, #tpu.memory_space<vmem>>, %arg8: memref<24x128xf32, #tpu.memory_space<vmem>>) attributes {dimension_semantics = [#tpu.dimension_semantics<parallel>, #tpu.dimension_semantics<parallel>, #tpu.dimension_semantics<parallel>, #tpu.dimension_semantics<arbitrary>], iteration_bounds = array<i64: 2, 1, 1, 1>, scalar_prefetch = 0 : i64, scratch_operands = 1 : i64, tpu.core_type = #tpu.core_type<tc>, window_params = [{transform_indices = @transform_0, window_bounds = array<i64: 24, 384>}, {transform_indices = @transform_1, window_bounds = array<i64: 1, 384, 128>}, {transform_indices = @transform_2, window_bounds = array<i64: 24, 1>}, {transform_indices = @transform_3, window_bounds = array<i64: 1, 24, 128>}]} {
    %c0_i32 = arith.constant 0 : i32
    %0 = arith.cmpi eq, %arg3, %c0_i32 : i32
    %1 = arith.extui %0 : i1 to i32
    %c0_i32_0 = arith.constant 0 : i32
    %2 = arith.cmpi ne, %1, %c0_i32_0 : i32
    scf.if %2 {
      %cst_11 = arith.constant 0.000000e+00 : f32
      %13 = vector.broadcast %cst_11 : f32 to vector<24x128xf32>
      %c0_12 = arith.constant 0 : index
      %c0_13 = arith.constant 0 : index
      %14 = vector.load %arg8[%c0_12, %c0_13] : memref<24x128xf32, #tpu.memory_space<vmem>>, vector<24x128xf32>
      tpu.vector_store %arg8[%c0_12, %c0_13], %13 {strides = array<i32>} : memref<24x128xf32, #tpu.memory_space<vmem>>, vector<24x128xf32>,
    } else {
    }
    %c0 = arith.constant 0 : index
    %c0_1 = arith.constant 0 : index
    %3 = vector.load %arg8[%c0, %c0_1] : memref<24x128xf32, #tpu.memory_space<vmem>>, vector<24x128xf32>
    %c0_2 = arith.constant 0 : index
    %c0_3 = arith.constant 0 : index
    %4 = vector.load %arg4[%c0_2, %c0_3] : memref<24x384xbf16, #tpu.memory_space<vmem>>, vector<24x384xbf16>
    %c0_4 = arith.constant 0 : index
    %c0_5 = arith.constant 0 : index
    %c0_6 = arith.constant 0 : index
    %5 = vector.load %arg5[%c0_4, %c0_5, %c0_6] : memref<1x384x128xbf16, #tpu.memory_space<vmem>>, vector<1x384x128xbf16>
    %6 = vector.shape_cast %5 : vector<1x384x128xbf16> to vector<384x128xbf16>
    %cst = arith.constant dense<0.000000e+00> : vector<24x128xf32>
    %7 = tpu.matmul %4, %6, %cst {dimension_numbers = #tpu.dot_dimension_numbers<[1], [0], [0], [1], [0, 0, 1, 1], [], []>} : vector<24x384xbf16>, vector<384x128xbf16>, vector<24x128xf32> -> vector<24x128xf32>
    %8 = arith.addf %3, %7 : vector<24x128xf32>
    %c0_7 = arith.constant 0 : index
    %c0_8 = arith.constant 0 : index
    %9 = vector.load %arg8[%c0_7, %c0_8] : memref<24x128xf32, #tpu.memory_space<vmem>>, vector<24x128xf32>
    tpu.vector_store %arg8[%c0_7, %c0_8], %8 {strides = array<i32>} : memref<24x128xf32, #tpu.memory_space<vmem>>, vector<24x128xf32>,
    %c0_i32_9 = arith.constant 0 : i32
    %10 = arith.cmpi eq, %arg3, %c0_i32_9 : i32
    %11 = arith.extui %10 : i1 to i32
    %c0_i32_10 = arith.constant 0 : i32
    %12 = arith.cmpi ne, %11, %c0_i32_10 : i32
    scf.if %12 {
      %c0_11 = arith.constant 0 : index
      %c0_12 = arith.constant 0 : index
      %13 = vector.load %arg8[%c0_11, %c0_12] : memref<24x128xf32, #tpu.memory_space<vmem>>, vector<24x128xf32>
      %c0_13 = arith.constant 0 : index
      %c0_14 = arith.constant 0 : index
      %14 = vector.load %arg6[%c0_13, %c0_14] : memref<24x1xf32, #tpu.memory_space<vmem>>, vector<24x1xf32>
      %15 = vector.broadcast %14 : vector<24x1xf32> to vector<24x128xf32>
      %16 = arith.addf %13, %15 : vector<24x128xf32>
      %c0_15 = arith.constant 0 : index
      %c0_16 = arith.constant 0 : index
      %c0_17 = arith.constant 0 : index
      %17 = vector.load %arg7[%c0_15, %c0_16, %c0_17] : memref<1x24x128xf32, #tpu.memory_space<vmem>>, vector<1x24x128xf32>
      %18 = vector.shape_cast %17 : vector<1x24x128xf32> to vector<24x128xf32>
      %19 = vector.shape_cast %16 : vector<24x128xf32> to vector<1x24x128xf32>
      tpu.vector_store %arg7[%c0_15, %c0_16, %c0_17], %19 {strides = array<i32>} : memref<1x24x128xf32, #tpu.memory_space<vmem>>, vector<1x24x128xf32>,
    } else {
    }
    return
  }
  func.func @transform_0(%arg0: i32, %arg1: i32, %arg2: i32, %arg3: i32) -> (i32, i32) {
    %c0_i32 = arith.constant 0 : i32
    return %arg1, %arg3 : i32, i32
  }
  func.func @transform_1(%arg0: i32, %arg1: i32, %arg2: i32, %arg3: i32) -> (i32, i32, i32) {
    %c0_i32 = arith.constant 0 : i32
    return %arg0, %arg3, %arg2 : i32, i32, i32
  }
  func.func @transform_2(%arg0: i32, %arg1: i32, %arg2: i32, %arg3: i32) -> (i32, i32) {
    %c0_i32 = arith.constant 0 : i32
    %c0_i32_0 = arith.constant 0 : i32
    return %arg1, %c0_i32 : i32, i32
  }
  func.func @transform_3(%arg0: i32, %arg1: i32, %arg2: i32, %arg3: i32) -> (i32, i32, i32) {
    %c0_i32 = arith.constant 0 : i32
    return %arg0, %arg1, %arg2 : i32, i32, i32
  }
}

module attributes {stable_mosaic.version = 11 : i64} {
  func.func @_m_kernel(%arg0: i32, %arg1: memref<16x256xf32, #tpu.memory_space<vmem>>, %arg2: memref<16x256xf32, #tpu.memory_space<vmem>>, %arg3: memref<16x256xf32, #tpu.memory_space<vmem>>, %arg4: memref<16x256xf32, #tpu.memory_space<vmem>>, %arg5: memref<16x256xf32, #tpu.memory_space<vmem>>) attributes {dimension_semantics = [#tpu.dimension_semantics<parallel>], iteration_bounds = array<i64: 1>, scalar_prefetch = 0 : i64, scratch_operands = 0 : i64, tpu.core_type = #tpu.core_type<tc>, window_params = [{transform_indices = @transform_0, window_bounds = array<i64: 16, 256>}, {transform_indices = @transform_1, window_bounds = array<i64: 16, 256>}, {transform_indices = @transform_2, window_bounds = array<i64: 16, 256>}, {transform_indices = @transform_3, window_bounds = array<i64: 16, 256>}, {transform_indices = @transform_4, window_bounds = array<i64: 16, 256>}]} {
    %c0 = arith.constant 0 : index
    %c0_0 = arith.constant 0 : index
    %0 = vector.load %arg1[%c0, %c0_0] : memref<16x256xf32, #tpu.memory_space<vmem>>, vector<16x256xf32>
    %cst = arith.constant dense<0.000000e+00> : vector<16xf32>
    %1 = vector.multi_reduction <add>, %0, %cst [1] : vector<16x256xf32> to vector<16xf32>
    %2 = vector.shape_cast %1 : vector<16xf32> to vector<16x1xf32>
    %cst_1 = arith.constant 2.560000e+02 : f32
    %3 = vector.broadcast %cst_1 : f32 to vector<16x1xf32>
    %4 = arith.divf %2, %3 : vector<16x1xf32>
    %5 = vector.broadcast %4 : vector<16x1xf32> to vector<16x256xf32>
    %6 = arith.subf %0, %5 : vector<16x256xf32>
    %7 = arith.mulf %6, %6 : vector<16x256xf32>
    %cst_2 = arith.constant dense<0.000000e+00> : vector<16xf32>
    %8 = vector.multi_reduction <add>, %7, %cst_2 [1] : vector<16x256xf32> to vector<16xf32>
    %9 = vector.shape_cast %8 : vector<16xf32> to vector<16x1xf32>
    %cst_3 = arith.constant 2.560000e+02 : f32
    %10 = vector.broadcast %cst_3 : f32 to vector<16x1xf32>
    %11 = arith.divf %9, %10 : vector<16x1xf32>
    %12 = vector.broadcast %4 : vector<16x1xf32> to vector<16x256xf32>
    %13 = arith.subf %0, %12 : vector<16x256xf32>
    %cst_4 = arith.constant 9.99999974E-6 : f32
    %14 = vector.broadcast %cst_4 : f32 to vector<16x1xf32>
    %15 = arith.addf %11, %14 : vector<16x1xf32>
    %16 = math.rsqrt %15 : vector<16x1xf32>
    %17 = vector.broadcast %16 : vector<16x1xf32> to vector<16x256xf32>
    %18 = arith.mulf %13, %17 : vector<16x256xf32>
    %cst_5 = arith.constant 0.000000e+00 : f32
    %19 = vector.broadcast %cst_5 : f32 to vector<16x256xf32>
    %20 = arith.subf %19, %18 : vector<16x256xf32>
    %21 = math.exp %20 : vector<16x256xf32>
    %cst_6 = arith.constant 1.000000e+00 : f32
    %22 = vector.broadcast %cst_6 : f32 to vector<16x256xf32>
    %23 = arith.addf %22, %21 : vector<16x256xf32>
    %24 = tpu.reciprocal %23 {approx = true} : vector<16x256xf32> -> vector<16x256xf32>
    %c0_7 = arith.constant 0 : index
    %c0_8 = arith.constant 0 : index
    %25 = vector.load %arg2[%c0_7, %c0_8] : memref<16x256xf32, #tpu.memory_space<vmem>>, vector<16x256xf32>
    %cst_9 = arith.constant dense<0.000000e+00> : vector<16xf32>
    %26 = vector.multi_reduction <add>, %25, %cst_9 [1] : vector<16x256xf32> to vector<16xf32>
    %27 = vector.shape_cast %26 : vector<16xf32> to vector<16x1xf32>
    %cst_10 = arith.constant 2.560000e+02 : f32
    %28 = vector.broadcast %cst_10 : f32 to vector<16x1xf32>
    %29 = arith.divf %27, %28 : vector<16x1xf32>
    %30 = vector.broadcast %29 : vector<16x1xf32> to vector<16x256xf32>
    %31 = arith.subf %25, %30 : vector<16x256xf32>
    %32 = arith.mulf %31, %31 : vector<16x256xf32>
    %cst_11 = arith.constant dense<0.000000e+00> : vector<16xf32>
    %33 = vector.multi_reduction <add>, %32, %cst_11 [1] : vector<16x256xf32> to vector<16xf32>
    %34 = vector.shape_cast %33 : vector<16xf32> to vector<16x1xf32>
    %cst_12 = arith.constant 2.560000e+02 : f32
    %35 = vector.broadcast %cst_12 : f32 to vector<16x1xf32>
    %36 = arith.divf %34, %35 : vector<16x1xf32>
    %37 = vector.broadcast %29 : vector<16x1xf32> to vector<16x256xf32>
    %38 = arith.subf %25, %37 : vector<16x256xf32>
    %cst_13 = arith.constant 9.99999974E-6 : f32
    %39 = vector.broadcast %cst_13 : f32 to vector<16x1xf32>
    %40 = arith.addf %36, %39 : vector<16x1xf32>
    %41 = math.rsqrt %40 : vector<16x1xf32>
    %42 = vector.broadcast %41 : vector<16x1xf32> to vector<16x256xf32>
    %43 = arith.mulf %38, %42 : vector<16x256xf32>
    %44 = math.tanh %43 : vector<16x256xf32>
    %c0_14 = arith.constant 0 : index
    %c0_15 = arith.constant 0 : index
    %45 = vector.load %arg3[%c0_14, %c0_15] : memref<16x256xf32, #tpu.memory_space<vmem>>, vector<16x256xf32>
    %cst_16 = arith.constant dense<0.000000e+00> : vector<16xf32>
    %46 = vector.multi_reduction <add>, %45, %cst_16 [1] : vector<16x256xf32> to vector<16xf32>
    %47 = vector.shape_cast %46 : vector<16xf32> to vector<16x1xf32>
    %cst_17 = arith.constant 2.560000e+02 : f32
    %48 = vector.broadcast %cst_17 : f32 to vector<16x1xf32>
    %49 = arith.divf %47, %48 : vector<16x1xf32>
    %50 = vector.broadcast %49 : vector<16x1xf32> to vector<16x256xf32>
    %51 = arith.subf %45, %50 : vector<16x256xf32>
    %52 = arith.mulf %51, %51 : vector<16x256xf32>
    %cst_18 = arith.constant dense<0.000000e+00> : vector<16xf32>
    %53 = vector.multi_reduction <add>, %52, %cst_18 [1] : vector<16x256xf32> to vector<16xf32>
    %54 = vector.shape_cast %53 : vector<16xf32> to vector<16x1xf32>
    %cst_19 = arith.constant 2.560000e+02 : f32
    %55 = vector.broadcast %cst_19 : f32 to vector<16x1xf32>
    %56 = arith.divf %54, %55 : vector<16x1xf32>
    %57 = vector.broadcast %49 : vector<16x1xf32> to vector<16x256xf32>
    %58 = arith.subf %45, %57 : vector<16x256xf32>
    %cst_20 = arith.constant 9.99999974E-6 : f32
    %59 = vector.broadcast %cst_20 : f32 to vector<16x1xf32>
    %60 = arith.addf %56, %59 : vector<16x1xf32>
    %61 = math.rsqrt %60 : vector<16x1xf32>
    %62 = vector.broadcast %61 : vector<16x1xf32> to vector<16x256xf32>
    %63 = arith.mulf %58, %62 : vector<16x256xf32>
    %cst_21 = arith.constant 0.000000e+00 : f32
    %64 = vector.broadcast %cst_21 : f32 to vector<16x256xf32>
    %65 = arith.subf %64, %63 : vector<16x256xf32>
    %66 = math.exp %65 : vector<16x256xf32>
    %cst_22 = arith.constant 1.000000e+00 : f32
    %67 = vector.broadcast %cst_22 : f32 to vector<16x256xf32>
    %68 = arith.addf %67, %66 : vector<16x256xf32>
    %69 = tpu.reciprocal %68 {approx = true} : vector<16x256xf32> -> vector<16x256xf32>
    %70 = arith.mulf %24, %44 : vector<16x256xf32>
    %c0_23 = arith.constant 0 : index
    %c0_24 = arith.constant 0 : index
    %71 = vector.load %arg4[%c0_23, %c0_24] : memref<16x256xf32, #tpu.memory_space<vmem>>, vector<16x256xf32>
    %72 = arith.mulf %69, %71 : vector<16x256xf32>
    %73 = arith.addf %70, %72 : vector<16x256xf32>
    %c0_25 = arith.constant 0 : index
    %c0_26 = arith.constant 0 : index
    %74 = vector.load %arg5[%c0_25, %c0_26] : memref<16x256xf32, #tpu.memory_space<vmem>>, vector<16x256xf32>
    tpu.vector_store %arg5[%c0_25, %c0_26], %73 {strides = array<i32>} : memref<16x256xf32, #tpu.memory_space<vmem>>, vector<16x256xf32>,
    return
  }
  func.func @transform_0(%arg0: i32) -> (i32, i32) {
    %c0_i32 = arith.constant 0 : i32
    %c0_i32_0 = arith.constant 0 : i32
    return %arg0, %c0_i32 : i32, i32
  }
  func.func @transform_1(%arg0: i32) -> (i32, i32) {
    %c0_i32 = arith.constant 0 : i32
    %c0_i32_0 = arith.constant 0 : i32
    return %arg0, %c0_i32 : i32, i32
  }
  func.func @transform_2(%arg0: i32) -> (i32, i32) {
    %c0_i32 = arith.constant 0 : i32
    %c0_i32_0 = arith.constant 0 : i32
    return %arg0, %c0_i32 : i32, i32
  }
  func.func @transform_3(%arg0: i32) -> (i32, i32) {
    %c0_i32 = arith.constant 0 : i32
    %c0_i32_0 = arith.constant 0 : i32
    return %arg0, %c0_i32 : i32, i32
  }
  func.func @transform_4(%arg0: i32) -> (i32, i32) {
    %c0_i32 = arith.constant 0 : i32
    %c0_i32_0 = arith.constant 0 : i32
    return %arg0, %c0_i32 : i32, i32
  }
}

module attributes {stable_mosaic.version = 11 : i64} {
  func.func @_bmm_bias_kernel(%arg0: i32, %arg1: i32, %arg2: i32, %arg3: i32, %arg4: memref<32x384xbf16, #tpu.memory_space<vmem>>, %arg5: memref<1x384x128xbf16, #tpu.memory_space<vmem>>, %arg6: memref<32x1xf32, #tpu.memory_space<vmem>>, %arg7: memref<1x32x128xf32, #tpu.memory_space<vmem>>, %arg8: memref<32x128xf32, #tpu.memory_space<vmem>>) attributes {dimension_semantics = [#tpu.dimension_semantics<parallel>, #tpu.dimension_semantics<parallel>, #tpu.dimension_semantics<parallel>, #tpu.dimension_semantics<arbitrary>], iteration_bounds = array<i64: 2, 1, 1, 1>, scalar_prefetch = 0 : i64, scratch_operands = 1 : i64, tpu.core_type = #tpu.core_type<tc>, window_params = [{transform_indices = @transform_0, window_bounds = array<i64: 32, 384>}, {transform_indices = @transform_1, window_bounds = array<i64: 1, 384, 128>}, {transform_indices = @transform_2, window_bounds = array<i64: 32, 1>}, {transform_indices = @transform_3, window_bounds = array<i64: 1, 32, 128>}]} {
    %c0_i32 = arith.constant 0 : i32
    %0 = arith.cmpi eq, %arg3, %c0_i32 : i32
    %1 = arith.extui %0 : i1 to i32
    %c0_i32_0 = arith.constant 0 : i32
    %2 = arith.cmpi ne, %1, %c0_i32_0 : i32
    scf.if %2 {
      %cst_11 = arith.constant 0.000000e+00 : f32
      %13 = vector.broadcast %cst_11 : f32 to vector<32x128xf32>
      %c0_12 = arith.constant 0 : index
      %c0_13 = arith.constant 0 : index
      %14 = vector.load %arg8[%c0_12, %c0_13] : memref<32x128xf32, #tpu.memory_space<vmem>>, vector<32x128xf32>
      tpu.vector_store %arg8[%c0_12, %c0_13], %13 {strides = array<i32>} : memref<32x128xf32, #tpu.memory_space<vmem>>, vector<32x128xf32>,
    } else {
    }
    %c0 = arith.constant 0 : index
    %c0_1 = arith.constant 0 : index
    %3 = vector.load %arg8[%c0, %c0_1] : memref<32x128xf32, #tpu.memory_space<vmem>>, vector<32x128xf32>
    %c0_2 = arith.constant 0 : index
    %c0_3 = arith.constant 0 : index
    %4 = vector.load %arg4[%c0_2, %c0_3] : memref<32x384xbf16, #tpu.memory_space<vmem>>, vector<32x384xbf16>
    %c0_4 = arith.constant 0 : index
    %c0_5 = arith.constant 0 : index
    %c0_6 = arith.constant 0 : index
    %5 = vector.load %arg5[%c0_4, %c0_5, %c0_6] : memref<1x384x128xbf16, #tpu.memory_space<vmem>>, vector<1x384x128xbf16>
    %6 = vector.shape_cast %5 : vector<1x384x128xbf16> to vector<384x128xbf16>
    %cst = arith.constant dense<0.000000e+00> : vector<32x128xf32>
    %7 = tpu.matmul %4, %6, %cst {dimension_numbers = #tpu.dot_dimension_numbers<[1], [0], [0], [1], [0, 0, 1, 1], [], []>} : vector<32x384xbf16>, vector<384x128xbf16>, vector<32x128xf32> -> vector<32x128xf32>
    %8 = arith.addf %3, %7 : vector<32x128xf32>
    %c0_7 = arith.constant 0 : index
    %c0_8 = arith.constant 0 : index
    %9 = vector.load %arg8[%c0_7, %c0_8] : memref<32x128xf32, #tpu.memory_space<vmem>>, vector<32x128xf32>
    tpu.vector_store %arg8[%c0_7, %c0_8], %8 {strides = array<i32>} : memref<32x128xf32, #tpu.memory_space<vmem>>, vector<32x128xf32>,
    %c0_i32_9 = arith.constant 0 : i32
    %10 = arith.cmpi eq, %arg3, %c0_i32_9 : i32
    %11 = arith.extui %10 : i1 to i32
    %c0_i32_10 = arith.constant 0 : i32
    %12 = arith.cmpi ne, %11, %c0_i32_10 : i32
    scf.if %12 {
      %c0_11 = arith.constant 0 : index
      %c0_12 = arith.constant 0 : index
      %13 = vector.load %arg8[%c0_11, %c0_12] : memref<32x128xf32, #tpu.memory_space<vmem>>, vector<32x128xf32>
      %c0_13 = arith.constant 0 : index
      %c0_14 = arith.constant 0 : index
      %14 = vector.load %arg6[%c0_13, %c0_14] : memref<32x1xf32, #tpu.memory_space<vmem>>, vector<32x1xf32>
      %15 = vector.broadcast %14 : vector<32x1xf32> to vector<32x128xf32>
      %16 = arith.addf %13, %15 : vector<32x128xf32>
      %c0_15 = arith.constant 0 : index
      %c0_16 = arith.constant 0 : index
      %c0_17 = arith.constant 0 : index
      %17 = vector.load %arg7[%c0_15, %c0_16, %c0_17] : memref<1x32x128xf32, #tpu.memory_space<vmem>>, vector<1x32x128xf32>
      %18 = vector.shape_cast %17 : vector<1x32x128xf32> to vector<32x128xf32>
      %19 = vector.shape_cast %16 : vector<32x128xf32> to vector<1x32x128xf32>
      tpu.vector_store %arg7[%c0_15, %c0_16, %c0_17], %19 {strides = array<i32>} : memref<1x32x128xf32, #tpu.memory_space<vmem>>, vector<1x32x128xf32>,
    } else {
    }
    return
  }
  func.func @transform_0(%arg0: i32, %arg1: i32, %arg2: i32, %arg3: i32) -> (i32, i32) {
    %c0_i32 = arith.constant 0 : i32
    return %arg1, %arg3 : i32, i32
  }
  func.func @transform_1(%arg0: i32, %arg1: i32, %arg2: i32, %arg3: i32) -> (i32, i32, i32) {
    %c0_i32 = arith.constant 0 : i32
    return %arg0, %arg3, %arg2 : i32, i32, i32
  }
  func.func @transform_2(%arg0: i32, %arg1: i32, %arg2: i32, %arg3: i32) -> (i32, i32) {
    %c0_i32 = arith.constant 0 : i32
    %c0_i32_0 = arith.constant 0 : i32
    return %arg1, %c0_i32 : i32, i32
  }
  func.func @transform_3(%arg0: i32, %arg1: i32, %arg2: i32, %arg3: i32) -> (i32, i32, i32) {
    %c0_i32 = arith.constant 0 : i32
    return %arg0, %arg1, %arg2 : i32, i32, i32
  }
}

module attributes {stable_mosaic.version = 11 : i64} {
  func.func @_rig_kernel(%arg0: i32, %arg1: memref<16x256xf32, #tpu.memory_space<vmem>>, %arg2: memref<16x256xf32, #tpu.memory_space<vmem>>, %arg3: memref<16x256xf32, #tpu.memory_space<vmem>>, %arg4: memref<16x256xf32, #tpu.memory_space<vmem>>, %arg5: memref<16x256xf32, #tpu.memory_space<vmem>>) attributes {dimension_semantics = [#tpu.dimension_semantics<parallel>], iteration_bounds = array<i64: 1>, scalar_prefetch = 0 : i64, scratch_operands = 0 : i64, tpu.core_type = #tpu.core_type<tc>, window_params = [{transform_indices = @transform_0, window_bounds = array<i64: 16, 256>}, {transform_indices = @transform_1, window_bounds = array<i64: 16, 256>}, {transform_indices = @transform_2, window_bounds = array<i64: 16, 256>}, {transform_indices = @transform_3, window_bounds = array<i64: 16, 256>}, {transform_indices = @transform_4, window_bounds = array<i64: 16, 256>}]} {
    %c0 = arith.constant 0 : index
    %c0_0 = arith.constant 0 : index
    %0 = vector.load %arg1[%c0, %c0_0] : memref<16x256xf32, #tpu.memory_space<vmem>>, vector<16x256xf32>
    %cst = arith.constant dense<0.000000e+00> : vector<16xf32>
    %1 = vector.multi_reduction <add>, %0, %cst [1] : vector<16x256xf32> to vector<16xf32>
    %2 = vector.shape_cast %1 : vector<16xf32> to vector<16x1xf32>
    %cst_1 = arith.constant 2.560000e+02 : f32
    %3 = vector.broadcast %cst_1 : f32 to vector<16x1xf32>
    %4 = arith.divf %2, %3 : vector<16x1xf32>
    %5 = vector.broadcast %4 : vector<16x1xf32> to vector<16x256xf32>
    %6 = arith.subf %0, %5 : vector<16x256xf32>
    %7 = arith.mulf %6, %6 : vector<16x256xf32>
    %cst_2 = arith.constant dense<0.000000e+00> : vector<16xf32>
    %8 = vector.multi_reduction <add>, %7, %cst_2 [1] : vector<16x256xf32> to vector<16xf32>
    %9 = vector.shape_cast %8 : vector<16xf32> to vector<16x1xf32>
    %cst_3 = arith.constant 2.560000e+02 : f32
    %10 = vector.broadcast %cst_3 : f32 to vector<16x1xf32>
    %11 = arith.divf %9, %10 : vector<16x1xf32>
    %12 = vector.broadcast %4 : vector<16x1xf32> to vector<16x256xf32>
    %13 = arith.subf %0, %12 : vector<16x256xf32>
    %cst_4 = arith.constant 9.99999974E-6 : f32
    %14 = vector.broadcast %cst_4 : f32 to vector<16x1xf32>
    %15 = arith.addf %11, %14 : vector<16x1xf32>
    %16 = math.rsqrt %15 : vector<16x1xf32>
    %17 = vector.broadcast %16 : vector<16x1xf32> to vector<16x256xf32>
    %18 = arith.mulf %13, %17 : vector<16x256xf32>
    %cst_5 = arith.constant 0.000000e+00 : f32
    %19 = vector.broadcast %cst_5 : f32 to vector<16x256xf32>
    %20 = arith.subf %19, %18 : vector<16x256xf32>
    %21 = math.exp %20 : vector<16x256xf32>
    %cst_6 = arith.constant 1.000000e+00 : f32
    %22 = vector.broadcast %cst_6 : f32 to vector<16x256xf32>
    %23 = arith.addf %22, %21 : vector<16x256xf32>
    %24 = tpu.reciprocal %23 {approx = true} : vector<16x256xf32> -> vector<16x256xf32>
    %c0_7 = arith.constant 0 : index
    %c0_8 = arith.constant 0 : index
    %25 = vector.load %arg4[%c0_7, %c0_8] : memref<16x256xf32, #tpu.memory_space<vmem>>, vector<16x256xf32>
    tpu.vector_store %arg4[%c0_7, %c0_8], %24 {strides = array<i32>} : memref<16x256xf32, #tpu.memory_space<vmem>>, vector<16x256xf32>,
    %c0_9 = arith.constant 0 : index
    %c0_10 = arith.constant 0 : index
    %26 = vector.load %arg2[%c0_9, %c0_10] : memref<16x256xf32, #tpu.memory_space<vmem>>, vector<16x256xf32>
    %cst_11 = arith.constant dense<0.000000e+00> : vector<16xf32>
    %27 = vector.multi_reduction <add>, %26, %cst_11 [1] : vector<16x256xf32> to vector<16xf32>
    %28 = vector.shape_cast %27 : vector<16xf32> to vector<16x1xf32>
    %cst_12 = arith.constant 2.560000e+02 : f32
    %29 = vector.broadcast %cst_12 : f32 to vector<16x1xf32>
    %30 = arith.divf %28, %29 : vector<16x1xf32>
    %31 = vector.broadcast %30 : vector<16x1xf32> to vector<16x256xf32>
    %32 = arith.subf %26, %31 : vector<16x256xf32>
    %33 = arith.mulf %32, %32 : vector<16x256xf32>
    %cst_13 = arith.constant dense<0.000000e+00> : vector<16xf32>
    %34 = vector.multi_reduction <add>, %33, %cst_13 [1] : vector<16x256xf32> to vector<16xf32>
    %35 = vector.shape_cast %34 : vector<16xf32> to vector<16x1xf32>
    %cst_14 = arith.constant 2.560000e+02 : f32
    %36 = vector.broadcast %cst_14 : f32 to vector<16x1xf32>
    %37 = arith.divf %35, %36 : vector<16x1xf32>
    %38 = vector.broadcast %30 : vector<16x1xf32> to vector<16x256xf32>
    %39 = arith.subf %26, %38 : vector<16x256xf32>
    %cst_15 = arith.constant 9.99999974E-6 : f32
    %40 = vector.broadcast %cst_15 : f32 to vector<16x1xf32>
    %41 = arith.addf %37, %40 : vector<16x1xf32>
    %42 = math.rsqrt %41 : vector<16x1xf32>
    %43 = vector.broadcast %42 : vector<16x1xf32> to vector<16x256xf32>
    %44 = arith.mulf %39, %43 : vector<16x256xf32>
    %cst_16 = arith.constant 0.000000e+00 : f32
    %45 = vector.broadcast %cst_16 : f32 to vector<16x256xf32>
    %46 = arith.subf %45, %44 : vector<16x256xf32>
    %47 = math.exp %46 : vector<16x256xf32>
    %cst_17 = arith.constant 1.000000e+00 : f32
    %48 = vector.broadcast %cst_17 : f32 to vector<16x256xf32>
    %49 = arith.addf %48, %47 : vector<16x256xf32>
    %50 = tpu.reciprocal %49 {approx = true} : vector<16x256xf32> -> vector<16x256xf32>
    %c0_18 = arith.constant 0 : index
    %c0_19 = arith.constant 0 : index
    %51 = vector.load %arg3[%c0_18, %c0_19] : memref<16x256xf32, #tpu.memory_space<vmem>>, vector<16x256xf32>
    %cst_20 = arith.constant dense<0.000000e+00> : vector<16xf32>
    %52 = vector.multi_reduction <add>, %51, %cst_20 [1] : vector<16x256xf32> to vector<16xf32>
    %53 = vector.shape_cast %52 : vector<16xf32> to vector<16x1xf32>
    %cst_21 = arith.constant 2.560000e+02 : f32
    %54 = vector.broadcast %cst_21 : f32 to vector<16x1xf32>
    %55 = arith.divf %53, %54 : vector<16x1xf32>
    %56 = vector.broadcast %55 : vector<16x1xf32> to vector<16x256xf32>
    %57 = arith.subf %51, %56 : vector<16x256xf32>
    %58 = arith.mulf %57, %57 : vector<16x256xf32>
    %cst_22 = arith.constant dense<0.000000e+00> : vector<16xf32>
    %59 = vector.multi_reduction <add>, %58, %cst_22 [1] : vector<16x256xf32> to vector<16xf32>
    %60 = vector.shape_cast %59 : vector<16xf32> to vector<16x1xf32>
    %cst_23 = arith.constant 2.560000e+02 : f32
    %61 = vector.broadcast %cst_23 : f32 to vector<16x1xf32>
    %62 = arith.divf %60, %61 : vector<16x1xf32>
    %63 = vector.broadcast %55 : vector<16x1xf32> to vector<16x256xf32>
    %64 = arith.subf %51, %63 : vector<16x256xf32>
    %cst_24 = arith.constant 9.99999974E-6 : f32
    %65 = vector.broadcast %cst_24 : f32 to vector<16x1xf32>
    %66 = arith.addf %62, %65 : vector<16x1xf32>
    %67 = math.rsqrt %66 : vector<16x1xf32>
    %68 = vector.broadcast %67 : vector<16x1xf32> to vector<16x256xf32>
    %69 = arith.mulf %64, %68 : vector<16x256xf32>
    %70 = math.tanh %69 : vector<16x256xf32>
    %71 = arith.mulf %50, %70 : vector<16x256xf32>
    %c0_25 = arith.constant 0 : index
    %c0_26 = arith.constant 0 : index
    %72 = vector.load %arg5[%c0_25, %c0_26] : memref<16x256xf32, #tpu.memory_space<vmem>>, vector<16x256xf32>
    tpu.vector_store %arg5[%c0_25, %c0_26], %71 {strides = array<i32>} : memref<16x256xf32, #tpu.memory_space<vmem>>, vector<16x256xf32>,
    return
  }
  func.func @transform_0(%arg0: i32) -> (i32, i32) {
    %c0_i32 = arith.constant 0 : i32
    %c0_i32_0 = arith.constant 0 : i32
    return %arg0, %c0_i32 : i32, i32
  }
  func.func @transform_1(%arg0: i32) -> (i32, i32) {
    %c0_i32 = arith.constant 0 : i32
    %c0_i32_0 = arith.constant 0 : i32
    return %arg0, %c0_i32 : i32, i32
  }
  func.func @transform_2(%arg0: i32) -> (i32, i32) {
    %c0_i32 = arith.constant 0 : i32
    %c0_i32_0 = arith.constant 0 : i32
    return %arg0, %c0_i32 : i32, i32
  }
  func.func @transform_3(%arg0: i32) -> (i32, i32) {
    %c0_i32 = arith.constant 0 : i32
    %c0_i32_0 = arith.constant 0 : i32
    return %arg0, %c0_i32 : i32, i32
  }
  func.func @transform_4(%arg0: i32) -> (i32, i32) {
    %c0_i32 = arith.constant 0 : i32
    %c0_i32_0 = arith.constant 0 : i32
    return %arg0, %c0_i32 : i32, i32
  }
}

module attributes {stable_mosaic.version = 11 : i64} {
  func.func @_attn_c_kernel(%arg0: memref<2x2048xf32, #tpu.memory_space<vmem>>, %arg1: memref<4x2x2048xf32, #tpu.memory_space<vmem>>, %arg2: memref<2x2048xf32, #tpu.memory_space<vmem>>, %arg3: memref<1x2048xf32, #tpu.memory_space<vmem>>, %arg4: memref<1x2048xf32, #tpu.memory_space<vmem>>, %arg5: memref<2x2048xf32, #tpu.memory_space<vmem>>) attributes {dimension_semantics = [], scalar_prefetch = 0 : i64, scratch_operands = 0 : i64, tpu.core_type = #tpu.core_type<tc>} {
    %c0 = arith.constant 0 : index
    %c0_0 = arith.constant 0 : index
    %0 = vector.load %arg0[%c0, %c0_0] : memref<2x2048xf32, #tpu.memory_space<vmem>>, vector<2x2048xf32>
    %cst = arith.constant 0.000000e+00 : f32
    %1 = vector.broadcast %cst : f32 to vector<2x2048xf32>
    %c0_1 = arith.constant 0 : index
    %c0_2 = arith.constant 0 : index
    %c0_3 = arith.constant 0 : index
    %2 = vector.load %arg1[%c0_1, %c0_2, %c0_3] : memref<4x2x2048xf32, #tpu.memory_space<vmem>>, vector<1x2x2048xf32>
    %3 = vector.shape_cast %2 : vector<1x2x2048xf32> to vector<2x2048xf32>
    %4 = arith.mulf %0, %3 : vector<2x2048xf32>
    %cst_4 = arith.constant dense<0.000000e+00> : vector<2xf32>
    %5 = vector.multi_reduction <add>, %4, %cst_4 [1] : vector<2x2048xf32> to vector<2xf32>
    %6 = vector.shape_cast %5 : vector<2xf32> to vector<2x1xf32>
    %cst_5 = arith.constant 6.250000e-02 : f32
    %7 = vector.broadcast %cst_5 : f32 to vector<2x1xf32>
    %8 = arith.mulf %6, %7 : vector<2x1xf32>
    %cst_6 = arith.constant dense<0xFF800000> : vector<1xf32>
    %9 = vector.multi_reduction <maximumf>, %8, %cst_6 [0] : vector<2x1xf32> to vector<1xf32>
    %10 = vector.shape_cast %9 : vector<1xf32> to vector<1x1xf32>
    %11 = vector.broadcast %10 : vector<1x1xf32> to vector<2x1xf32>
    %12 = arith.subf %8, %11 : vector<2x1xf32>
    %13 = math.exp %12 : vector<2x1xf32>
    %cst_7 = arith.constant dense<0.000000e+00> : vector<1xf32>
    %14 = vector.multi_reduction <add>, %13, %cst_7 [0] : vector<2x1xf32> to vector<1xf32>
    %15 = vector.shape_cast %14 : vector<1xf32> to vector<1x1xf32>
    %16 = tpu.reciprocal %15 {approx = true} : vector<1x1xf32> -> vector<1x1xf32>
    %17 = vector.broadcast %16 : vector<1x1xf32> to vector<2x1xf32>
    %18 = arith.mulf %13, %17 : vector<2x1xf32>
    %19 = vector.broadcast %18 : vector<2x1xf32> to vector<2x2048xf32>
    %20 = arith.mulf %19, %3 : vector<2x2048xf32>
    %21 = arith.addf %1, %20 : vector<2x2048xf32>
    %c1 = arith.constant 1 : index
    %c0_8 = arith.constant 0 : index
    %c0_9 = arith.constant 0 : index
    %22 = vector.load %arg1[%c1, %c0_8, %c0_9] : memref<4x2x2048xf32, #tpu.memory_space<vmem>>, vector<1x2x2048xf32>
    %23 = vector.shape_cast %22 : vector<1x2x2048xf32> to vector<2x2048xf32>
    %24 = arith.mulf %0, %23 : vector<2x2048xf32>
    %cst_10 = arith.constant dense<0.000000e+00> : vector<2xf32>
    %25 = vector.multi_reduction <add>, %24, %cst_10 [1] : vector<2x2048xf32> to vector<2xf32>
    %26 = vector.shape_cast %25 : vector<2xf32> to vector<2x1xf32>
    %cst_11 = arith.constant 6.250000e-02 : f32
    %27 = vector.broadcast %cst_11 : f32 to vector<2x1xf32>
    %28 = arith.mulf %26, %27 : vector<2x1xf32>
    %cst_12 = arith.constant dense<0xFF800000> : vector<1xf32>
    %29 = vector.multi_reduction <maximumf>, %28, %cst_12 [0] : vector<2x1xf32> to vector<1xf32>
    %30 = vector.shape_cast %29 : vector<1xf32> to vector<1x1xf32>
    %31 = vector.broadcast %30 : vector<1x1xf32> to vector<2x1xf32>
    %32 = arith.subf %28, %31 : vector<2x1xf32>
    %33 = math.exp %32 : vector<2x1xf32>
    %cst_13 = arith.constant dense<0.000000e+00> : vector<1xf32>
    %34 = vector.multi_reduction <add>, %33, %cst_13 [0] : vector<2x1xf32> to vector<1xf32>
    %35 = vector.shape_cast %34 : vector<1xf32> to vector<1x1xf32>
    %36 = tpu.reciprocal %35 {approx = true} : vector<1x1xf32> -> vector<1x1xf32>
    %37 = vector.broadcast %36 : vector<1x1xf32> to vector<2x1xf32>
    %38 = arith.mulf %33, %37 : vector<2x1xf32>
    %39 = vector.broadcast %38 : vector<2x1xf32> to vector<2x2048xf32>
    %40 = arith.mulf %39, %23 : vector<2x2048xf32>
    %41 = arith.addf %21, %40 : vector<2x2048xf32>
    %c2 = arith.constant 2 : index
    %c0_14 = arith.constant 0 : index
    %c0_15 = arith.constant 0 : index
    %42 = vector.load %arg1[%c2, %c0_14, %c0_15] : memref<4x2x2048xf32, #tpu.memory_space<vmem>>, vector<1x2x2048xf32>
    %43 = vector.shape_cast %42 : vector<1x2x2048xf32> to vector<2x2048xf32>
    %44 = arith.mulf %0, %43 : vector<2x2048xf32>
    %cst_16 = arith.constant dense<0.000000e+00> : vector<2xf32>
    %45 = vector.multi_reduction <add>, %44, %cst_16 [1] : vector<2x2048xf32> to vector<2xf32>
    %46 = vector.shape_cast %45 : vector<2xf32> to vector<2x1xf32>
    %cst_17 = arith.constant 6.250000e-02 : f32
    %47 = vector.broadcast %cst_17 : f32 to vector<2x1xf32>
    %48 = arith.mulf %46, %47 : vector<2x1xf32>
    %cst_18 = arith.constant dense<0xFF800000> : vector<1xf32>
    %49 = vector.multi_reduction <maximumf>, %48, %cst_18 [0] : vector<2x1xf32> to vector<1xf32>
    %50 = vector.shape_cast %49 : vector<1xf32> to vector<1x1xf32>
    %51 = vector.broadcast %50 : vector<1x1xf32> to vector<2x1xf32>
    %52 = arith.subf %48, %51 : vector<2x1xf32>
    %53 = math.exp %52 : vector<2x1xf32>
    %cst_19 = arith.constant dense<0.000000e+00> : vector<1xf32>
    %54 = vector.multi_reduction <add>, %53, %cst_19 [0] : vector<2x1xf32> to vector<1xf32>
    %55 = vector.shape_cast %54 : vector<1xf32> to vector<1x1xf32>
    %56 = tpu.reciprocal %55 {approx = true} : vector<1x1xf32> -> vector<1x1xf32>
    %57 = vector.broadcast %56 : vector<1x1xf32> to vector<2x1xf32>
    %58 = arith.mulf %53, %57 : vector<2x1xf32>
    %59 = vector.broadcast %58 : vector<2x1xf32> to vector<2x2048xf32>
    %60 = arith.mulf %59, %43 : vector<2x2048xf32>
    %61 = arith.addf %41, %60 : vector<2x2048xf32>
    %c3 = arith.constant 3 : index
    %c0_20 = arith.constant 0 : index
    %c0_21 = arith.constant 0 : index
    %62 = vector.load %arg1[%c3, %c0_20, %c0_21] : memref<4x2x2048xf32, #tpu.memory_space<vmem>>, vector<1x2x2048xf32>
    %63 = vector.shape_cast %62 : vector<1x2x2048xf32> to vector<2x2048xf32>
    %64 = arith.mulf %0, %63 : vector<2x2048xf32>
    %cst_22 = arith.constant dense<0.000000e+00> : vector<2xf32>
    %65 = vector.multi_reduction <add>, %64, %cst_22 [1] : vector<2x2048xf32> to vector<2xf32>
    %66 = vector.shape_cast %65 : vector<2xf32> to vector<2x1xf32>
    %cst_23 = arith.constant 6.250000e-02 : f32
    %67 = vector.broadcast %cst_23 : f32 to vector<2x1xf32>
    %68 = arith.mulf %66, %67 : vector<2x1xf32>
    %cst_24 = arith.constant dense<0xFF800000> : vector<1xf32>
    %69 = vector.multi_reduction <maximumf>, %68, %cst_24 [0] : vector<2x1xf32> to vector<1xf32>
    %70 = vector.shape_cast %69 : vector<1xf32> to vector<1x1xf32>
    %71 = vector.broadcast %70 : vector<1x1xf32> to vector<2x1xf32>
    %72 = arith.subf %68, %71 : vector<2x1xf32>
    %73 = math.exp %72 : vector<2x1xf32>
    %cst_25 = arith.constant dense<0.000000e+00> : vector<1xf32>
    %74 = vector.multi_reduction <add>, %73, %cst_25 [0] : vector<2x1xf32> to vector<1xf32>
    %75 = vector.shape_cast %74 : vector<1xf32> to vector<1x1xf32>
    %76 = tpu.reciprocal %75 {approx = true} : vector<1x1xf32> -> vector<1x1xf32>
    %77 = vector.broadcast %76 : vector<1x1xf32> to vector<2x1xf32>
    %78 = arith.mulf %73, %77 : vector<2x1xf32>
    %79 = vector.broadcast %78 : vector<2x1xf32> to vector<2x2048xf32>
    %80 = arith.mulf %79, %63 : vector<2x2048xf32>
    %81 = arith.addf %61, %80 : vector<2x2048xf32>
    %c3_26 = arith.constant 3 : index
    %c0_27 = arith.constant 0 : index
    %c0_28 = arith.constant 0 : index
    %82 = vector.load %arg1[%c3_26, %c0_27, %c0_28] : memref<4x2x2048xf32, #tpu.memory_space<vmem>>, vector<1x2x2048xf32>
    %83 = vector.shape_cast %82 : vector<1x2x2048xf32> to vector<2x2048xf32>
    %84 = arith.addf %83, %81 : vector<2x2048xf32>
    %cst_29 = arith.constant dense<0.000000e+00> : vector<2xf32>
    %85 = vector.multi_reduction <add>, %84, %cst_29 [1] : vector<2x2048xf32> to vector<2xf32>
    %86 = vector.shape_cast %85 : vector<2xf32> to vector<2x1xf32>
    %cst_30 = arith.constant 2.048000e+03 : f32
    %87 = vector.broadcast %cst_30 : f32 to vector<2x1xf32>
    %88 = arith.divf %86, %87 : vector<2x1xf32>
    %89 = vector.broadcast %88 : vector<2x1xf32> to vector<2x2048xf32>
    %90 = arith.subf %84, %89 : vector<2x2048xf32>
    %91 = arith.mulf %90, %90 : vector<2x2048xf32>
    %cst_31 = arith.constant dense<0.000000e+00> : vector<2xf32>
    %92 = vector.multi_reduction <add>, %91, %cst_31 [1] : vector<2x2048xf32> to vector<2xf32>
    %93 = vector.shape_cast %92 : vector<2xf32> to vector<2x1xf32>
    %cst_32 = arith.constant 2.048000e+03 : f32
    %94 = vector.broadcast %cst_32 : f32 to vector<2x1xf32>
    %95 = arith.divf %93, %94 : vector<2x1xf32>
    %96 = vector.broadcast %88 : vector<2x1xf32> to vector<2x2048xf32>
    %97 = arith.subf %84, %96 : vector<2x2048xf32>
    %cst_33 = arith.constant 9.99999974E-6 : f32
    %98 = vector.broadcast %cst_33 : f32 to vector<2x1xf32>
    %99 = arith.addf %95, %98 : vector<2x1xf32>
    %100 = math.rsqrt %99 : vector<2x1xf32>
    %101 = vector.broadcast %100 : vector<2x1xf32> to vector<2x2048xf32>
    %102 = arith.mulf %97, %101 : vector<2x2048xf32>
    %c0_34 = arith.constant 0 : index
    %c0_35 = arith.constant 0 : index
    %103 = vector.load %arg3[%c0_34, %c0_35] : memref<1x2048xf32, #tpu.memory_space<vmem>>, vector<1x2048xf32>
    %104 = vector.broadcast %103 : vector<1x2048xf32> to vector<2x2048xf32>
    %105 = arith.mulf %102, %104 : vector<2x2048xf32>
    %c0_36 = arith.constant 0 : index
    %c0_37 = arith.constant 0 : index
    %106 = vector.load %arg4[%c0_36, %c0_37] : memref<1x2048xf32, #tpu.memory_space<vmem>>, vector<1x2048xf32>
    %107 = vector.broadcast %106 : vector<1x2048xf32> to vector<2x2048xf32>
    %108 = arith.addf %105, %107 : vector<2x2048xf32>
    %c0_38 = arith.constant 0 : index
    %c0_39 = arith.constant 0 : index
    %109 = vector.load %arg2[%c0_38, %c0_39] : memref<2x2048xf32, #tpu.memory_space<vmem>>, vector<2x2048xf32>
    %110 = arith.addf %109, %108 : vector<2x2048xf32>
    %c0_40 = arith.constant 0 : index
    %c0_41 = arith.constant 0 : index
    %111 = vector.load %arg5[%c0_40, %c0_41] : memref<2x2048xf32, #tpu.memory_space<vmem>>, vector<2x2048xf32>
    tpu.vector_store %arg5[%c0_40, %c0_41], %110 {strides = array<i32>} : memref<2x2048xf32, #tpu.memory_space<vmem>>, vector<2x2048xf32>,
    return
  }
}

module attributes {stable_mosaic.version = 11 : i64} {
  func.func @_bmm_bias_kernel(%arg0: i32, %arg1: i32, %arg2: i32, %arg3: i32, %arg4: memref<8x128xbf16, #tpu.memory_space<vmem>>, %arg5: memref<1x128x256xbf16, #tpu.memory_space<vmem>>, %arg6: memref<8x1xf32, #tpu.memory_space<vmem>>, %arg7: memref<1x8x256xf32, #tpu.memory_space<vmem>>, %arg8: memref<8x256xf32, #tpu.memory_space<vmem>>) attributes {dimension_semantics = [#tpu.dimension_semantics<parallel>, #tpu.dimension_semantics<parallel>, #tpu.dimension_semantics<parallel>, #tpu.dimension_semantics<arbitrary>], iteration_bounds = array<i64: 2, 1, 1, 1>, scalar_prefetch = 0 : i64, scratch_operands = 1 : i64, tpu.core_type = #tpu.core_type<tc>, window_params = [{transform_indices = @transform_0, window_bounds = array<i64: 8, 128>}, {transform_indices = @transform_1, window_bounds = array<i64: 1, 128, 256>}, {transform_indices = @transform_2, window_bounds = array<i64: 8, 1>}, {transform_indices = @transform_3, window_bounds = array<i64: 1, 8, 256>}]} {
    %c0_i32 = arith.constant 0 : i32
    %0 = arith.cmpi eq, %arg3, %c0_i32 : i32
    %1 = arith.extui %0 : i1 to i32
    %c0_i32_0 = arith.constant 0 : i32
    %2 = arith.cmpi ne, %1, %c0_i32_0 : i32
    scf.if %2 {
      %cst_11 = arith.constant 0.000000e+00 : f32
      %13 = vector.broadcast %cst_11 : f32 to vector<8x256xf32>
      %c0_12 = arith.constant 0 : index
      %c0_13 = arith.constant 0 : index
      %14 = vector.load %arg8[%c0_12, %c0_13] : memref<8x256xf32, #tpu.memory_space<vmem>>, vector<8x256xf32>
      tpu.vector_store %arg8[%c0_12, %c0_13], %13 {strides = array<i32>} : memref<8x256xf32, #tpu.memory_space<vmem>>, vector<8x256xf32>,
    } else {
    }
    %c0 = arith.constant 0 : index
    %c0_1 = arith.constant 0 : index
    %3 = vector.load %arg8[%c0, %c0_1] : memref<8x256xf32, #tpu.memory_space<vmem>>, vector<8x256xf32>
    %c0_2 = arith.constant 0 : index
    %c0_3 = arith.constant 0 : index
    %4 = vector.load %arg4[%c0_2, %c0_3] : memref<8x128xbf16, #tpu.memory_space<vmem>>, vector<8x128xbf16>
    %c0_4 = arith.constant 0 : index
    %c0_5 = arith.constant 0 : index
    %c0_6 = arith.constant 0 : index
    %5 = vector.load %arg5[%c0_4, %c0_5, %c0_6] : memref<1x128x256xbf16, #tpu.memory_space<vmem>>, vector<1x128x256xbf16>
    %6 = vector.shape_cast %5 : vector<1x128x256xbf16> to vector<128x256xbf16>
    %cst = arith.constant dense<0.000000e+00> : vector<8x256xf32>
    %7 = tpu.matmul %4, %6, %cst {dimension_numbers = #tpu.dot_dimension_numbers<[1], [0], [0], [1], [0, 0, 1, 1], [], []>} : vector<8x128xbf16>, vector<128x256xbf16>, vector<8x256xf32> -> vector<8x256xf32>
    %8 = arith.addf %3, %7 : vector<8x256xf32>
    %c0_7 = arith.constant 0 : index
    %c0_8 = arith.constant 0 : index
    %9 = vector.load %arg8[%c0_7, %c0_8] : memref<8x256xf32, #tpu.memory_space<vmem>>, vector<8x256xf32>
    tpu.vector_store %arg8[%c0_7, %c0_8], %8 {strides = array<i32>} : memref<8x256xf32, #tpu.memory_space<vmem>>, vector<8x256xf32>,
    %c0_i32_9 = arith.constant 0 : i32
    %10 = arith.cmpi eq, %arg3, %c0_i32_9 : i32
    %11 = arith.extui %10 : i1 to i32
    %c0_i32_10 = arith.constant 0 : i32
    %12 = arith.cmpi ne, %11, %c0_i32_10 : i32
    scf.if %12 {
      %c0_11 = arith.constant 0 : index
      %c0_12 = arith.constant 0 : index
      %13 = vector.load %arg8[%c0_11, %c0_12] : memref<8x256xf32, #tpu.memory_space<vmem>>, vector<8x256xf32>
      %c0_13 = arith.constant 0 : index
      %c0_14 = arith.constant 0 : index
      %14 = vector.load %arg6[%c0_13, %c0_14] : memref<8x1xf32, #tpu.memory_space<vmem>>, vector<8x1xf32>
      %15 = vector.broadcast %14 : vector<8x1xf32> to vector<8x256xf32>
      %16 = arith.addf %13, %15 : vector<8x256xf32>
      %c0_15 = arith.constant 0 : index
      %c0_16 = arith.constant 0 : index
      %c0_17 = arith.constant 0 : index
      %17 = vector.load %arg7[%c0_15, %c0_16, %c0_17] : memref<1x8x256xf32, #tpu.memory_space<vmem>>, vector<1x8x256xf32>
      %18 = vector.shape_cast %17 : vector<1x8x256xf32> to vector<8x256xf32>
      %19 = vector.shape_cast %16 : vector<8x256xf32> to vector<1x8x256xf32>
      tpu.vector_store %arg7[%c0_15, %c0_16, %c0_17], %19 {strides = array<i32>} : memref<1x8x256xf32, #tpu.memory_space<vmem>>, vector<1x8x256xf32>,
    } else {
    }
    return
  }
  func.func @transform_0(%arg0: i32, %arg1: i32, %arg2: i32, %arg3: i32) -> (i32, i32) {
    %c0_i32 = arith.constant 0 : i32
    return %arg1, %arg3 : i32, i32
  }
  func.func @transform_1(%arg0: i32, %arg1: i32, %arg2: i32, %arg3: i32) -> (i32, i32, i32) {
    %c0_i32 = arith.constant 0 : i32
    return %arg0, %arg3, %arg2 : i32, i32, i32
  }
  func.func @transform_2(%arg0: i32, %arg1: i32, %arg2: i32, %arg3: i32) -> (i32, i32) {
    %c0_i32 = arith.constant 0 : i32
    %c0_i32_0 = arith.constant 0 : i32
    return %arg1, %c0_i32 : i32, i32
  }
  func.func @transform_3(%arg0: i32, %arg1: i32, %arg2: i32, %arg3: i32) -> (i32, i32, i32) {
    %c0_i32 = arith.constant 0 : i32
    return %arg0, %arg1, %arg2 : i32, i32, i32
  }
}

module attributes {stable_mosaic.version = 11 : i64} {
  func.func @_bmm_bias_kernel(%arg0: i32, %arg1: i32, %arg2: i32, %arg3: i32, %arg4: memref<8x512xbf16, #tpu.memory_space<vmem>>, %arg5: memref<1x512x128xbf16, #tpu.memory_space<vmem>>, %arg6: memref<8x1xf32, #tpu.memory_space<vmem>>, %arg7: memref<1x8x128xf32, #tpu.memory_space<vmem>>, %arg8: memref<8x128xf32, #tpu.memory_space<vmem>>) attributes {dimension_semantics = [#tpu.dimension_semantics<parallel>, #tpu.dimension_semantics<parallel>, #tpu.dimension_semantics<parallel>, #tpu.dimension_semantics<arbitrary>], iteration_bounds = array<i64: 2, 1, 1, 1>, scalar_prefetch = 0 : i64, scratch_operands = 1 : i64, tpu.core_type = #tpu.core_type<tc>, window_params = [{transform_indices = @transform_0, window_bounds = array<i64: 8, 512>}, {transform_indices = @transform_1, window_bounds = array<i64: 1, 512, 128>}, {transform_indices = @transform_2, window_bounds = array<i64: 8, 1>}, {transform_indices = @transform_3, window_bounds = array<i64: 1, 8, 128>}]} {
    %c0_i32 = arith.constant 0 : i32
    %0 = arith.cmpi eq, %arg3, %c0_i32 : i32
    %1 = arith.extui %0 : i1 to i32
    %c0_i32_0 = arith.constant 0 : i32
    %2 = arith.cmpi ne, %1, %c0_i32_0 : i32
    scf.if %2 {
      %cst_11 = arith.constant 0.000000e+00 : f32
      %13 = vector.broadcast %cst_11 : f32 to vector<8x128xf32>
      %c0_12 = arith.constant 0 : index
      %c0_13 = arith.constant 0 : index
      %14 = vector.load %arg8[%c0_12, %c0_13] : memref<8x128xf32, #tpu.memory_space<vmem>>, vector<8x128xf32>
      tpu.vector_store %arg8[%c0_12, %c0_13], %13 {strides = array<i32>} : memref<8x128xf32, #tpu.memory_space<vmem>>, vector<8x128xf32>,
    } else {
    }
    %c0 = arith.constant 0 : index
    %c0_1 = arith.constant 0 : index
    %3 = vector.load %arg8[%c0, %c0_1] : memref<8x128xf32, #tpu.memory_space<vmem>>, vector<8x128xf32>
    %c0_2 = arith.constant 0 : index
    %c0_3 = arith.constant 0 : index
    %4 = vector.load %arg4[%c0_2, %c0_3] : memref<8x512xbf16, #tpu.memory_space<vmem>>, vector<8x512xbf16>
    %c0_4 = arith.constant 0 : index
    %c0_5 = arith.constant 0 : index
    %c0_6 = arith.constant 0 : index
    %5 = vector.load %arg5[%c0_4, %c0_5, %c0_6] : memref<1x512x128xbf16, #tpu.memory_space<vmem>>, vector<1x512x128xbf16>
    %6 = vector.shape_cast %5 : vector<1x512x128xbf16> to vector<512x128xbf16>
    %cst = arith.constant dense<0.000000e+00> : vector<8x128xf32>
    %7 = tpu.matmul %4, %6, %cst {dimension_numbers = #tpu.dot_dimension_numbers<[1], [0], [0], [1], [0, 0, 1, 1], [], []>} : vector<8x512xbf16>, vector<512x128xbf16>, vector<8x128xf32> -> vector<8x128xf32>
    %8 = arith.addf %3, %7 : vector<8x128xf32>
    %c0_7 = arith.constant 0 : index
    %c0_8 = arith.constant 0 : index
    %9 = vector.load %arg8[%c0_7, %c0_8] : memref<8x128xf32, #tpu.memory_space<vmem>>, vector<8x128xf32>
    tpu.vector_store %arg8[%c0_7, %c0_8], %8 {strides = array<i32>} : memref<8x128xf32, #tpu.memory_space<vmem>>, vector<8x128xf32>,
    %c0_i32_9 = arith.constant 0 : i32
    %10 = arith.cmpi eq, %arg3, %c0_i32_9 : i32
    %11 = arith.extui %10 : i1 to i32
    %c0_i32_10 = arith.constant 0 : i32
    %12 = arith.cmpi ne, %11, %c0_i32_10 : i32
    scf.if %12 {
      %c0_11 = arith.constant 0 : index
      %c0_12 = arith.constant 0 : index
      %13 = vector.load %arg8[%c0_11, %c0_12] : memref<8x128xf32, #tpu.memory_space<vmem>>, vector<8x128xf32>
      %c0_13 = arith.constant 0 : index
      %c0_14 = arith.constant 0 : index
      %14 = vector.load %arg6[%c0_13, %c0_14] : memref<8x1xf32, #tpu.memory_space<vmem>>, vector<8x1xf32>
      %15 = vector.broadcast %14 : vector<8x1xf32> to vector<8x128xf32>
      %16 = arith.addf %13, %15 : vector<8x128xf32>
      %c0_15 = arith.constant 0 : index
      %c0_16 = arith.constant 0 : index
      %c0_17 = arith.constant 0 : index
      %17 = vector.load %arg7[%c0_15, %c0_16, %c0_17] : memref<1x8x128xf32, #tpu.memory_space<vmem>>, vector<1x8x128xf32>
      %18 = vector.shape_cast %17 : vector<1x8x128xf32> to vector<8x128xf32>
      %19 = vector.shape_cast %16 : vector<8x128xf32> to vector<1x8x128xf32>
      tpu.vector_store %arg7[%c0_15, %c0_16, %c0_17], %19 {strides = array<i32>} : memref<1x8x128xf32, #tpu.memory_space<vmem>>, vector<1x8x128xf32>,
    } else {
    }
    return
  }
  func.func @transform_0(%arg0: i32, %arg1: i32, %arg2: i32, %arg3: i32) -> (i32, i32) {
    %c0_i32 = arith.constant 0 : i32
    return %arg1, %arg3 : i32, i32
  }
  func.func @transform_1(%arg0: i32, %arg1: i32, %arg2: i32, %arg3: i32) -> (i32, i32, i32) {
    %c0_i32 = arith.constant 0 : i32
    return %arg0, %arg3, %arg2 : i32, i32, i32
  }
  func.func @transform_2(%arg0: i32, %arg1: i32, %arg2: i32, %arg3: i32) -> (i32, i32) {
    %c0_i32 = arith.constant 0 : i32
    %c0_i32_0 = arith.constant 0 : i32
    return %arg1, %c0_i32 : i32, i32
  }
  func.func @transform_3(%arg0: i32, %arg1: i32, %arg2: i32, %arg3: i32) -> (i32, i32, i32) {
    %c0_i32 = arith.constant 0 : i32
    return %arg0, %arg1, %arg2 : i32, i32, i32
  }
}

module attributes {stable_mosaic.version = 11 : i64} {
  func.func @_oh_kernel(%arg0: i32, %arg1: memref<16x256xf32, #tpu.memory_space<vmem>>, %arg2: memref<16x256xf32, #tpu.memory_space<vmem>>, %arg3: memref<16x256xf32, #tpu.memory_space<vmem>>, %arg4: memref<16x256xf32, #tpu.memory_space<vmem>>) attributes {dimension_semantics = [#tpu.dimension_semantics<parallel>], iteration_bounds = array<i64: 1>, scalar_prefetch = 0 : i64, scratch_operands = 0 : i64, tpu.core_type = #tpu.core_type<tc>, window_params = [{transform_indices = @transform_0, window_bounds = array<i64: 16, 256>}, {transform_indices = @transform_1, window_bounds = array<i64: 16, 256>}, {transform_indices = @transform_2, window_bounds = array<i64: 16, 256>}, {transform_indices = @transform_3, window_bounds = array<i64: 16, 256>}]} {
    %c0 = arith.constant 0 : index
    %c0_0 = arith.constant 0 : index
    %0 = vector.load %arg1[%c0, %c0_0] : memref<16x256xf32, #tpu.memory_space<vmem>>, vector<16x256xf32>
    %c0_1 = arith.constant 0 : index
    %c0_2 = arith.constant 0 : index
    %1 = vector.load %arg2[%c0_1, %c0_2] : memref<16x256xf32, #tpu.memory_space<vmem>>, vector<16x256xf32>
    %2 = arith.addf %0, %1 : vector<16x256xf32>
    %cst = arith.constant dense<0.000000e+00> : vector<16xf32>
    %3 = vector.multi_reduction <add>, %2, %cst [1] : vector<16x256xf32> to vector<16xf32>
    %4 = vector.shape_cast %3 : vector<16xf32> to vector<16x1xf32>
    %cst_3 = arith.constant 2.560000e+02 : f32
    %5 = vector.broadcast %cst_3 : f32 to vector<16x1xf32>
    %6 = arith.divf %4, %5 : vector<16x1xf32>
    %7 = vector.broadcast %6 : vector<16x1xf32> to vector<16x256xf32>
    %8 = arith.subf %2, %7 : vector<16x256xf32>
    %9 = arith.mulf %8, %8 : vector<16x256xf32>
    %cst_4 = arith.constant dense<0.000000e+00> : vector<16xf32>
    %10 = vector.multi_reduction <add>, %9, %cst_4 [1] : vector<16x256xf32> to vector<16xf32>
    %11 = vector.shape_cast %10 : vector<16xf32> to vector<16x1xf32>
    %cst_5 = arith.constant 2.560000e+02 : f32
    %12 = vector.broadcast %cst_5 : f32 to vector<16x1xf32>
    %13 = arith.divf %11, %12 : vector<16x1xf32>
    %14 = vector.broadcast %6 : vector<16x1xf32> to vector<16x256xf32>
    %15 = arith.subf %2, %14 : vector<16x256xf32>
    %cst_6 = arith.constant 9.99999974E-6 : f32
    %16 = vector.broadcast %cst_6 : f32 to vector<16x1xf32>
    %17 = arith.addf %13, %16 : vector<16x1xf32>
    %18 = math.rsqrt %17 : vector<16x1xf32>
    %19 = vector.broadcast %18 : vector<16x1xf32> to vector<16x256xf32>
    %20 = arith.mulf %15, %19 : vector<16x256xf32>
    %cst_7 = arith.constant 0.000000e+00 : f32
    %21 = vector.broadcast %cst_7 : f32 to vector<16x256xf32>
    %22 = arith.subf %21, %20 : vector<16x256xf32>
    %23 = math.exp %22 : vector<16x256xf32>
    %cst_8 = arith.constant 1.000000e+00 : f32
    %24 = vector.broadcast %cst_8 : f32 to vector<16x256xf32>
    %25 = arith.addf %24, %23 : vector<16x256xf32>
    %26 = tpu.reciprocal %25 {approx = true} : vector<16x256xf32> -> vector<16x256xf32>
    %c0_9 = arith.constant 0 : index
    %c0_10 = arith.constant 0 : index
    %27 = vector.load %arg3[%c0_9, %c0_10] : memref<16x256xf32, #tpu.memory_space<vmem>>, vector<16x256xf32>
    %28 = math.tanh %27 : vector<16x256xf32>
    %29 = arith.mulf %26, %28 : vector<16x256xf32>
    %c0_11 = arith.constant 0 : index
    %c0_12 = arith.constant 0 : index
    %30 = vector.load %arg4[%c0_11, %c0_12] : memref<16x256xf32, #tpu.memory_space<vmem>>, vector<16x256xf32>
    tpu.vector_store %arg4[%c0_11, %c0_12], %29 {strides = array<i32>} : memref<16x256xf32, #tpu.memory_space<vmem>>, vector<16x256xf32>,
    return
  }
  func.func @transform_0(%arg0: i32) -> (i32, i32) {
    %c0_i32 = arith.constant 0 : i32
    %c0_i32_0 = arith.constant 0 : i32
    return %arg0, %c0_i32 : i32, i32
  }
  func.func @transform_1(%arg0: i32) -> (i32, i32) {
    %c0_i32 = arith.constant 0 : i32
    %c0_i32_0 = arith.constant 0 : i32
    return %arg0, %c0_i32 : i32, i32
  }
  func.func @transform_2(%arg0: i32) -> (i32, i32) {
    %c0_i32 = arith.constant 0 : i32
    %c0_i32_0 = arith.constant 0 : i32
    return %arg0, %c0_i32 : i32, i32
  }
  func.func @transform_3(%arg0: i32) -> (i32, i32) {
    %c0_i32 = arith.constant 0 : i32
    %c0_i32_0 = arith.constant 0 : i32
    return %arg0, %c0_i32 : i32, i32
  }
}

</mosaic_0001>

<llo_original>
// kernel: cell_forward.9
$region0: #{cell_forward.9}
  #allocation0 [shape = 'u32[]', space=smem, size = 0x4, offset = 0x4, fixed_abs, tag = 'smem constant byte address 0x4 - core index']
  #allocation1 [shape = 'u32[72,128]{1,0:T(1,128)}', space=vmem, size = 0x9000, scoped, tag = 'internal scratch']
  #allocation2 [shape = 'f32[24,128]{1,0:T(8,128)}', space=vmem, size = 0x3000, scoped, tag = 'scratch operand']
  %s0 = inlined_call_operand.vmem [shape: bf16[24,384], index: 0, kind: input, shape index: {}]
  %s1 = inlined_call_operand.vmem [shape: bf16[2,384,128], index: 1, kind: input, shape index: {}]
  %s2 = inlined_call_operand.vmem [shape: f32[24,1], index: 2, kind: input, shape index: {}]
  %s3 = inlined_call_operand.vmem [shape: f32[2,24,128], index: 3, kind: output, shape index: {}]
  %s4 = sld [smem:[#allocation0]]
  $region53: #{cell_forward.9} parent=0
    _
  %s6 = ssub.s32 1, %s4
  %s7 = scalar_select 0, %s6, %s4
  loop: start=0, step=1, limit=4
  $region2: #{cell_forward.9} parent=0 // loop_pre_header
    _
  $region3: #{cell_forward.9} parent=0 // loop_header
    %s9 = sphi 0, %s13
    %p10 = scmp.ge.s32.totalorder %s9, 4
    %s16 = sphi 0, %s42
    %s17 = sphi 0, %s38
    %s18 = sphi 0, %s34
    %s19 = sphi 0, %s30
    %s20 = sphi 0, %s16
    %s21 = sphi 0, %s17
    %s22 = sphi 0, %s18
    %s23 = sphi 0, %s19
    %s24 = sphi 0, %s20
    %s25 = sphi 0, %s21
    %s26 = sphi 0, %s22
    %s27 = sphi 0, %s23
    %s47 = sphi 0, %s49
    %s50 = sphi 0, %s47
    %s51 = sphi 0, %s50
    %s67 = sphi 0, %s51
    %s77 = sphi 0, %s79
    %s80 = sphi 0, %s77
    %s81 = sphi 0, %s80
    %s97 = sphi 0, %s81
    %s103 = sphi 0, %s105
    %s106 = sphi 0, %s103
    %s107 = sphi 0, %s106
    %s123 = sphi 0, %s107
    %s133 = sphi 0, %s135
    %s136 = sphi 0, %s133
    %s137 = sphi 0, %s136
    %s153 = sphi 0, %s137
  $region4: #{cell_forward.9} parent=0 // loop_header_branch
    %12 = sbr.rel (%p10) target = $region8
  $region5: #{cell_forward.9} parent=0 // loop_body
    %s14 = ssub.s32 %s9, 1
    %s15 = ssub.s32 %s9, 2
    %s28 = sadd.s32 1, %s19
    %p29 = scmp.ge.s32.totalorder %s28, 1
    %s30 = scalar_select %p29, 0, %s28
    %s31 = sadd.s32 1, %s18
    %s32 = scalar_select %p29, %s31, %s18
    %p33 = scmp.ge.s32.totalorder %s32, 1
    %s34 = scalar_select %p33, 0, %s32
    %s35 = sadd.s32 1, %s17
    %s36 = scalar_select %p33, %s35, %s17
    %p37 = scmp.ge.s32.totalorder %s36, 1
    %s38 = scalar_select %p37, 0, %s36
    %s39 = sadd.s32 1, %s16
    %s40 = scalar_select %p37, %s39, %s16
    %p41 = scmp.ge.s32.totalorder %s40, 2
    %s42 = scalar_select %p41, 0, %s40
    %s43 = ssub.s32 %s17, %s38
    %s44 = ssub.s32 %s19, %s30
    %s45 = sor.u32 %s43, %s44
    %p46 = scmp.eq.s32.totalorder %s45, 0
    %s48 = sadd.s32 %s47, 1
    %s49 = scalar_select %p46, %s47, %s48
    %p52 = pneg %p46
    %p53 = scmp.eq.s32.totalorder %s9, 1
    %p54 = por %p52, %p53
    %p55 = scmp.ne.s32.totalorder %s47, %s50
    %p56 = scmp.eq.s32.totalorder %s9, 0
    %p57 = por %p55, %p56
    %p58 = scmp.ne.s32.totalorder %s47, %s50
    %p59 = scmp.eq.s32.totalorder %s14, 1
    %p60 = por %p58, %p59
    %p61 = scmp.ne.s32.totalorder %s50, %s51
    %p62 = scmp.eq.s32.totalorder %s14, 0
    %p63 = por %p61, %p62
    %p64 = scmp.ne.s32.totalorder %s50, %s51
    %p65 = scmp.eq.s32.totalorder %s15, 1
    %p66 = por %p64, %p65
    %p68 = scmp.ne.s32.totalorder %s51, %s67
    %p69 = scmp.eq.s32.totalorder %s15, 0
    %p70 = por %p68, %p69
    %s71 = ssub.s32 %s16, %s42
    %s72 = ssub.s32 %s19, %s30
    %s73 = sor.u32 %s71, %s72
    %s74 = ssub.s32 %s18, %s34
    %s75 = sor.u32 %s73, %s74
    %p76 = scmp.eq.s32.totalorder %s75, 0
    %s78 = sadd.s32 %s77, 1
    %s79 = scalar_select %p76, %s77, %s78
    %p82 = pneg %p76
    %p83 = scmp.eq.s32.totalorder %s9, 1
    %p84 = por %p82, %p83
    %p85 = scmp.ne.s32.totalorder %s77, %s80
    %p86 = scmp.eq.s32.totalorder %s9, 0
    %p87 = por %p85, %p86
    %p88 = scmp.ne.s32.totalorder %s77, %s80
    %p89 = scmp.eq.s32.totalorder %s14, 1
    %p90 = por %p88, %p89
    %p91 = scmp.ne.s32.totalorder %s80, %s81
    %p92 = scmp.eq.s32.totalorder %s14, 0
    %p93 = por %p91, %p92
    %p94 = scmp.ne.s32.totalorder %s80, %s81
    %p95 = scmp.eq.s32.totalorder %s15, 1
    %p96 = por %p94, %p95
    %p98 = scmp.ne.s32.totalorder %s81, %s97
    %p99 = scmp.eq.s32.totalorder %s15, 0
    %p100 = por %p98, %p99
    %s101 = ssub.s32 %s17, %s38
    %p102 = scmp.eq.s32.totalorder %s101, 0
    %s104 = sadd.s32 %s103, 1
    %s105 = scalar_select %p102, %s103, %s104
    %p108 = pneg %p102
    %p109 = scmp.eq.s32.totalorder %s9, 1
    %p110 = por %p108, %p109
    %p111 = scmp.ne.s32.totalorder %s103, %s106
    %p112 = scmp.eq.s32.totalorder %s9, 0
    %p113 = por %p111, %p112
    %p114 = scmp.ne.s32.totalorder %s103, %s106
    %p115 = scmp.eq.s32.totalorder %s14, 1
    %p116 = por %p114, %p115
    %p117 = scmp.ne.s32.totalorder %s106, %s107
    %p118 = scmp.eq.s32.totalorder %s14, 0
    %p119 = por %p117, %p118
    %p120 = scmp.ne.s32.totalorder %s106, %s107
    %p121 = scmp.eq.s32.totalorder %s15, 1
    %p122 = por %p120, %p121
    %p124 = scmp.ne.s32.totalorder %s107, %s123
    %p125 = scmp.eq.s32.totalorder %s15, 0
    %p126 = por %p124, %p125
    %s127 = ssub.s32 %s16, %s42
    %s128 = ssub.s32 %s17, %s38
    %s129 = sor.u32 %s127, %s128
    %s130 = ssub.s32 %s18, %s34
    %s131 = sor.u32 %s129, %s130
    %p132 = scmp.eq.s32.totalorder %s131, 0
    %s134 = sadd.s32 %s133, 1
    %s135 = scalar_select %p132, %s133, %s134
    %p138 = pneg %p132
    %p139 = scmp.eq.s32.totalorder %s9, 1
    %p140 = por %p138, %p139
    %p141 = scmp.ne.s32.totalorder %s133, %s136
    %p142 = scmp.eq.s32.totalorder %s9, 0
    %p143 = por %p141, %p142
    %p144 = scmp.ne.s32.totalorder %s133, %s136
    %p145 = scmp.eq.s32.totalorder %s14, 1
    %p146 = por %p144, %p145
    %p147 = scmp.ne.s32.totalorder %s136, %s137
    %p148 = scmp.eq.s32.totalorder %s14, 0
    %p149 = por %p147, %p148
    %p150 = scmp.ne.s32.totalorder %s136, %s137
    %p151 = scmp.eq.s32.totalorder %s15, 1
    %p152 = por %p150, %p151
    %p154 = scmp.ne.s32.totalorder %s137, %s153
    %p155 = scmp.eq.s32.totalorder %s15, 0
    %p156 = por %p154, %p155
    %p157 = scmp.le.s32.totalorder 1, %s9
    %p158 = scmp.lt.s32.totalorder %s9, 3
    %p159 = pnand %p157, %p158
    %p160 = pneg %p159
    // Predicated region
    $region9: #{cell_forward.9} parent=5 // pred_check
      _
    $region10: #{cell_forward.9} parent=5 // pred_check_branch
      %162 = sbr.rel (%p159) target = $region12
    $region11: #{cell_forward.9} parent=5 // pred_region
      %s163 = ssub.s32 %s9, 1
      // Predicated region
      $region13: #{cell_forward.9} parent=11 // pred_check
        %p164 = pneg %p63
      $region14: #{cell_forward.9} parent=11 // pred_check_branch
        %166 = sbr.rel (%p164) target = $region16
      $region15: #{cell_forward.9} parent=11 // pred_region
        %s167 = smul.u32 3, %s21
        %s168 = smul.u32 3, %s23
        %p169 = scmp.lt.s32.totalorder %s167, 2
        %s170 = scalar_select %p169, %s167, 2
        %p171 = scmp.lt.s32.totalorder %s168, 2
        %s172 = scalar_select %p171, %s168, 2
        %s173 = smul.addr %s170, 3
        %s174 = sadd.s32 %s172, %s173
        %s175 = smul.addr %s174, 4
        %s176 = scalar_lea.vmem %s0, %s175
        %s177 = smul.u32 3, %s21
        %s178 = smul.u32 3, %s23
      $region16: #{cell_forward.9} parent=11 // pred_fallthru
        _
      // Predicated region
      $region17: #{cell_forward.9} parent=11 // pred_check
        %p179 = pneg %p119
      $region18: #{cell_forward.9} parent=11 // pred_check_branch
        %181 = sbr.rel (%p179) target = $region20
      $region19: #{cell_forward.9} parent=11 // pred_region
        %s182 = smul.u32 3, %s21
        %p183 = scmp.lt.s32.totalorder %s182, 2
        %s184 = scalar_select %p183, %s182, 2
        %s185 = smul.addr %s184, 8
        %s186 = scalar_lea.vmem %s2, %s185
        %s187 = smul.u32 3, %s21
      $region20: #{cell_forward.9} parent=11 // pred_fallthru
        _
    $region12: #{cell_forward.9} parent=5 // pred_fallthru
      _
    %p188 = scmp.lt.s32.totalorder %s9, 2
    // Predicated region
    $region21: #{cell_forward.9} parent=5 // pred_check
      %p189 = pneg %p188
    $region22: #{cell_forward.9} parent=5 // pred_check_branch
      %191 = sbr.rel (%p189) target = $region24
    $region23: #{cell_forward.9} parent=5 // pred_region
      // Predicated region
      $region25: #{cell_forward.9} parent=23 // pred_check
        %p192 = pneg %p87
      $region26: #{cell_forward.9} parent=23 // pred_check_branch
        %194 = sbr.rel (%p192) target = $region28
      $region27: #{cell_forward.9} parent=23 // pred_region
        %s195 = smul.u32 48, %s19
        %p196 = scmp.lt.s32.totalorder %s16, 1
        %s197 = scalar_select %p196, %s16, 1
        %p198 = scmp.lt.s32.totalorder %s195, 47
        %s199 = scalar_select %p198, %s195, 47
        %p200 = scmp.lt.s32.totalorder %s18, 0
        %s201 = scalar_select %p200, %s18, 0
        %s202 = sadd.s32 %s201, %s199
        %s203 = smul.addr %s197, 48
        %s204 = sadd.s32 %s202, %s203
        %s205 = smul.addr %s204, 4
        %s206 = scalar_lea.vmem %s1, %s205
        %s207 = smul.u32 48, %s19
      $region28: #{cell_forward.9} parent=23 // pred_fallthru
        _
    $region24: #{cell_forward.9} parent=5 // pred_fallthru
      _
    %p208 = scmp.le.s32.totalorder 1, %s9
    %p209 = scmp.lt.s32.totalorder %s9, 3
    %p210 = pnand %p208, %p209
    %p211 = pneg %p210
    // Predicated region
    $region29: #{cell_forward.9} parent=5 // pred_check
      _
    $region30: #{cell_forward.9} parent=5 // pred_check_branch
      %213 = sbr.rel (%p210) target = $region32
    $region31: #{cell_forward.9} parent=5 // pred_region
      %s214 = ssub.s32 %s9, 1
      %s215 = smul.u32 3, %s21
      %s216 = smul.u32 3, %s23
      %p217 = scmp.lt.s32.totalorder %s215, 2
      %s218 = scalar_select %p217, %s215, 2
      %p219 = scmp.lt.s32.totalorder %s216, 2
      %s220 = scalar_select %p219, %s216, 2
      %s221 = smul.addr %s218, 3
      %s222 = sadd.s32 %s220, %s221
      %s223 = smul.addr %s222, 4
      %s224 = scalar_lea.vmem %s0, %s223
      %p225 = pneg %p63
      %p226 = pneg %p60
      %s227 = smul.u32 48, %s23
      %p228 = scmp.lt.s32.totalorder %s20, 1
      %s229 = scalar_select %p228, %s20, 1
      %p230 = scmp.lt.s32.totalorder %s227, 47
      %s231 = scalar_select %p230, %s227, 47
      %p232 = scmp.lt.s32.totalorder %s22, 0
      %s233 = scalar_select %p232, %s22, 0
      %s234 = sadd.s32 %s233, %s231
      %s235 = smul.addr %s229, 48
      %s236 = sadd.s32 %s234, %s235
      %s237 = smul.addr %s236, 4
      %s238 = scalar_lea.vmem %s1, %s237
      %p239 = pneg %p93
      %p240 = pneg %p90
      %s241 = smul.u32 3, %s21
      %p242 = scmp.lt.s32.totalorder %s241, 2
      %s243 = scalar_select %p242, %s241, 2
      %s244 = smul.addr %s243, 8
      %s245 = scalar_lea.vmem %s2, %s244
      %p246 = pneg %p119
      %p247 = pneg %p116
      %p248 = pneg %p149
      %p249 = pneg %p146
      %s250 = smul.u32 3, %s21
      %p251 = scmp.lt.s32.totalorder %s20, 1
      %s252 = scalar_select %p251, %s20, 1
      %p253 = scmp.lt.s32.totalorder %s250, 2
      %s254 = scalar_select %p253, %s250, 2
      %p255 = scmp.lt.s32.totalorder %s22, 0
      %s256 = scalar_select %p255, %s22, 0
      %s257 = sadd.s32 %s256, %s254
      %s258 = smul.addr %s252, 3
      %s259 = sadd.s32 %s257, %s258
      %s260 = smul.addr %s259, 8
      %s261 = scalar_lea.vmem %s3, %s260
      %s262 = smul.u32 3, %s21
      %s263 = smul.u32 3, %s23
      %p264 = scmp.lt.s32.totalorder %s262, 2
      %s265 = scalar_select %p264, %s262, 2
      %p266 = scmp.lt.s32.totalorder %s263, 2
      %s267 = scalar_select %p266, %s263, 2
      %s268 = smul.addr %s265, 3
      %s269 = sadd.s32 %s267, %s268
      %s270 = smul.addr %s269, 4
      %s271 = scalar_lea.vmem %s0, %s270
      %s272 = smul.u32 3, %s21
      %s273 = smul.u32 3, %s23
      %s274 = smul.u32 48, %s23
      %p275 = scmp.lt.s32.totalorder %s20, 1
      %s276 = scalar_select %p275, %s20, 1
      %p277 = scmp.lt.s32.totalorder %s274, 47
      %s278 = scalar_select %p277, %s274, 47
      %p279 = scmp.lt.s32.totalorder %s22, 0
      %s280 = scalar_select %p279, %s22, 0
      %s281 = sadd.s32 %s280, %s278
      %s282 = smul.addr %s276, 48
      %s283 = sadd.s32 %s281, %s282
      %s284 = smul.addr %s283, 4
      %s285 = scalar_lea.vmem %s1, %s284
      %s286 = smul.u32 48, %s23
      %s287 = smul.u32 3, %s21
      %p288 = scmp.lt.s32.totalorder %s287, 2
      %s289 = scalar_select %p288, %s287, 2
      %s290 = smul.addr %s289, 8
      %s291 = scalar_lea.vmem %s2, %s290
      %s292 = smul.u32 3, %s21
      %s293 = smul.u32 3, %s21
      %p294 = scmp.lt.s32.totalorder %s20, 1
      %s295 = scalar_select %p294, %s20, 1
      %p296 = scmp.lt.s32.totalorder %s293, 2
      %s297 = scalar_select %p296, %s293, 2
      %p298 = scmp.lt.s32.totalorder %s22, 0
      %s299 = scalar_select %p298, %s22, 0
      %s300 = sadd.s32 %s299, %s297
      %s301 = smul.addr %s295, 3
      %s302 = sadd.s32 %s300, %s301
      %s303 = smul.addr %s302, 8
      %s304 = scalar_lea.vmem %s3, %s303
      %s305 = smul.u32 3, %s21
      %p306 = scmp.eq.s32.totalorder %s23, 0
      // Predicated region
      $region33: #{cell_forward.9} parent=31 // pred_check
        %p307 = pneg %p306
      $region34: #{cell_forward.9} parent=31 // pred_check_branch
        %309 = sbr.rel (%p307) target = $region36
      $region35: #{cell_forward.9} parent=31 // pred_region
        %310 = vst [vmem:[#allocation2] sm:$0xff] 0.0
        %311 = vst [vmem:[#allocation2 + $0x8] sm:$0xff] 0.0
        %312 = vst [vmem:[#allocation2 + $0x10] sm:$0xff] 0.0
      $region36: #{cell_forward.9} parent=31 // pred_fallthru
        _
      %v313 = vld [vmem:[#allocation2] sm:$0xff]
      %v314 = vld [vmem:[#allocation2 + $0x8] sm:$0xff]
      %v315 = vld [vmem:[#allocation2 + $0x10] sm:$0xff]
      %v316 = vld [vmem:[%s271] sm:$0xff]
      %v317 = vld [vmem:[%s271 + $0x8] sm:$0xf]
      %v318 = vld [vmem:[%s271 + $0xc] sm:$0xff]
      %v319 = vld [vmem:[%s271 + $0x14] sm:$0xf]
      %v320 = vld [vmem:[%s271 + $0x18] sm:$0xff]
      %v321 = vld [vmem:[%s271 + $0x20] sm:$0xf]
      %v322 = vld [vmem:[%s285] sm:$0xf]
      %v323 = vld [vmem:[%s285 + $0x4] sm:$0xf]
      %v324 = vld [vmem:[%s285 + $0x8] sm:$0xf]
      %v325 = vld [vmem:[%s285 + $0xc] sm:$0xf]
      %v326 = vld [vmem:[%s285 + $0x10] sm:$0xf]
      %v327 = vld [vmem:[%s285 + $0x14] sm:$0xf]
      %v328 = vld [vmem:[%s285 + $0x18] sm:$0xf]
      %v329 = vld [vmem:[%s285 + $0x1c] sm:$0xf]
      %v330 = vld [vmem:[%s285 + $0x20] sm:$0xf]
      %v331 = vld [vmem:[%s285 + $0x24] sm:$0xf]
      %v332 = vld [vmem:[%s285 + $0x28] sm:$0xf]
      %v333 = vld [vmem:[%s285 + $0x2c] sm:$0xf]
      %v334 = vld [vmem:[%s285 + $0x30] sm:$0xf]
      %v335 = vld [vmem:[%s285 + $0x34] sm:$0xf]
      %v336 = vld [vmem:[%s285 + $0x38] sm:$0xf]
      %v337 = vld [vmem:[%s285 + $0x3c] sm:$0xf]
      %v338 = vld [vmem:[%s285 + $0x40] sm:$0xf]
      %v339 = vld [vmem:[%s285 + $0x44] sm:$0xf]
      %v340 = vld [vmem:[%s285 + $0x48] sm:$0xf]
      %v341 = vld [vmem:[%s285 + $0x4c] sm:$0xf]
      %v342 = vld [vmem:[%s285 + $0x50] sm:$0xf]
      %v343 = vld [vmem:[%s285 + $0x54] sm:$0xf]
      %v344 = vld [vmem:[%s285 + $0x58] sm:$0xf]
      %v345 = vld [vmem:[%s285 + $0x5c] sm:$0xf]
      %v346 = vld [vmem:[%s285 + $0x60] sm:$0xf]
      %v347 = vld [vmem:[%s285 + $0x64] sm:$0xf]
      %v348 = vld [vmem:[%s285 + $0x68] sm:$0xf]
      %v349 = vld [vmem:[%s285 + $0x6c] sm:$0xf]
      %v350 = vld [vmem:[%s285 + $0x70] sm:$0xf]
      %v351 = vld [vmem:[%s285 + $0x74] sm:$0xf]
      %v352 = vld [vmem:[%s285 + $0x78] sm:$0xf]
      %v353 = vld [vmem:[%s285 + $0x7c] sm:$0xf]
      %v354 = vld [vmem:[%s285 + $0x80] sm:$0xf]
      %v355 = vld [vmem:[%s285 + $0x84] sm:$0xf]
      %v356 = vld [vmem:[%s285 + $0x88] sm:$0xf]
      %v357 = vld [vmem:[%s285 + $0x8c] sm:$0xf]
      %v358 = vld [vmem:[%s285 + $0x90] sm:$0xf]
      %v359 = vld [vmem:[%s285 + $0x94] sm:$0xf]
      %v360 = vld [vmem:[%s285 + $0x98] sm:$0xf]
      %v361 = vld [vmem:[%s285 + $0x9c] sm:$0xf]
      %v362 = vld [vmem:[%s285 + $0xa0] sm:$0xf]
      %v363 = vld [vmem:[%s285 + $0xa4] sm:$0xf]
      %v364 = vld [vmem:[%s285 + $0xa8] sm:$0xf]
      %v365 = vld [vmem:[%s285 + $0xac] sm:$0xf]
      %v366 = vld [vmem:[%s285 + $0xb0] sm:$0xf]
      %v367 = vld [vmem:[%s285 + $0xb4] sm:$0xf]
      %v368 = vld [vmem:[%s285 + $0xb8] sm:$0xf]
      %v369 = vld [vmem:[%s285 + $0xbc] sm:$0xf]
      %v376 = vunpack.c.l.b16 %v316
      %v377 = vunpack.c.h.b16 %v316
      %v378 = vunpack.c.l.b16 %v317
      %v379 = vunpack.c.l.b16 %v318
      %v380 = vunpack.c.h.b16 %v318
      %v381 = vunpack.c.l.b16 %v319
      %v382 = vunpack.c.l.b16 %v320
      %v383 = vunpack.c.h.b16 %v320
      %v384 = vunpack.c.l.b16 %v321
      %v385 = vpack.c.b16 %v379, %v376
      %v386 = vpack.c.b16 %v380, %v377
      %v387 = vpack.c.b16 %v381, %v378
      %v388 = vpack.c.b16 %v382, %v382
      %v389 = vpack.c.b16 %v383, %v383
      %v390 = vpack.c.b16 %v384, %v384
      %v445 = vunpack.c.l.b16 %v322
      %v446 = vunpack.c.l.b16 %v323
      %v447 = vunpack.c.l.b16 %v324
      %v448 = vunpack.c.l.b16 %v325
      %v449 = vunpack.c.l.b16 %v326
      %v450 = vunpack.c.l.b16 %v327
      %v451 = vunpack.c.l.b16 %v328
      %v452 = vunpack.c.l.b16 %v329
      %v453 = vunpack.c.l.b16 %v330
      %v454 = vunpack.c.l.b16 %v331
      %v455 = vunpack.c.l.b16 %v332
      %v456 = vunpack.c.l.b16 %v333
      %v457 = vunpack.c.l.b16 %v334
      %v458 = vunpack.c.l.b16 %v335
      %v459 = vunpack.c.l.b16 %v336
      %v460 = vunpack.c.l.b16 %v337
      %v461 = vunpack.c.l.b16 %v338
      %v462 = vunpack.c.l.b16 %v339
      %v463 = vunpack.c.l.b16 %v340
      %v464 = vunpack.c.l.b16 %v341
      %v465 = vunpack.c.l.b16 %v342
      %v466 = vunpack.c.l.b16 %v343
      %v467 = vunpack.c.l.b16 %v344
      %v468 = vunpack.c.l.b16 %v345
      %v469 = vunpack.c.l.b16 %v346
      %v470 = vunpack.c.l.b16 %v347
      %v471 = vunpack.c.l.b16 %v348
      %v472 = vunpack.c.l.b16 %v349
      %v473 = vunpack.c.l.b16 %v350
      %v474 = vunpack.c.l.b16 %v351
      %v475 = vunpack.c.l.b16 %v352
      %v476 = vunpack.c.l.b16 %v353
      %v477 = vunpack.c.l.b16 %v354
      %v478 = vunpack.c.l.b16 %v355
      %v479 = vunpack.c.l.b16 %v356
      %v480 = vunpack.c.l.b16 %v357
      %v481 = vunpack.c.l.b16 %v358
      %v482 = vunpack.c.l.b16 %v359
      %v483 = vunpack.c.l.b16 %v360
      %v484 = vunpack.c.l.b16 %v361
      %v485 = vunpack.c.l.b16 %v362
      %v486 = vunpack.c.l.b16 %v363
      %v487 = vunpack.c.l.b16 %v364
      %v488 = vunpack.c.l.b16 %v365
      %v489 = vunpack.c.l.b16 %v366
      %v490 = vunpack.c.l.b16 %v367
      %v491 = vunpack.c.l.b16 %v368
      %v492 = vunpack.c.l.b16 %v369
      %v493 = vpack.c.b16 %v446, %v445
      %v494 = vpack.c.b16 %v448, %v447
      %v495 = vpack.c.b16 %v450, %v449
      %v496 = vpack.c.b16 %v452, %v451
      %v497 = vpack.c.b16 %v454, %v453
      %v498 = vpack.c.b16 %v456, %v455
      %v499 = vpack.c.b16 %v458, %v457
      %v500 = vpack.c.b16 %v460, %v459
      %v501 = vpack.c.b16 %v462, %v461
      %v502 = vpack.c.b16 %v464, %v463
      %v503 = vpack.c.b16 %v466, %v465
      %v504 = vpack.c.b16 %v468, %v467
      %v505 = vpack.c.b16 %v470, %v469
      %v506 = vpack.c.b16 %v472, %v471
      %v507 = vpack.c.b16 %v474, %v473
      %v508 = vpack.c.b16 %v476, %v475
      %v509 = vpack.c.b16 %v478, %v477
      %v510 = vpack.c.b16 %v480, %v479
      %v511 = vpack.c.b16 %v482, %v481
      %v512 = vpack.c.b16 %v484, %v483
      %v513 = vpack.c.b16 %v486, %v485
      %v514 = vpack.c.b16 %v488, %v487
      %v515 = vpack.c.b16 %v490, %v489
      %v516 = vpack.c.b16 %v492, %v491
      %541 = vmatpush.bf16.msra.mxu0 %v500
      %542 = vmatpush.bf16.msra.mxu0 %v499
      %543 = vmatpush.bf16.msra.mxu0 %v498
      %544 = vmatpush.bf16.msra.mxu0 %v497
      %545 = vmatpush.bf16.msra.mxu0 %v496
      %546 = vmatpush.bf16.msra.mxu0 %v495
      %547 = vmatpush.bf16.msra.mxu0 %v494
      %548 = vmatpush.bf16.msra.mxu0 %v493
      %549 = vmatmul.bf16.gmra.mxu0 %v385
      %v550 = vpop.f32.mrf.mxu0
      %v551 = vadd.f32 0.0, %v550
      %v552 = vpop.f32.mrf.mxu0
      %v553 = vadd.f32 0.0, %v552
      %554 = vmatmul.bf16.gmra.mxu0 %v388
      %v555 = vpop.f32.mrf.mxu0
      %v556 = vadd.f32 0.0, %v555
      %v557 = vpop.f32.mrf.mxu0
      %558 = vdwg.mxu0
      %559 = vmatpush.bf16.msra.mxu0 %v508
      %560 = vmatpush.bf16.msra.mxu0 %v507
      %561 = vmatpush.bf16.msra.mxu0 %v506
      %562 = vmatpush.bf16.msra.mxu0 %v505
      %563 = vmatpush.bf16.msra.mxu0 %v504
      %564 = vmatpush.bf16.msra.mxu0 %v503
      %565 = vmatpush.bf16.msra.mxu0 %v502
      %566 = vmatpush.bf16.msra.mxu0 %v501
      %567 = vmatmul.bf16.gmra.mxu0 %v386
      %v568 = vpop.f32.mrf.mxu0
      %v569 = vadd.f32 %v551, %v568
      %v570 = vpop.f32.mrf.mxu0
      %v571 = vadd.f32 %v553, %v570
      %572 = vmatmul.bf16.gmra.mxu0 %v389
      %v573 = vpop.f32.mrf.mxu0
      %v574 = vadd.f32 %v556, %v573
      %v575 = vpop.f32.mrf.mxu0
      %576 = vdwg.mxu0
      %577 = vmatpush.bf16.msra.mxu0 %v516
      %578 = vmatpush.bf16.msra.mxu0 %v515
      %579 = vmatpush.bf16.msra.mxu0 %v514
      %580 = vmatpush.bf16.msra.mxu0 %v513
      %581 = vmatpush.bf16.msra.mxu0 %v512
      %582 = vmatpush.bf16.msra.mxu0 %v511
      %583 = vmatpush.bf16.msra.mxu0 %v510
      %584 = vmatpush.bf16.msra.mxu0 %v509
      %585 = vmatmul.bf16.gmra.mxu0 %v387
      %v586 = vpop.f32.mrf.mxu0
      %v587 = vadd.f32 %v569, %v586
      %v588 = vpop.f32.mrf.mxu0
      %v589 = vadd.f32 %v571, %v588
      %590 = vmatmul.bf16.gmra.mxu0 %v390
      %v591 = vpop.f32.mrf.mxu0
      %v592 = vadd.f32 %v574, %v591
      %v593 = vpop.f32.mrf.mxu0
      %594 = vdwg.mxu0
      %v595 = vadd.f32 %v313, %v587
      %v596 = vadd.f32 %v314, %v589
      %v597 = vadd.f32 %v315, %v592
      %598 = vst [vmem:[#allocation2] sm:$0xff] %v595
      %599 = vst [vmem:[#allocation2 + $0x8] sm:$0xff] %v596
      %600 = vst [vmem:[#allocation2 + $0x10] sm:$0xff] %v597
      // Predicated region
      $region37: #{cell_forward.9} parent=31 // pred_check
        %p601 = pneg %p306
      $region38: #{cell_forward.9} parent=31 // pred_check_branch
        %603 = sbr.rel (%p601) target = $region40
      $region39: #{cell_forward.9} parent=31 // pred_region
        %v604 = vld [vmem:[#allocation2] sm:$0xff]
        %v605 = vld [vmem:[#allocation2 + $0x8] sm:$0xff]
        %v606 = vld [vmem:[#allocation2 + $0x10] sm:$0xff]
        %v607 = vld [vmem:[%s291] sm:$0xff]
        %v608 = vld [vmem:[%s291 + $0x8] sm:$0xff]
        %v609 = vld [vmem:[%s291 + $0x10] sm:$0xff]
        %611 = vset.pattern.permute.xlu0 0
        %612 = vperm.xlu0 %611, %v607
        %v613 = vpop.permute.xlu0 %612
        %616 = vset.pattern.permute.xlu0 0
        %617 = vperm.xlu0 %616, %v608
        %v618 = vpop.permute.xlu0 %617
        %621 = vset.pattern.permute.xlu0 0
        %622 = vperm.xlu0 %621, %v609
        %v623 = vpop.permute.xlu0 %622
        %v625 = vadd.f32 %v604, %v613
        %v626 = vadd.f32 %v605, %v618
        %v627 = vadd.f32 %v606, %v623
        %628 = vst [vmem:[%s304] sm:$0xff] %v625
        %629 = vst [vmem:[%s304 + $0x8] sm:$0xff] %v626
        %630 = vst [vmem:[%s304 + $0x10] sm:$0xff] %v627
      $region40: #{cell_forward.9} parent=31 // pred_fallthru
        _
      %s631 = smul.u32 3, %s21
      %p632 = scmp.lt.s32.totalorder %s20, 1
      %s633 = scalar_select %p632, %s20, 1
      %p634 = scmp.lt.s32.totalorder %s631, 2
      %s635 = scalar_select %p634, %s631, 2
      %p636 = scmp.lt.s32.totalorder %s22, 0
      %s637 = scalar_select %p636, %s22, 0
      %s638 = sadd.s32 %s637, %s635
      %s639 = smul.addr %s633, 3
      %s640 = sadd.s32 %s638, %s639
      %s641 = smul.addr %s640, 8
      %s642 = scalar_lea.vmem %s3, %s641
      // Predicated region
      $region41: #{cell_forward.9} parent=31 // pred_check
        %p643 = pneg %p146
      $region42: #{cell_forward.9} parent=31 // pred_check_branch
        %645 = sbr.rel (%p643) target = $region44
      $region43: #{cell_forward.9} parent=31 // pred_region
        %s646 = smul.u32 3, %s21
      $region44: #{cell_forward.9} parent=31 // pred_fallthru
        _
    $region32: #{cell_forward.9} parent=5 // pred_fallthru
      _
    %p647 = scmp.le.s32.totalorder 2, %s9
    // Predicated region
    $region45: #{cell_forward.9} parent=5 // pred_check
      %p648 = pneg %p647
    $region46: #{cell_forward.9} parent=5 // pred_check_branch
      %650 = sbr.rel (%p648) target = $region48
    $region47: #{cell_forward.9} parent=5 // pred_region
      %s651 = ssub.s32 %s9, 2
      // Predicated region
      $region49: #{cell_forward.9} parent=47 // pred_check
        %p652 = pneg %p152
      $region50: #{cell_forward.9} parent=47 // pred_check_branch
        %654 = sbr.rel (%p652) target = $region52
      $region51: #{cell_forward.9} parent=47 // pred_region
        %s655 = smul.u32 3, %s25
        %p656 = scmp.lt.s32.totalorder %s24, 1
        %s657 = scalar_select %p656, %s24, 1
        %p658 = scmp.lt.s32.totalorder %s655, 2
        %s659 = scalar_select %p658, %s655, 2
        %p660 = scmp.lt.s32.totalorder %s26, 0
        %s661 = scalar_select %p660, %s26, 0
        %s662 = sadd.s32 %s661, %s659
        %s663 = smul.addr %s657, 3
        %s664 = sadd.s32 %s662, %s663
        %s665 = smul.addr %s664, 8
        %s666 = scalar_lea.vmem %s3, %s665
      $region52: #{cell_forward.9} parent=47 // pred_fallthru
        _
    $region48: #{cell_forward.9} parent=5 // pred_fallthru
      _
  $region6: #{cell_forward.9} parent=0 // loop_footer
    %s13 = sadd.s32 1, %s9
  $region7: #{cell_forward.9} parent=0 // loop_footer_branch
    %8 = sbr.rel target = $region3
  $region8: #{cell_forward.9} parent=0 // loop_exit
    _

// kernel: cell_forward.12
$region0: #{cell_forward.12}
  #allocation0 [shape = 'u32[]', space=smem, size = 0x4, offset = 0x4, fixed_abs, tag = 'smem constant byte address 0x4 - core index']
  #allocation1 [shape = 'u32[72,128]{1,0:T(1,128)}', space=vmem, size = 0x9000, scoped, tag = 'internal scratch']
  %s0 = inlined_call_operand.vmem [shape: f32[16,256], index: 0, kind: input, shape index: {}]
  %s1 = inlined_call_operand.vmem [shape: f32[16,256], index: 1, kind: input, shape index: {}]
  %s2 = inlined_call_operand.vmem [shape: f32[16,256], index: 2, kind: input, shape index: {}]
  %s3 = inlined_call_operand.vmem [shape: f32[16,256], index: 3, kind: input, shape index: {}]
  %s4 = inlined_call_operand.vmem [shape: f32[16,256], index: 4, kind: output, shape index: {}]
  %s5 = sld [smem:[#allocation0]]
  $region26: #{cell_forward.12} parent=0
    _
  %s7 = ssub.s32 1, %s5
  %s8 = scalar_select 0, %s7, %s5
  // Predicated region
  $region2: #{cell_forward.12} parent=0 // pred_check
    _
  $region3: #{cell_forward.12} parent=0 // pred_check_branch
    %10 = sbr.rel (0) target = $region5
  $region4: #{cell_forward.12} parent=0 // pred_region
    _
  $region5: #{cell_forward.12} parent=0 // pred_fallthru
    _
  // Predicated region
  $region6: #{cell_forward.12} parent=0 // pred_check
    _
  $region7: #{cell_forward.12} parent=0 // pred_check_branch
    %12 = sbr.rel (0) target = $region9
  $region8: #{cell_forward.12} parent=0 // pred_region
    _
  $region9: #{cell_forward.12} parent=0 // pred_fallthru
    _
  // Predicated region
  $region10: #{cell_forward.12} parent=0 // pred_check
    _
  $region11: #{cell_forward.12} parent=0 // pred_check_branch
    %14 = sbr.rel (0) target = $region13
  $region12: #{cell_forward.12} parent=0 // pred_region
    _
  $region13: #{cell_forward.12} parent=0 // pred_fallthru
    _
  // Predicated region
  $region14: #{cell_forward.12} parent=0 // pred_check
    _
  $region15: #{cell_forward.12} parent=0 // pred_check_branch
    %16 = sbr.rel (0) target = $region17
  $region16: #{cell_forward.12} parent=0 // pred_region
    _
  $region17: #{cell_forward.12} parent=0 // pred_fallthru
    _
  %v17 = vld [vmem:[%s0] sm:$0xff]
  %v18 = vld [vmem:[%s0 + $0x8] sm:$0xff]
  %v19 = vld [vmem:[%s0 + $0x10] sm:$0xff]
  %v20 = vld [vmem:[%s0 + $0x18] sm:$0xff]
  %v21 = vadd.f32 %v17, %v18
  %22 = vadd.xlane.f32.xlu0 %v21
  %v23 = vpop.xlane.xlu0 %22
  %v24 = vadd.f32 %v19, %v20
  %25 = vadd.xlane.f32.xlu0 %v24
  %v26 = vpop.xlane.xlu0 %25
  %v27 = vrcp.pop 256.0
  %v28 = vmul.f32 256.0, %v27
  %v29 = vsub.f32 1.0, %v28
  %v30 = vmul.f32 %v27, %v29
  %v31 = vadd.f32 %v27, %v30
  %vm32 = vweird.f32 %v27
  %v33 = vsel %vm32, %v27, %v31
  %v34 = vmul.f32 %v23, %v33
  %v35 = vmul.f32 %v26, %v33
  %v36 = vsub.f32 %v17, %v34
  %v37 = vsub.f32 %v18, %v34
  %v38 = vsub.f32 %v19, %v35
  %v39 = vsub.f32 %v20, %v35
  %v40 = vmul.f32 %v36, %v36
  %v41 = vmul.f32 %v37, %v37
  %v42 = vmul.f32 %v38, %v38
  %v43 = vmul.f32 %v39, %v39
  %v44 = vadd.f32 %v40, %v41
  %45 = vadd.xlane.f32.xlu0 %v44
  %v46 = vpop.xlane.xlu0 %45
  %v47 = vadd.f32 %v42, %v43
  %48 = vadd.xlane.f32.xlu0 %v47
  %v49 = vpop.xlane.xlu0 %48
  %v50 = vmul.f32 %v46, %v33
  %v51 = vmul.f32 %v49, %v33
  %v52 = vadd.f32 %v50, 1e-05
  %v53 = vadd.f32 %v51, 1e-05
  %v54 = vrsqrt.pop %v52
  %v55 = vmul.f32 %v54, %v52
  %v56 = vmul.f32 %v55, %v54
  %v57 = vmul.f32 0.5, %v56
  %v58 = vsub.f32 1.5, %v57
  %v59 = vmul.f32 %v54, %v58
  %vm60 = vweird.f32 %v52
  %vm61 = vweird.f32 %v54
  %vm62 = vmor %vm60, %vm61
  %v63 = vsel %vm62, %v54, %v59
  %v64 = vrsqrt.pop %v53
  %v65 = vmul.f32 %v64, %v53
  %v66 = vmul.f32 %v65, %v64
  %v67 = vmul.f32 0.5, %v66
  %v68 = vsub.f32 1.5, %v67
  %v69 = vmul.f32 %v64, %v68
  %vm70 = vweird.f32 %v53
  %vm71 = vweird.f32 %v64
  %vm72 = vmor %vm70, %vm71
  %v73 = vsel %vm72, %v64, %v69
  %v74 = vmul.f32 %v36, %v63
  %v75 = vmul.f32 %v37, %v63
  %v76 = vmul.f32 %v38, %v73
  %v77 = vmul.f32 %v39, %v73
  %v78 = vsub.f32 0.0, %v74
  %v79 = vsub.f32 0.0, %v75
  %v80 = vsub.f32 0.0, %v76
  %v81 = vsub.f32 0.0, %v77
  %v82 = vmul.f32 %v78, 1.442695
  %v83 = vpow.pop %v82
  %v84 = vmul.f32 %v79, 1.442695
  %v85 = vpow.pop %v84
  %v86 = vmul.f32 %v80, 1.442695
  %v87 = vpow.pop %v86
  %v88 = vmul.f32 %v81, 1.442695
  %v89 = vpow.pop %v88
  %v90 = vadd.f32 %v83, 1.0
  %v91 = vadd.f32 %v85, 1.0
  %v92 = vadd.f32 %v87, 1.0
  %v93 = vadd.f32 %v89, 1.0
  %v94 = vrcp.pop %v90
  %v95 = vrcp.pop %v91
  %v96 = vrcp.pop %v92
  %v97 = vrcp.pop %v93
  %v98 = vld [vmem:[%s1] sm:$0xff]
  %v99 = vld [vmem:[%s1 + $0x8] sm:$0xff]
  %v100 = vld [vmem:[%s1 + $0x10] sm:$0xff]
  %v101 = vld [vmem:[%s1 + $0x18] sm:$0xff]
  %v102 = vadd.f32 %v98, %v99
  %103 = vadd.xlane.f32.xlu0 %v102
  %v104 = vpop.xlane.xlu0 %103
  %v105 = vadd.f32 %v100, %v101
  %106 = vadd.xlane.f32.xlu0 %v105
  %v107 = vpop.xlane.xlu0 %106
  %v108 = vmul.f32 %v104, %v33
  %v109 = vmul.f32 %v107, %v33
  %v110 = vsub.f32 %v98, %v108
  %v111 = vsub.f32 %v99, %v108
  %v112 = vsub.f32 %v100, %v109
  %v113 = vsub.f32 %v101, %v109
  %v114 = vmul.f32 %v110, %v110
  %v115 = vmul.f32 %v111, %v111
  %v116 = vmul.f32 %v112, %v112
  %v117 = vmul.f32 %v113, %v113
  %v118 = vadd.f32 %v114, %v115
  %119 = vadd.xlane.f32.xlu0 %v118
  %v120 = vpop.xlane.xlu0 %119
  %v121 = vadd.f32 %v116, %v117
  %122 = vadd.xlane.f32.xlu0 %v121
  %v123 = vpop.xlane.xlu0 %122
  %v124 = vmul.f32 %v120, %v33
  %v125 = vmul.f32 %v123, %v33
  %v126 = vadd.f32 %v124, 1e-05
  %v127 = vadd.f32 %v125, 1e-05
  %v128 = vrsqrt.pop %v126
  %v129 = vmul.f32 %v128, %v126
  %v130 = vmul.f32 %v129, %v128
  %v131 = vmul.f32 0.5, %v130
  %v132 = vsub.f32 1.5, %v131
  %v133 = vmul.f32 %v128, %v132
  %vm134 = vweird.f32 %v126
  %vm135 = vweird.f32 %v128
  %vm136 = vmor %vm134, %vm135
  %v137 = vsel %vm136, %v128, %v133
  %v138 = vrsqrt.pop %v127
  %v139 = vmul.f32 %v138, %v127
  %v140 = vmul.f32 %v139, %v138
  %v141 = vmul.f32 0.5, %v140
  %v142 = vsub.f32 1.5, %v141
  %v143 = vmul.f32 %v138, %v142
  %vm144 = vweird.f32 %v127
  %vm145 = vweird.f32 %v138
  %vm146 = vmor %vm144, %vm145
  %v147 = vsel %vm146, %v138, %v143
  %v148 = vmul.f32 %v110, %v137
  %v149 = vmul.f32 %v111, %v137
  %v150 = vmul.f32 %v112, %v147
  %v151 = vmul.f32 %v113, %v147
  %v152 = vtanh.pop %v148
  %v153 = vtanh.pop %v149
  %v154 = vtanh.pop %v150
  %v155 = vtanh.pop %v151
  %v156 = vld [vmem:[%s2] sm:$0xff]
  %v157 = vld [vmem:[%s2 + $0x8] sm:$0xff]
  %v158 = vld [vmem:[%s2 + $0x10] sm:$0xff]
  %v159 = vld [vmem:[%s2 + $0x18] sm:$0xff]
  %v160 = vadd.f32 %v156, %v157
  %161 = vadd.xlane.f32.xlu0 %v160
  %v162 = vpop.xlane.xlu0 %161
  %v163 = vadd.f32 %v158, %v159
  %164 = vadd.xlane.f32.xlu0 %v163
  %v165 = vpop.xlane.xlu0 %164
  %v166 = vmul.f32 %v162, %v33
  %v167 = vmul.f32 %v165, %v33
  %v168 = vsub.f32 %v156, %v166
  %v169 = vsub.f32 %v157, %v166
  %v170 = vsub.f32 %v158, %v167
  %v171 = vsub.f32 %v159, %v167
  %v172 = vmul.f32 %v168, %v168
  %v173 = vmul.f32 %v169, %v169
  %v174 = vmul.f32 %v170, %v170
  %v175 = vmul.f32 %v171, %v171
  %v176 = vadd.f32 %v172, %v173
  %177 = vadd.xlane.f32.xlu0 %v176
  %v178 = vpop.xlane.xlu0 %177
  %v179 = vadd.f32 %v174, %v175
  %180 = vadd.xlane.f32.xlu0 %v179
  %v181 = vpop.xlane.xlu0 %180
  %v182 = vmul.f32 %v178, %v33
  %v183 = vmul.f32 %v181, %v33
  %v184 = vadd.f32 %v182, 1e-05
  %v185 = vadd.f32 %v183, 1e-05
  %v186 = vrsqrt.pop %v184
  %v187 = vmul.f32 %v186, %v184
  %v188 = vmul.f32 %v187, %v186
  %v189 = vmul.f32 0.5, %v188
  %v190 = vsub.f32 1.5, %v189
  %v191 = vmul.f32 %v186, %v190
  %vm192 = vweird.f32 %v184
  %vm193 = vweird.f32 %v186
  %vm194 = vmor %vm192, %vm193
  %v195 = vsel %vm194, %v186, %v191
  %v196 = vrsqrt.pop %v185
  %v197 = vmul.f32 %v196, %v185
  %v198 = vmul.f32 %v197, %v196
  %v199 = vmul.f32 0.5, %v198
  %v200 = vsub.f32 1.5, %v199
  %v201 = vmul.f32 %v196, %v200
  %vm202 = vweird.f32 %v185
  %vm203 = vweird.f32 %v196
  %vm204 = vmor %vm202, %vm203
  %v205 = vsel %vm204, %v196, %v201
  %v206 = vmul.f32 %v168, %v195
  %v207 = vmul.f32 %v169, %v195
  %v208 = vmul.f32 %v170, %v205
  %v209 = vmul.f32 %v171, %v205
  %v210 = vsub.f32 0.0, %v206
  %v211 = vsub.f32 0.0, %v207
  %v212 = vsub.f32 0.0, %v208
  %v213 = vsub.f32 0.0, %v209
  %v214 = vmul.f32 %v210, 1.442695
  %v215 = vpow.pop %v214
  %v216 = vmul.f32 %v211, 1.442695
  %v217 = vpow.pop %v216
  %v218 = vmul.f32 %v212, 1.442695
  %v219 = vpow.pop %v218
  %v220 = vmul.f32 %v213, 1.442695
  %v221 = vpow.pop %v220
  %v222 = vadd.f32 %v215, 1.0
  %v223 = vadd.f32 %v217, 1.0
  %v224 = vadd.f32 %v219, 1.0
  %v225 = vadd.f32 %v221, 1.0
  %v226 = vrcp.pop %v222
  %v227 = vrcp.pop %v223
  %v228 = vrcp.pop %v224
  %v229 = vrcp.pop %v225
  %v230 = vmul.f32 %v94, %v152
  %v231 = vmul.f32 %v95, %v153
  %v232 = vmul.f32 %v96, %v154
  %v233 = vmul.f32 %v97, %v155
  %v234 = vld [vmem:[%s3] sm:$0xff]
  %v235 = vld [vmem:[%s3 + $0x8] sm:$0xff]
  %v236 = vld [vmem:[%s3 + $0x10] sm:$0xff]
  %v237 = vld [vmem:[%s3 + $0x18] sm:$0xff]
  %v238 = vmul.f32 %v226, %v234
  %v239 = vmul.f32 %v227, %v235
  %v240 = vmul.f32 %v228, %v236
  %v241 = vmul.f32 %v229, %v237
  %v242 = vadd.f32 %v230, %v238
  %v243 = vadd.f32 %v231, %v239
  %v244 = vadd.f32 %v232, %v240
  %v245 = vadd.f32 %v233, %v241
  %246 = vst [vmem:[%s4] sm:$0xff] %v242
  %247 = vst [vmem:[%s4 + $0x8] sm:$0xff] %v243
  %248 = vst [vmem:[%s4 + $0x10] sm:$0xff] %v244
  %249 = vst [vmem:[%s4 + $0x18] sm:$0xff] %v245
  // Predicated region
  $region18: #{cell_forward.12} parent=0 // pred_check
    _
  $region19: #{cell_forward.12} parent=0 // pred_check_branch
    %251 = sbr.rel (0) target = $region21
  $region20: #{cell_forward.12} parent=0 // pred_region
    _
  $region21: #{cell_forward.12} parent=0 // pred_fallthru
    _
  // Predicated region
  $region22: #{cell_forward.12} parent=0 // pred_check
    _
  $region23: #{cell_forward.12} parent=0 // pred_check_branch
    %253 = sbr.rel (0) target = $region25
  $region24: #{cell_forward.12} parent=0 // pred_region
    _
  $region25: #{cell_forward.12} parent=0 // pred_fallthru
    _

// kernel: cell_forward.8
$region0: #{cell_forward.8}
  #allocation0 [shape = 'u32[]', space=smem, size = 0x4, offset = 0x4, fixed_abs, tag = 'smem constant byte address 0x4 - core index']
  #allocation1 [shape = 'u32[72,128]{1,0:T(1,128)}', space=vmem, size = 0x9000, scoped, tag = 'internal scratch']
  #allocation2 [shape = 'f32[32,128]{1,0:T(8,128)}', space=vmem, size = 0x4000, scoped, tag = 'scratch operand']
  %s0 = inlined_call_operand.vmem [shape: bf16[32,384], index: 0, kind: input, shape index: {}]
  %s1 = inlined_call_operand.vmem [shape: bf16[2,384,128], index: 1, kind: input, shape index: {}]
  %s2 = inlined_call_operand.vmem [shape: f32[32,1], index: 2, kind: input, shape index: {}]
  %s3 = inlined_call_operand.vmem [shape: f32[2,32,128], index: 3, kind: output, shape index: {}]
  %s4 = sld [smem:[#allocation0]]
  $region53: #{cell_forward.8} parent=0
    _
  %s6 = ssub.s32 1, %s4
  %s7 = scalar_select 0, %s6, %s4
  loop: start=0, step=1, limit=4
  $region2: #{cell_forward.8} parent=0 // loop_pre_header
    _
  $region3: #{cell_forward.8} parent=0 // loop_header
    %s9 = sphi 0, %s13
    %p10 = scmp.ge.s32.totalorder %s9, 4
    %s16 = sphi 0, %s42
    %s17 = sphi 0, %s38
    %s18 = sphi 0, %s34
    %s19 = sphi 0, %s30
    %s20 = sphi 0, %s16
    %s21 = sphi 0, %s17
    %s22 = sphi 0, %s18
    %s23 = sphi 0, %s19
    %s24 = sphi 0, %s20
    %s25 = sphi 0, %s21
    %s26 = sphi 0, %s22
    %s27 = sphi 0, %s23
    %s47 = sphi 0, %s49
    %s50 = sphi 0, %s47
    %s51 = sphi 0, %s50
    %s67 = sphi 0, %s51
    %s77 = sphi 0, %s79
    %s80 = sphi 0, %s77
    %s81 = sphi 0, %s80
    %s97 = sphi 0, %s81
    %s103 = sphi 0, %s105
    %s106 = sphi 0, %s103
    %s107 = sphi 0, %s106
    %s123 = sphi 0, %s107
    %s133 = sphi 0, %s135
    %s136 = sphi 0, %s133
    %s137 = sphi 0, %s136
    %s153 = sphi 0, %s137
  $region4: #{cell_forward.8} parent=0 // loop_header_branch
    %12 = sbr.rel (%p10) target = $region8
  $region5: #{cell_forward.8} parent=0 // loop_body
    %s14 = ssub.s32 %s9, 1
    %s15 = ssub.s32 %s9, 2
    %s28 = sadd.s32 1, %s19
    %p29 = scmp.ge.s32.totalorder %s28, 1
    %s30 = scalar_select %p29, 0, %s28
    %s31 = sadd.s32 1, %s18
    %s32 = scalar_select %p29, %s31, %s18
    %p33 = scmp.ge.s32.totalorder %s32, 1
    %s34 = scalar_select %p33, 0, %s32
    %s35 = sadd.s32 1, %s17
    %s36 = scalar_select %p33, %s35, %s17
    %p37 = scmp.ge.s32.totalorder %s36, 1
    %s38 = scalar_select %p37, 0, %s36
    %s39 = sadd.s32 1, %s16
    %s40 = scalar_select %p37, %s39, %s16
    %p41 = scmp.ge.s32.totalorder %s40, 2
    %s42 = scalar_select %p41, 0, %s40
    %s43 = ssub.s32 %s17, %s38
    %s44 = ssub.s32 %s19, %s30
    %s45 = sor.u32 %s43, %s44
    %p46 = scmp.eq.s32.totalorder %s45, 0
    %s48 = sadd.s32 %s47, 1
    %s49 = scalar_select %p46, %s47, %s48
    %p52 = pneg %p46
    %p53 = scmp.eq.s32.totalorder %s9, 1
    %p54 = por %p52, %p53
    %p55 = scmp.ne.s32.totalorder %s47, %s50
    %p56 = scmp.eq.s32.totalorder %s9, 0
    %p57 = por %p55, %p56
    %p58 = scmp.ne.s32.totalorder %s47, %s50
    %p59 = scmp.eq.s32.totalorder %s14, 1
    %p60 = por %p58, %p59
    %p61 = scmp.ne.s32.totalorder %s50, %s51
    %p62 = scmp.eq.s32.totalorder %s14, 0
    %p63 = por %p61, %p62
    %p64 = scmp.ne.s32.totalorder %s50, %s51
    %p65 = scmp.eq.s32.totalorder %s15, 1
    %p66 = por %p64, %p65
    %p68 = scmp.ne.s32.totalorder %s51, %s67
    %p69 = scmp.eq.s32.totalorder %s15, 0
    %p70 = por %p68, %p69
    %s71 = ssub.s32 %s16, %s42
    %s72 = ssub.s32 %s19, %s30
    %s73 = sor.u32 %s71, %s72
    %s74 = ssub.s32 %s18, %s34
    %s75 = sor.u32 %s73, %s74
    %p76 = scmp.eq.s32.totalorder %s75, 0
    %s78 = sadd.s32 %s77, 1
    %s79 = scalar_select %p76, %s77, %s78
    %p82 = pneg %p76
    %p83 = scmp.eq.s32.totalorder %s9, 1
    %p84 = por %p82, %p83
    %p85 = scmp.ne.s32.totalorder %s77, %s80
    %p86 = scmp.eq.s32.totalorder %s9, 0
    %p87 = por %p85, %p86
    %p88 = scmp.ne.s32.totalorder %s77, %s80
    %p89 = scmp.eq.s32.totalorder %s14, 1
    %p90 = por %p88, %p89
    %p91 = scmp.ne.s32.totalorder %s80, %s81
    %p92 = scmp.eq.s32.totalorder %s14, 0
    %p93 = por %p91, %p92
    %p94 = scmp.ne.s32.totalorder %s80, %s81
    %p95 = scmp.eq.s32.totalorder %s15, 1
    %p96 = por %p94, %p95
    %p98 = scmp.ne.s32.totalorder %s81, %s97
    %p99 = scmp.eq.s32.totalorder %s15, 0
    %p100 = por %p98, %p99
    %s101 = ssub.s32 %s17, %s38
    %p102 = scmp.eq.s32.totalorder %s101, 0
    %s104 = sadd.s32 %s103, 1
    %s105 = scalar_select %p102, %s103, %s104
    %p108 = pneg %p102
    %p109 = scmp.eq.s32.totalorder %s9, 1
    %p110 = por %p108, %p109
    %p111 = scmp.ne.s32.totalorder %s103, %s106
    %p112 = scmp.eq.s32.totalorder %s9, 0
    %p113 = por %p111, %p112
    %p114 = scmp.ne.s32.totalorder %s103, %s106
    %p115 = scmp.eq.s32.totalorder %s14, 1
    %p116 = por %p114, %p115
    %p117 = scmp.ne.s32.totalorder %s106, %s107
    %p118 = scmp.eq.s32.totalorder %s14, 0
    %p119 = por %p117, %p118
    %p120 = scmp.ne.s32.totalorder %s106, %s107
    %p121 = scmp.eq.s32.totalorder %s15, 1
    %p122 = por %p120, %p121
    %p124 = scmp.ne.s32.totalorder %s107, %s123
    %p125 = scmp.eq.s32.totalorder %s15, 0
    %p126 = por %p124, %p125
    %s127 = ssub.s32 %s16, %s42
    %s128 = ssub.s32 %s17, %s38
    %s129 = sor.u32 %s127, %s128
    %s130 = ssub.s32 %s18, %s34
    %s131 = sor.u32 %s129, %s130
    %p132 = scmp.eq.s32.totalorder %s131, 0
    %s134 = sadd.s32 %s133, 1
    %s135 = scalar_select %p132, %s133, %s134
    %p138 = pneg %p132
    %p139 = scmp.eq.s32.totalorder %s9, 1
    %p140 = por %p138, %p139
    %p141 = scmp.ne.s32.totalorder %s133, %s136
    %p142 = scmp.eq.s32.totalorder %s9, 0
    %p143 = por %p141, %p142
    %p144 = scmp.ne.s32.totalorder %s133, %s136
    %p145 = scmp.eq.s32.totalorder %s14, 1
    %p146 = por %p144, %p145
    %p147 = scmp.ne.s32.totalorder %s136, %s137
    %p148 = scmp.eq.s32.totalorder %s14, 0
    %p149 = por %p147, %p148
    %p150 = scmp.ne.s32.totalorder %s136, %s137
    %p151 = scmp.eq.s32.totalorder %s15, 1
    %p152 = por %p150, %p151
    %p154 = scmp.ne.s32.totalorder %s137, %s153
    %p155 = scmp.eq.s32.totalorder %s15, 0
    %p156 = por %p154, %p155
    %p157 = scmp.le.s32.totalorder 1, %s9
    %p158 = scmp.lt.s32.totalorder %s9, 3
    %p159 = pnand %p157, %p158
    %p160 = pneg %p159
    // Predicated region
    $region9: #{cell_forward.8} parent=5 // pred_check
      _
    $region10: #{cell_forward.8} parent=5 // pred_check_branch
      %162 = sbr.rel (%p159) target = $region12
    $region11: #{cell_forward.8} parent=5 // pred_region
      %s163 = ssub.s32 %s9, 1
      // Predicated region
      $region13: #{cell_forward.8} parent=11 // pred_check
        %p164 = pneg %p63
      $region14: #{cell_forward.8} parent=11 // pred_check_branch
        %166 = sbr.rel (%p164) target = $region16
      $region15: #{cell_forward.8} parent=11 // pred_region
        %s167 = smul.u32 4, %s21
        %s168 = smul.u32 3, %s23
        %p169 = scmp.lt.s32.totalorder %s167, 3
        %s170 = scalar_select %p169, %s167, 3
        %p171 = scmp.lt.s32.totalorder %s168, 2
        %s172 = scalar_select %p171, %s168, 2
        %s173 = smul.addr %s170, 3
        %s174 = sadd.s32 %s172, %s173
        %s175 = smul.addr %s174, 4
        %s176 = scalar_lea.vmem %s0, %s175
        %s177 = smul.u32 4, %s21
        %s178 = smul.u32 3, %s23
      $region16: #{cell_forward.8} parent=11 // pred_fallthru
        _
      // Predicated region
      $region17: #{cell_forward.8} parent=11 // pred_check
        %p179 = pneg %p119
      $region18: #{cell_forward.8} parent=11 // pred_check_branch
        %181 = sbr.rel (%p179) target = $region20
      $region19: #{cell_forward.8} parent=11 // pred_region
        %s182 = smul.u32 4, %s21
        %p183 = scmp.lt.s32.totalorder %s182, 3
        %s184 = scalar_select %p183, %s182, 3
        %s185 = smul.addr %s184, 8
        %s186 = scalar_lea.vmem %s2, %s185
        %s187 = smul.u32 4, %s21
      $region20: #{cell_forward.8} parent=11 // pred_fallthru
        _
    $region12: #{cell_forward.8} parent=5 // pred_fallthru
      _
    %p188 = scmp.lt.s32.totalorder %s9, 2
    // Predicated region
    $region21: #{cell_forward.8} parent=5 // pred_check
      %p189 = pneg %p188
    $region22: #{cell_forward.8} parent=5 // pred_check_branch
      %191 = sbr.rel (%p189) target = $region24
    $region23: #{cell_forward.8} parent=5 // pred_region
      // Predicated region
      $region25: #{cell_forward.8} parent=23 // pred_check
        %p192 = pneg %p87
      $region26: #{cell_forward.8} parent=23 // pred_check_branch
        %194 = sbr.rel (%p192) target = $region28
      $region27: #{cell_forward.8} parent=23 // pred_region
        %s195 = smul.u32 48, %s19
        %p196 = scmp.lt.s32.totalorder %s16, 1
        %s197 = scalar_select %p196, %s16, 1
        %p198 = scmp.lt.s32.totalorder %s195, 47
        %s199 = scalar_select %p198, %s195, 47
        %p200 = scmp.lt.s32.totalorder %s18, 0
        %s201 = scalar_select %p200, %s18, 0
        %s202 = sadd.s32 %s201, %s199
        %s203 = smul.addr %s197, 48
        %s204 = sadd.s32 %s202, %s203
        %s205 = smul.addr %s204, 4
        %s206 = scalar_lea.vmem %s1, %s205
        %s207 = smul.u32 48, %s19
      $region28: #{cell_forward.8} parent=23 // pred_fallthru
        _
    $region24: #{cell_forward.8} parent=5 // pred_fallthru
      _
    %p208 = scmp.le.s32.totalorder 1, %s9
    %p209 = scmp.lt.s32.totalorder %s9, 3
    %p210 = pnand %p208, %p209
    %p211 = pneg %p210
    // Predicated region
    $region29: #{cell_forward.8} parent=5 // pred_check
      _
    $region30: #{cell_forward.8} parent=5 // pred_check_branch
      %213 = sbr.rel (%p210) target = $region32
    $region31: #{cell_forward.8} parent=5 // pred_region
      %s214 = ssub.s32 %s9, 1
      %s215 = smul.u32 4, %s21
      %s216 = smul.u32 3, %s23
      %p217 = scmp.lt.s32.totalorder %s215, 3
      %s218 = scalar_select %p217, %s215, 3
      %p219 = scmp.lt.s32.totalorder %s216, 2
      %s220 = scalar_select %p219, %s216, 2
      %s221 = smul.addr %s218, 3
      %s222 = sadd.s32 %s220, %s221
      %s223 = smul.addr %s222, 4
      %s224 = scalar_lea.vmem %s0, %s223
      %p225 = pneg %p63
      %p226 = pneg %p60
      %s227 = smul.u32 48, %s23
      %p228 = scmp.lt.s32.totalorder %s20, 1
      %s229 = scalar_select %p228, %s20, 1
      %p230 = scmp.lt.s32.totalorder %s227, 47
      %s231 = scalar_select %p230, %s227, 47
      %p232 = scmp.lt.s32.totalorder %s22, 0
      %s233 = scalar_select %p232, %s22, 0
      %s234 = sadd.s32 %s233, %s231
      %s235 = smul.addr %s229, 48
      %s236 = sadd.s32 %s234, %s235
      %s237 = smul.addr %s236, 4
      %s238 = scalar_lea.vmem %s1, %s237
      %p239 = pneg %p93
      %p240 = pneg %p90
      %s241 = smul.u32 4, %s21
      %p242 = scmp.lt.s32.totalorder %s241, 3
      %s243 = scalar_select %p242, %s241, 3
      %s244 = smul.addr %s243, 8
      %s245 = scalar_lea.vmem %s2, %s244
      %p246 = pneg %p119
      %p247 = pneg %p116
      %p248 = pneg %p149
      %p249 = pneg %p146
      %s250 = smul.u32 4, %s21
      %p251 = scmp.lt.s32.totalorder %s20, 1
      %s252 = scalar_select %p251, %s20, 1
      %p253 = scmp.lt.s32.totalorder %s250, 3
      %s254 = scalar_select %p253, %s250, 3
      %p255 = scmp.lt.s32.totalorder %s22, 0
      %s256 = scalar_select %p255, %s22, 0
      %s257 = sadd.s32 %s256, %s254
      %s258 = smul.addr %s252, 4
      %s259 = sadd.s32 %s257, %s258
      %s260 = smul.addr %s259, 8
      %s261 = scalar_lea.vmem %s3, %s260
      %s262 = smul.u32 4, %s21
      %s263 = smul.u32 3, %s23
      %p264 = scmp.lt.s32.totalorder %s262, 3
      %s265 = scalar_select %p264, %s262, 3
      %p266 = scmp.lt.s32.totalorder %s263, 2
      %s267 = scalar_select %p266, %s263, 2
      %s268 = smul.addr %s265, 3
      %s269 = sadd.s32 %s267, %s268
      %s270 = smul.addr %s269, 4
      %s271 = scalar_lea.vmem %s0, %s270
      %s272 = smul.u32 4, %s21
      %s273 = smul.u32 3, %s23
      %s274 = smul.u32 48, %s23
      %p275 = scmp.lt.s32.totalorder %s20, 1
      %s276 = scalar_select %p275, %s20, 1
      %p277 = scmp.lt.s32.totalorder %s274, 47
      %s278 = scalar_select %p277, %s274, 47
      %p279 = scmp.lt.s32.totalorder %s22, 0
      %s280 = scalar_select %p279, %s22, 0
      %s281 = sadd.s32 %s280, %s278
      %s282 = smul.addr %s276, 48
      %s283 = sadd.s32 %s281, %s282
      %s284 = smul.addr %s283, 4
      %s285 = scalar_lea.vmem %s1, %s284
      %s286 = smul.u32 48, %s23
      %s287 = smul.u32 4, %s21
      %p288 = scmp.lt.s32.totalorder %s287, 3
      %s289 = scalar_select %p288, %s287, 3
      %s290 = smul.addr %s289, 8
      %s291 = scalar_lea.vmem %s2, %s290
      %s292 = smul.u32 4, %s21
      %s293 = smul.u32 4, %s21
      %p294 = scmp.lt.s32.totalorder %s20, 1
      %s295 = scalar_select %p294, %s20, 1
      %p296 = scmp.lt.s32.totalorder %s293, 3
      %s297 = scalar_select %p296, %s293, 3
      %p298 = scmp.lt.s32.totalorder %s22, 0
      %s299 = scalar_select %p298, %s22, 0
      %s300 = sadd.s32 %s299, %s297
      %s301 = smul.addr %s295, 4
      %s302 = sadd.s32 %s300, %s301
      %s303 = smul.addr %s302, 8
      %s304 = scalar_lea.vmem %s3, %s303
      %s305 = smul.u32 4, %s21
      %p306 = scmp.eq.s32.totalorder %s23, 0
      // Predicated region
      $region33: #{cell_forward.8} parent=31 // pred_check
        %p307 = pneg %p306
      $region34: #{cell_forward.8} parent=31 // pred_check_branch
        %309 = sbr.rel (%p307) target = $region36
      $region35: #{cell_forward.8} parent=31 // pred_region
        %310 = vst [vmem:[#allocation2] sm:$0xff] 0.0
        %311 = vst [vmem:[#allocation2 + $0x8] sm:$0xff] 0.0
        %312 = vst [vmem:[#allocation2 + $0x10] sm:$0xff] 0.0
        %313 = vst [vmem:[#allocation2 + $0x18] sm:$0xff] 0.0
      $region36: #{cell_forward.8} parent=31 // pred_fallthru
        _
      %v314 = vld [vmem:[#allocation2] sm:$0xff]
      %v315 = vld [vmem:[#allocation2 + $0x8] sm:$0xff]
      %v316 = vld [vmem:[#allocation2 + $0x10] sm:$0xff]
      %v317 = vld [vmem:[#allocation2 + $0x18] sm:$0xff]
      %v318 = vld [vmem:[%s271] sm:$0xff]
      %v319 = vld [vmem:[%s271 + $0x8] sm:$0xf]
      %v320 = vld [vmem:[%s271 + $0xc] sm:$0xff]
      %v321 = vld [vmem:[%s271 + $0x14] sm:$0xf]
      %v322 = vld [vmem:[%s271 + $0x18] sm:$0xff]
      %v323 = vld [vmem:[%s271 + $0x20] sm:$0xf]
      %v324 = vld [vmem:[%s271 + $0x24] sm:$0xff]
      %v325 = vld [vmem:[%s271 + $0x2c] sm:$0xf]
      %v326 = vld [vmem:[%s285] sm:$0xf]
      %v327 = vld [vmem:[%s285 + $0x4] sm:$0xf]
      %v328 = vld [vmem:[%s285 + $0x8] sm:$0xf]
      %v329 = vld [vmem:[%s285 + $0xc] sm:$0xf]
      %v330 = vld [vmem:[%s285 + $0x10] sm:$0xf]
      %v331 = vld [vmem:[%s285 + $0x14] sm:$0xf]
      %v332 = vld [vmem:[%s285 + $0x18] sm:$0xf]
      %v333 = vld [vmem:[%s285 + $0x1c] sm:$0xf]
      %v334 = vld [vmem:[%s285 + $0x20] sm:$0xf]
      %v335 = vld [vmem:[%s285 + $0x24] sm:$0xf]
      %v336 = vld [vmem:[%s285 + $0x28] sm:$0xf]
      %v337 = vld [vmem:[%s285 + $0x2c] sm:$0xf]
      %v338 = vld [vmem:[%s285 + $0x30] sm:$0xf]
      %v339 = vld [vmem:[%s285 + $0x34] sm:$0xf]
      %v340 = vld [vmem:[%s285 + $0x38] sm:$0xf]
      %v341 = vld [vmem:[%s285 + $0x3c] sm:$0xf]
      %v342 = vld [vmem:[%s285 + $0x40] sm:$0xf]
      %v343 = vld [vmem:[%s285 + $0x44] sm:$0xf]
      %v344 = vld [vmem:[%s285 + $0x48] sm:$0xf]
      %v345 = vld [vmem:[%s285 + $0x4c] sm:$0xf]
      %v346 = vld [vmem:[%s285 + $0x50] sm:$0xf]
      %v347 = vld [vmem:[%s285 + $0x54] sm:$0xf]
      %v348 = vld [vmem:[%s285 + $0x58] sm:$0xf]
      %v349 = vld [vmem:[%s285 + $0x5c] sm:$0xf]
      %v350 = vld [vmem:[%s285 + $0x60] sm:$0xf]
      %v351 = vld [vmem:[%s285 + $0x64] sm:$0xf]
      %v352 = vld [vmem:[%s285 + $0x68] sm:$0xf]
      %v353 = vld [vmem:[%s285 + $0x6c] sm:$0xf]
      %v354 = vld [vmem:[%s285 + $0x70] sm:$0xf]
      %v355 = vld [vmem:[%s285 + $0x74] sm:$0xf]
      %v356 = vld [vmem:[%s285 + $0x78] sm:$0xf]
      %v357 = vld [vmem:[%s285 + $0x7c] sm:$0xf]
      %v358 = vld [vmem:[%s285 + $0x80] sm:$0xf]
      %v359 = vld [vmem:[%s285 + $0x84] sm:$0xf]
      %v360 = vld [vmem:[%s285 + $0x88] sm:$0xf]
      %v361 = vld [vmem:[%s285 + $0x8c] sm:$0xf]
      %v362 = vld [vmem:[%s285 + $0x90] sm:$0xf]
      %v363 = vld [vmem:[%s285 + $0x94] sm:$0xf]
      %v364 = vld [vmem:[%s285 + $0x98] sm:$0xf]
      %v365 = vld [vmem:[%s285 + $0x9c] sm:$0xf]
      %v366 = vld [vmem:[%s285 + $0xa0] sm:$0xf]
      %v367 = vld [vmem:[%s285 + $0xa4] sm:$0xf]
      %v368 = vld [vmem:[%s285 + $0xa8] sm:$0xf]
      %v369 = vld [vmem:[%s285 + $0xac] sm:$0xf]
      %v370 = vld [vmem:[%s285 + $0xb0] sm:$0xf]
      %v371 = vld [vmem:[%s285 + $0xb4] sm:$0xf]
      %v372 = vld [vmem:[%s285 + $0xb8] sm:$0xf]
      %v373 = vld [vmem:[%s285 + $0xbc] sm:$0xf]
      %v382 = vunpack.c.l.b16 %v318
      %v383 = vunpack.c.h.b16 %v318
      %v384 = vunpack.c.l.b16 %v319
      %v385 = vunpack.c.l.b16 %v320
      %v386 = vunpack.c.h.b16 %v320
      %v387 = vunpack.c.l.b16 %v321
      %v388 = vunpack.c.l.b16 %v322
      %v389 = vunpack.c.h.b16 %v322
      %v390 = vunpack.c.l.b16 %v323
      %v391 = vunpack.c.l.b16 %v324
      %v392 = vunpack.c.h.b16 %v324
      %v393 = vunpack.c.l.b16 %v325
      %v394 = vpack.c.b16 %v385, %v382
      %v395 = vpack.c.b16 %v386, %v383
      %v396 = vpack.c.b16 %v387, %v384
      %v397 = vpack.c.b16 %v391, %v388
      %v398 = vpack.c.b16 %v392, %v389
      %v399 = vpack.c.b16 %v393, %v390
      %v454 = vunpack.c.l.b16 %v326
      %v455 = vunpack.c.l.b16 %v327
      %v456 = vunpack.c.l.b16 %v328
      %v457 = vunpack.c.l.b16 %v329
      %v458 = vunpack.c.l.b16 %v330
      %v459 = vunpack.c.l.b16 %v331
      %v460 = vunpack.c.l.b16 %v332
      %v461 = vunpack.c.l.b16 %v333
      %v462 = vunpack.c.l.b16 %v334
      %v463 = vunpack.c.l.b16 %v335
      %v464 = vunpack.c.l.b16 %v336
      %v465 = vunpack.c.l.b16 %v337
      %v466 = vunpack.c.l.b16 %v338
      %v467 = vunpack.c.l.b16 %v339
      %v468 = vunpack.c.l.b16 %v340
      %v469 = vunpack.c.l.b16 %v341
      %v470 = vunpack.c.l.b16 %v342
      %v471 = vunpack.c.l.b16 %v343
      %v472 = vunpack.c.l.b16 %v344
      %v473 = vunpack.c.l.b16 %v345
      %v474 = vunpack.c.l.b16 %v346
      %v475 = vunpack.c.l.b16 %v347
      %v476 = vunpack.c.l.b16 %v348
      %v477 = vunpack.c.l.b16 %v349
      %v478 = vunpack.c.l.b16 %v350
      %v479 = vunpack.c.l.b16 %v351
      %v480 = vunpack.c.l.b16 %v352
      %v481 = vunpack.c.l.b16 %v353
      %v482 = vunpack.c.l.b16 %v354
      %v483 = vunpack.c.l.b16 %v355
      %v484 = vunpack.c.l.b16 %v356
      %v485 = vunpack.c.l.b16 %v357
      %v486 = vunpack.c.l.b16 %v358
      %v487 = vunpack.c.l.b16 %v359
      %v488 = vunpack.c.l.b16 %v360
      %v489 = vunpack.c.l.b16 %v361
      %v490 = vunpack.c.l.b16 %v362
      %v491 = vunpack.c.l.b16 %v363
      %v492 = vunpack.c.l.b16 %v364
      %v493 = vunpack.c.l.b16 %v365
      %v494 = vunpack.c.l.b16 %v366
      %v495 = vunpack.c.l.b16 %v367
      %v496 = vunpack.c.l.b16 %v368
      %v497 = vunpack.c.l.b16 %v369
      %v498 = vunpack.c.l.b16 %v370
      %v499 = vunpack.c.l.b16 %v371
      %v500 = vunpack.c.l.b16 %v372
      %v501 = vunpack.c.l.b16 %v373
      %v502 = vpack.c.b16 %v455, %v454
      %v503 = vpack.c.b16 %v457, %v456
      %v504 = vpack.c.b16 %v459, %v458
      %v505 = vpack.c.b16 %v461, %v460
      %v506 = vpack.c.b16 %v463, %v462
      %v507 = vpack.c.b16 %v465, %v464
      %v508 = vpack.c.b16 %v467, %v466
      %v509 = vpack.c.b16 %v469, %v468
      %v510 = vpack.c.b16 %v471, %v470
      %v511 = vpack.c.b16 %v473, %v472
      %v512 = vpack.c.b16 %v475, %v474
      %v513 = vpack.c.b16 %v477, %v476
      %v514 = vpack.c.b16 %v479, %v478
      %v515 = vpack.c.b16 %v481, %v480
      %v516 = vpack.c.b16 %v483, %v482
      %v517 = vpack.c.b16 %v485, %v484
      %v518 = vpack.c.b16 %v487, %v486
      %v519 = vpack.c.b16 %v489, %v488
      %v520 = vpack.c.b16 %v491, %v490
      %v521 = vpack.c.b16 %v493, %v492
      %v522 = vpack.c.b16 %v495, %v494
      %v523 = vpack.c.b16 %v497, %v496
      %v524 = vpack.c.b16 %v499, %v498
      %v525 = vpack.c.b16 %v501, %v500
      %550 = vmatpush.bf16.msra.mxu0 %v509
      %551 = vmatpush.bf16.msra.mxu0 %v508
      %552 = vmatpush.bf16.msra.mxu0 %v507
      %553 = vmatpush.bf16.msra.mxu0 %v506
      %554 = vmatpush.bf16.msra.mxu0 %v505
      %555 = vmatpush.bf16.msra.mxu0 %v504
      %556 = vmatpush.bf16.msra.mxu0 %v503
      %557 = vmatpush.bf16.msra.mxu0 %v502
      %558 = vmatmul.bf16.gmra.mxu0 %v394
      %v559 = vpop.f32.mrf.mxu0
      %v560 = vadd.f32 0.0, %v559
      %v561 = vpop.f32.mrf.mxu0
      %v562 = vadd.f32 0.0, %v561
      %563 = vmatmul.bf16.gmra.mxu0 %v397
      %v564 = vpop.f32.mrf.mxu0
      %v565 = vadd.f32 0.0, %v564
      %v566 = vpop.f32.mrf.mxu0
      %v567 = vadd.f32 0.0, %v566
      %568 = vdwg.mxu0
      %569 = vmatpush.bf16.msra.mxu0 %v517
      %570 = vmatpush.bf16.msra.mxu0 %v516
      %571 = vmatpush.bf16.msra.mxu0 %v515
      %572 = vmatpush.bf16.msra.mxu0 %v514
      %573 = vmatpush.bf16.msra.mxu0 %v513
      %574 = vmatpush.bf16.msra.mxu0 %v512
      %575 = vmatpush.bf16.msra.mxu0 %v511
      %576 = vmatpush.bf16.msra.mxu0 %v510
      %577 = vmatmul.bf16.gmra.mxu0 %v395
      %v578 = vpop.f32.mrf.mxu0
      %v579 = vadd.f32 %v560, %v578
      %v580 = vpop.f32.mrf.mxu0
      %v581 = vadd.f32 %v562, %v580
      %582 = vmatmul.bf16.gmra.mxu0 %v398
      %v583 = vpop.f32.mrf.mxu0
      %v584 = vadd.f32 %v565, %v583
      %v585 = vpop.f32.mrf.mxu0
      %v586 = vadd.f32 %v567, %v585
      %587 = vdwg.mxu0
      %588 = vmatpush.bf16.msra.mxu0 %v525
      %589 = vmatpush.bf16.msra.mxu0 %v524
      %590 = vmatpush.bf16.msra.mxu0 %v523
      %591 = vmatpush.bf16.msra.mxu0 %v522
      %592 = vmatpush.bf16.msra.mxu0 %v521
      %593 = vmatpush.bf16.msra.mxu0 %v520
      %594 = vmatpush.bf16.msra.mxu0 %v519
      %595 = vmatpush.bf16.msra.mxu0 %v518
      %596 = vmatmul.bf16.gmra.mxu0 %v396
      %v597 = vpop.f32.mrf.mxu0
      %v598 = vadd.f32 %v579, %v597
      %v599 = vpop.f32.mrf.mxu0
      %v600 = vadd.f32 %v581, %v599
      %601 = vmatmul.bf16.gmra.mxu0 %v399
      %v602 = vpop.f32.mrf.mxu0
      %v603 = vadd.f32 %v584, %v602
      %v604 = vpop.f32.mrf.mxu0
      %v605 = vadd.f32 %v586, %v604
      %606 = vdwg.mxu0
      %v607 = vadd.f32 %v314, %v598
      %v608 = vadd.f32 %v315, %v600
      %v609 = vadd.f32 %v316, %v603
      %v610 = vadd.f32 %v317, %v605
      %611 = vst [vmem:[#allocation2] sm:$0xff] %v607
      %612 = vst [vmem:[#allocation2 + $0x8] sm:$0xff] %v608
      %613 = vst [vmem:[#allocation2 + $0x10] sm:$0xff] %v609
      %614 = vst [vmem:[#allocation2 + $0x18] sm:$0xff] %v610
      // Predicated region
      $region37: #{cell_forward.8} parent=31 // pred_check
        %p615 = pneg %p306
      $region38: #{cell_forward.8} parent=31 // pred_check_branch
        %617 = sbr.rel (%p615) target = $region40
      $region39: #{cell_forward.8} parent=31 // pred_region
        %v618 = vld [vmem:[#allocation2] sm:$0xff]
        %v619 = vld [vmem:[#allocation2 + $0x8] sm:$0xff]
        %v620 = vld [vmem:[#allocation2 + $0x10] sm:$0xff]
        %v621 = vld [vmem:[#allocation2 + $0x18] sm:$0xff]
        %v622 = vld [vmem:[%s291] sm:$0xff]
        %v623 = vld [vmem:[%s291 + $0x8] sm:$0xff]
        %v624 = vld [vmem:[%s291 + $0x10] sm:$0xff]
        %v625 = vld [vmem:[%s291 + $0x18] sm:$0xff]
        %627 = vset.pattern.permute.xlu0 0
        %628 = vperm.xlu0 %627, %v622
        %v629 = vpop.permute.xlu0 %628
        %632 = vset.pattern.permute.xlu0 0
        %633 = vperm.xlu0 %632, %v623
        %v634 = vpop.permute.xlu0 %633
        %637 = vset.pattern.permute.xlu0 0
        %638 = vperm.xlu0 %637, %v624
        %v639 = vpop.permute.xlu0 %638
        %642 = vset.pattern.permute.xlu0 0
        %643 = vperm.xlu0 %642, %v625
        %v644 = vpop.permute.xlu0 %643
        %v646 = vadd.f32 %v618, %v629
        %v647 = vadd.f32 %v619, %v634
        %v648 = vadd.f32 %v620, %v639
        %v649 = vadd.f32 %v621, %v644
        %650 = vst [vmem:[%s304] sm:$0xff] %v646
        %651 = vst [vmem:[%s304 + $0x8] sm:$0xff] %v647
        %652 = vst [vmem:[%s304 + $0x10] sm:$0xff] %v648
        %653 = vst [vmem:[%s304 + $0x18] sm:$0xff] %v649
      $region40: #{cell_forward.8} parent=31 // pred_fallthru
        _
      %s654 = smul.u32 4, %s21
      %p655 = scmp.lt.s32.totalorder %s20, 1
      %s656 = scalar_select %p655, %s20, 1
      %p657 = scmp.lt.s32.totalorder %s654, 3
      %s658 = scalar_select %p657, %s654, 3
      %p659 = scmp.lt.s32.totalorder %s22, 0
      %s660 = scalar_select %p659, %s22, 0
      %s661 = sadd.s32 %s660, %s658
      %s662 = smul.addr %s656, 4
      %s663 = sadd.s32 %s661, %s662
      %s664 = smul.addr %s663, 8
      %s665 = scalar_lea.vmem %s3, %s664
      // Predicated region
      $region41: #{cell_forward.8} parent=31 // pred_check
        %p666 = pneg %p146
      $region42: #{cell_forward.8} parent=31 // pred_check_branch
        %668 = sbr.rel (%p666) target = $region44
      $region43: #{cell_forward.8} parent=31 // pred_region
        %s669 = smul.u32 4, %s21
      $region44: #{cell_forward.8} parent=31 // pred_fallthru
        _
    $region32: #{cell_forward.8} parent=5 // pred_fallthru
      _
    %p670 = scmp.le.s32.totalorder 2, %s9
    // Predicated region
    $region45: #{cell_forward.8} parent=5 // pred_check
      %p671 = pneg %p670
    $region46: #{cell_forward.8} parent=5 // pred_check_branch
      %673 = sbr.rel (%p671) target = $region48
    $region47: #{cell_forward.8} parent=5 // pred_region
      %s674 = ssub.s32 %s9, 2
      // Predicated region
      $region49: #{cell_forward.8} parent=47 // pred_check
        %p675 = pneg %p152
      $region50: #{cell_forward.8} parent=47 // pred_check_branch
        %677 = sbr.rel (%p675) target = $region52
      $region51: #{cell_forward.8} parent=47 // pred_region
        %s678 = smul.u32 4, %s25
        %p679 = scmp.lt.s32.totalorder %s24, 1
        %s680 = scalar_select %p679, %s24, 1
        %p681 = scmp.lt.s32.totalorder %s678, 3
        %s682 = scalar_select %p681, %s678, 3
        %p683 = scmp.lt.s32.totalorder %s26, 0
        %s684 = scalar_select %p683, %s26, 0
        %s685 = sadd.s32 %s684, %s682
        %s686 = smul.addr %s680, 4
        %s687 = sadd.s32 %s685, %s686
        %s688 = smul.addr %s687, 8
        %s689 = scalar_lea.vmem %s3, %s688
      $region52: #{cell_forward.8} parent=47 // pred_fallthru
        _
    $region48: #{cell_forward.8} parent=5 // pred_fallthru
      _
  $region6: #{cell_forward.8} parent=0 // loop_footer
    %s13 = sadd.s32 1, %s9
  $region7: #{cell_forward.8} parent=0 // loop_footer_branch
    %8 = sbr.rel target = $region3
  $region8: #{cell_forward.8} parent=0 // loop_exit
    _

// kernel: cell_forward.10
$region0: #{cell_forward.10}
  #allocation0 [shape = 'u32[]', space=smem, size = 0x4, offset = 0x4, fixed_abs, tag = 'smem constant byte address 0x4 - core index']
  #allocation1 [shape = 'u32[72,128]{1,0:T(1,128)}', space=vmem, size = 0x9000, scoped, tag = 'internal scratch']
  %s0 = inlined_call_operand.vmem [shape: f32[16,256], index: 0, kind: input, shape index: {}]
  %s1 = inlined_call_operand.vmem [shape: f32[16,256], index: 1, kind: input, shape index: {}]
  %s2 = inlined_call_operand.vmem [shape: f32[16,256], index: 2, kind: input, shape index: {}]
  %s3 = inlined_call_operand.vmem [shape: f32[16,256], index: 3, kind: output, shape index: {0}]
  %s4 = inlined_call_operand.vmem [shape: f32[16,256], index: 4, kind: output, shape index: {1}]
  %5 = xla_tuple %s3, %s4
  %s6 = sld [smem:[#allocation0]]
  $region30: #{cell_forward.10} parent=0
    _
  %s8 = ssub.s32 1, %s6
  %s9 = scalar_select 0, %s8, %s6
  // Predicated region
  $region2: #{cell_forward.10} parent=0 // pred_check
    _
  $region3: #{cell_forward.10} parent=0 // pred_check_branch
    %11 = sbr.rel (0) target = $region5
  $region4: #{cell_forward.10} parent=0 // pred_region
    _
  $region5: #{cell_forward.10} parent=0 // pred_fallthru
    _
  // Predicated region
  $region6: #{cell_forward.10} parent=0 // pred_check
    _
  $region7: #{cell_forward.10} parent=0 // pred_check_branch
    %13 = sbr.rel (0) target = $region9
  $region8: #{cell_forward.10} parent=0 // pred_region
    _
  $region9: #{cell_forward.10} parent=0 // pred_fallthru
    _
  // Predicated region
  $region10: #{cell_forward.10} parent=0 // pred_check
    _
  $region11: #{cell_forward.10} parent=0 // pred_check_branch
    %15 = sbr.rel (0) target = $region13
  $region12: #{cell_forward.10} parent=0 // pred_region
    _
  $region13: #{cell_forward.10} parent=0 // pred_fallthru
    _
  %v16 = vld [vmem:[%s0] sm:$0xff]
  %v17 = vld [vmem:[%s0 + $0x8] sm:$0xff]
  %v18 = vld [vmem:[%s0 + $0x10] sm:$0xff]
  %v19 = vld [vmem:[%s0 + $0x18] sm:$0xff]
  %v20 = vadd.f32 %v16, %v17
  %21 = vadd.xlane.f32.xlu0 %v20
  %v22 = vpop.xlane.xlu0 %21
  %v23 = vadd.f32 %v18, %v19
  %24 = vadd.xlane.f32.xlu0 %v23
  %v25 = vpop.xlane.xlu0 %24
  %v26 = vrcp.pop 256.0
  %v27 = vmul.f32 256.0, %v26
  %v28 = vsub.f32 1.0, %v27
  %v29 = vmul.f32 %v26, %v28
  %v30 = vadd.f32 %v26, %v29
  %vm31 = vweird.f32 %v26
  %v32 = vsel %vm31, %v26, %v30
  %v33 = vmul.f32 %v22, %v32
  %v34 = vmul.f32 %v25, %v32
  %v35 = vsub.f32 %v16, %v33
  %v36 = vsub.f32 %v17, %v33
  %v37 = vsub.f32 %v18, %v34
  %v38 = vsub.f32 %v19, %v34
  %v39 = vmul.f32 %v35, %v35
  %v40 = vmul.f32 %v36, %v36
  %v41 = vmul.f32 %v37, %v37
  %v42 = vmul.f32 %v38, %v38
  %v43 = vadd.f32 %v39, %v40
  %44 = vadd.xlane.f32.xlu0 %v43
  %v45 = vpop.xlane.xlu0 %44
  %v46 = vadd.f32 %v41, %v42
  %47 = vadd.xlane.f32.xlu0 %v46
  %v48 = vpop.xlane.xlu0 %47
  %v49 = vmul.f32 %v45, %v32
  %v50 = vmul.f32 %v48, %v32
  %v51 = vadd.f32 %v49, 1e-05
  %v52 = vadd.f32 %v50, 1e-05
  %v53 = vrsqrt.pop %v51
  %v54 = vmul.f32 %v53, %v51
  %v55 = vmul.f32 %v54, %v53
  %v56 = vmul.f32 0.5, %v55
  %v57 = vsub.f32 1.5, %v56
  %v58 = vmul.f32 %v53, %v57
  %vm59 = vweird.f32 %v51
  %vm60 = vweird.f32 %v53
  %vm61 = vmor %vm59, %vm60
  %v62 = vsel %vm61, %v53, %v58
  %v63 = vrsqrt.pop %v52
  %v64 = vmul.f32 %v63, %v52
  %v65 = vmul.f32 %v64, %v63
  %v66 = vmul.f32 0.5, %v65
  %v67 = vsub.f32 1.5, %v66
  %v68 = vmul.f32 %v63, %v67
  %vm69 = vweird.f32 %v52
  %vm70 = vweird.f32 %v63
  %vm71 = vmor %vm69, %vm70
  %v72 = vsel %vm71, %v63, %v68
  %v73 = vmul.f32 %v35, %v62
  %v74 = vmul.f32 %v36, %v62
  %v75 = vmul.f32 %v37, %v72
  %v76 = vmul.f32 %v38, %v72
  %v77 = vsub.f32 0.0, %v73
  %v78 = vsub.f32 0.0, %v74
  %v79 = vsub.f32 0.0, %v75
  %v80 = vsub.f32 0.0, %v76
  %v81 = vmul.f32 %v77, 1.442695
  %v82 = vpow.pop %v81
  %v83 = vmul.f32 %v78, 1.442695
  %v84 = vpow.pop %v83
  %v85 = vmul.f32 %v79, 1.442695
  %v86 = vpow.pop %v85
  %v87 = vmul.f32 %v80, 1.442695
  %v88 = vpow.pop %v87
  %v89 = vadd.f32 %v82, 1.0
  %v90 = vadd.f32 %v84, 1.0
  %v91 = vadd.f32 %v86, 1.0
  %v92 = vadd.f32 %v88, 1.0
  %v93 = vrcp.pop %v89
  %v94 = vrcp.pop %v90
  %v95 = vrcp.pop %v91
  %v96 = vrcp.pop %v92
  %97 = vst [vmem:[%s3] sm:$0xff] %v93
  %98 = vst [vmem:[%s3 + $0x8] sm:$0xff] %v94
  %99 = vst [vmem:[%s3 + $0x10] sm:$0xff] %v95
  %100 = vst [vmem:[%s3 + $0x18] sm:$0xff] %v96
  %v101 = vld [vmem:[%s1] sm:$0xff]
  %v102 = vld [vmem:[%s1 + $0x8] sm:$0xff]
  %v103 = vld [vmem:[%s1 + $0x10] sm:$0xff]
  %v104 = vld [vmem:[%s1 + $0x18] sm:$0xff]
  %v105 = vadd.f32 %v101, %v102
  %106 = vadd.xlane.f32.xlu0 %v105
  %v107 = vpop.xlane.xlu0 %106
  %v108 = vadd.f32 %v103, %v104
  %109 = vadd.xlane.f32.xlu0 %v108
  %v110 = vpop.xlane.xlu0 %109
  %v111 = vmul.f32 %v107, %v32
  %v112 = vmul.f32 %v110, %v32
  %v113 = vsub.f32 %v101, %v111
  %v114 = vsub.f32 %v102, %v111
  %v115 = vsub.f32 %v103, %v112
  %v116 = vsub.f32 %v104, %v112
  %v117 = vmul.f32 %v113, %v113
  %v118 = vmul.f32 %v114, %v114
  %v119 = vmul.f32 %v115, %v115
  %v120 = vmul.f32 %v116, %v116
  %v121 = vadd.f32 %v117, %v118
  %122 = vadd.xlane.f32.xlu0 %v121
  %v123 = vpop.xlane.xlu0 %122
  %v124 = vadd.f32 %v119, %v120
  %125 = vadd.xlane.f32.xlu0 %v124
  %v126 = vpop.xlane.xlu0 %125
  %v127 = vmul.f32 %v123, %v32
  %v128 = vmul.f32 %v126, %v32
  %v129 = vadd.f32 %v127, 1e-05
  %v130 = vadd.f32 %v128, 1e-05
  %v131 = vrsqrt.pop %v129
  %v132 = vmul.f32 %v131, %v129
  %v133 = vmul.f32 %v132, %v131
  %v134 = vmul.f32 0.5, %v133
  %v135 = vsub.f32 1.5, %v134
  %v136 = vmul.f32 %v131, %v135
  %vm137 = vweird.f32 %v129
  %vm138 = vweird.f32 %v131
  %vm139 = vmor %vm137, %vm138
  %v140 = vsel %vm139, %v131, %v136
  %v141 = vrsqrt.pop %v130
  %v142 = vmul.f32 %v141, %v130
  %v143 = vmul.f32 %v142, %v141
  %v144 = vmul.f32 0.5, %v143
  %v145 = vsub.f32 1.5, %v144
  %v146 = vmul.f32 %v141, %v145
  %vm147 = vweird.f32 %v130
  %vm148 = vweird.f32 %v141
  %vm149 = vmor %vm147, %vm148
  %v150 = vsel %vm149, %v141, %v146
  %v151 = vmul.f32 %v113, %v140
  %v152 = vmul.f32 %v114, %v140
  %v153 = vmul.f32 %v115, %v150
  %v154 = vmul.f32 %v116, %v150
  %v155 = vsub.f32 0.0, %v151
  %v156 = vsub.f32 0.0, %v152
  %v157 = vsub.f32 0.0, %v153
  %v158 = vsub.f32 0.0, %v154
  %v159 = vmul.f32 %v155, 1.442695
  %v160 = vpow.pop %v159
  %v161 = vmul.f32 %v156, 1.442695
  %v162 = vpow.pop %v161
  %v163 = vmul.f32 %v157, 1.442695
  %v164 = vpow.pop %v163
  %v165 = vmul.f32 %v158, 1.442695
  %v166 = vpow.pop %v165
  %v167 = vadd.f32 %v160, 1.0
  %v168 = vadd.f32 %v162, 1.0
  %v169 = vadd.f32 %v164, 1.0
  %v170 = vadd.f32 %v166, 1.0
  %v171 = vrcp.pop %v167
  %v172 = vrcp.pop %v168
  %v173 = vrcp.pop %v169
  %v174 = vrcp.pop %v170
  %v175 = vld [vmem:[%s2] sm:$0xff]
  %v176 = vld [vmem:[%s2 + $0x8] sm:$0xff]
  %v177 = vld [vmem:[%s2 + $0x10] sm:$0xff]
  %v178 = vld [vmem:[%s2 + $0x18] sm:$0xff]
  %v179 = vadd.f32 %v175, %v176
  %180 = vadd.xlane.f32.xlu0 %v179
  %v181 = vpop.xlane.xlu0 %180
  %v182 = vadd.f32 %v177, %v178
  %183 = vadd.xlane.f32.xlu0 %v182
  %v184 = vpop.xlane.xlu0 %183
  %v185 = vmul.f32 %v181, %v32
  %v186 = vmul.f32 %v184, %v32
  %v187 = vsub.f32 %v175, %v185
  %v188 = vsub.f32 %v176, %v185
  %v189 = vsub.f32 %v177, %v186
  %v190 = vsub.f32 %v178, %v186
  %v191 = vmul.f32 %v187, %v187
  %v192 = vmul.f32 %v188, %v188
  %v193 = vmul.f32 %v189, %v189
  %v194 = vmul.f32 %v190, %v190
  %v195 = vadd.f32 %v191, %v192
  %196 = vadd.xlane.f32.xlu0 %v195
  %v197 = vpop.xlane.xlu0 %196
  %v198 = vadd.f32 %v193, %v194
  %199 = vadd.xlane.f32.xlu0 %v198
  %v200 = vpop.xlane.xlu0 %199
  %v201 = vmul.f32 %v197, %v32
  %v202 = vmul.f32 %v200, %v32
  %v203 = vadd.f32 %v201, 1e-05
  %v204 = vadd.f32 %v202, 1e-05
  %v205 = vrsqrt.pop %v203
  %v206 = vmul.f32 %v205, %v203
  %v207 = vmul.f32 %v206, %v205
  %v208 = vmul.f32 0.5, %v207
  %v209 = vsub.f32 1.5, %v208
  %v210 = vmul.f32 %v205, %v209
  %vm211 = vweird.f32 %v203
  %vm212 = vweird.f32 %v205
  %vm213 = vmor %vm211, %vm212
  %v214 = vsel %vm213, %v205, %v210
  %v215 = vrsqrt.pop %v204
  %v216 = vmul.f32 %v215, %v204
  %v217 = vmul.f32 %v216, %v215
  %v218 = vmul.f32 0.5, %v217
  %v219 = vsub.f32 1.5, %v218
  %v220 = vmul.f32 %v215, %v219
  %vm221 = vweird.f32 %v204
  %vm222 = vweird.f32 %v215
  %vm223 = vmor %vm221, %vm222
  %v224 = vsel %vm223, %v215, %v220
  %v225 = vmul.f32 %v187, %v214
  %v226 = vmul.f32 %v188, %v214
  %v227 = vmul.f32 %v189, %v224
  %v228 = vmul.f32 %v190, %v224
  %v229 = vtanh.pop %v225
  %v230 = vtanh.pop %v226
  %v231 = vtanh.pop %v227
  %v232 = vtanh.pop %v228
  %v233 = vmul.f32 %v171, %v229
  %v234 = vmul.f32 %v172, %v230
  %v235 = vmul.f32 %v173, %v231
  %v236 = vmul.f32 %v174, %v232
  %237 = vst [vmem:[%s4] sm:$0xff] %v233
  %238 = vst [vmem:[%s4 + $0x8] sm:$0xff] %v234
  %239 = vst [vmem:[%s4 + $0x10] sm:$0xff] %v235
  %240 = vst [vmem:[%s4 + $0x18] sm:$0xff] %v236
  // Predicated region
  $region14: #{cell_forward.10} parent=0 // pred_check
    _
  $region15: #{cell_forward.10} parent=0 // pred_check_branch
    %242 = sbr.rel (0) target = $region17
  $region16: #{cell_forward.10} parent=0 // pred_region
    _
  $region17: #{cell_forward.10} parent=0 // pred_fallthru
    _
  // Predicated region
  $region18: #{cell_forward.10} parent=0 // pred_check
    _
  $region19: #{cell_forward.10} parent=0 // pred_check_branch
    %244 = sbr.rel (0) target = $region21
  $region20: #{cell_forward.10} parent=0 // pred_region
    _
  $region21: #{cell_forward.10} parent=0 // pred_fallthru
    _
  // Predicated region
  $region22: #{cell_forward.10} parent=0 // pred_check
    _
  $region23: #{cell_forward.10} parent=0 // pred_check_branch
    %246 = sbr.rel (0) target = $region25
  $region24: #{cell_forward.10} parent=0 // pred_region
    _
  $region25: #{cell_forward.10} parent=0 // pred_fallthru
    _
  // Predicated region
  $region26: #{cell_forward.10} parent=0 // pred_check
    _
  $region27: #{cell_forward.10} parent=0 // pred_check_branch
    %248 = sbr.rel (0) target = $region29
  $region28: #{cell_forward.10} parent=0 // pred_region
    _
  $region29: #{cell_forward.10} parent=0 // pred_fallthru
    _

// kernel: cell_forward.11
$region0: #{cell_forward.11}
  #allocation0 [shape = 'u32[]', space=smem, size = 0x4, offset = 0x4, fixed_abs, tag = 'smem constant byte address 0x4 - core index']
  #allocation1 [shape = 'u32[72,128]{1,0:T(1,128)}', space=vmem, size = 0x9000, scoped, tag = 'internal scratch']
  %s0 = inlined_call_operand.vmem [shape: f32[2,2048], index: 0, kind: input, shape index: {}]
  %s1 = inlined_call_operand.vmem [shape: f32[4,2,2048], index: 1, kind: input, shape index: {}]
  %s2 = inlined_call_operand.vmem [shape: f32[2,2048], index: 2, kind: input, shape index: {}]
  %s3 = inlined_call_operand.vmem [shape: f32[1,2048], index: 3, kind: input, shape index: {}]
  %s4 = inlined_call_operand.vmem [shape: f32[1,2048], index: 4, kind: input, shape index: {}]
  %s5 = inlined_call_operand.vmem [shape: f32[2,2048], index: 5, kind: output, shape index: {}]
  %s6 = sld [smem:[#allocation0]]
  $region30: #{cell_forward.11} parent=0
    _
  %s8 = ssub.s32 1, %s6
  %s9 = scalar_select 0, %s8, %s6
  // Predicated region
  $region2: #{cell_forward.11} parent=0 // pred_check
    _
  $region3: #{cell_forward.11} parent=0 // pred_check_branch
    %11 = sbr.rel (0) target = $region5
  $region4: #{cell_forward.11} parent=0 // pred_region
    _
  $region5: #{cell_forward.11} parent=0 // pred_fallthru
    _
  // Predicated region
  $region6: #{cell_forward.11} parent=0 // pred_check
    _
  $region7: #{cell_forward.11} parent=0 // pred_check_branch
    %13 = sbr.rel (0) target = $region9
  $region8: #{cell_forward.11} parent=0 // pred_region
    _
  $region9: #{cell_forward.11} parent=0 // pred_fallthru
    _
  // Predicated region
  $region10: #{cell_forward.11} parent=0 // pred_check
    _
  $region11: #{cell_forward.11} parent=0 // pred_check_branch
    %15 = sbr.rel (0) target = $region13
  $region12: #{cell_forward.11} parent=0 // pred_region
    _
  $region13: #{cell_forward.11} parent=0 // pred_fallthru
    _
  // Predicated region
  $region14: #{cell_forward.11} parent=0 // pred_check
    _
  $region15: #{cell_forward.11} parent=0 // pred_check_branch
    %17 = sbr.rel (0) target = $region17
  $region16: #{cell_forward.11} parent=0 // pred_region
    _
  $region17: #{cell_forward.11} parent=0 // pred_fallthru
    _
  // Predicated region
  $region18: #{cell_forward.11} parent=0 // pred_check
    _
  $region19: #{cell_forward.11} parent=0 // pred_check_branch
    %19 = sbr.rel (0) target = $region21
  $region20: #{cell_forward.11} parent=0 // pred_region
    _
  $region21: #{cell_forward.11} parent=0 // pred_fallthru
    _
  %v20 = vld [vmem:[%s0] sm:$0xff]
  %v21 = vld [vmem:[%s0 + $0x8] sm:$0xff]
  %v22 = vld [vmem:[%s0 + $0x10] sm:$0xff]
  %v23 = vld [vmem:[%s0 + $0x18] sm:$0xff]
  %v24 = vld [vmem:[%s1] sm:$0xff]
  %v25 = vld [vmem:[%s1 + $0x8] sm:$0xff]
  %v26 = vld [vmem:[%s1 + $0x10] sm:$0xff]
  %v27 = vld [vmem:[%s1 + $0x18] sm:$0xff]
  %v28 = vmul.f32 %v20, %v24
  %v29 = vmul.f32 %v21, %v25
  %v30 = vmul.f32 %v22, %v26
  %v31 = vmul.f32 %v23, %v27
  %36 = vst [vmem:[#allocation1] ss:$4 sm:$0xff] %v28
  %s37 = scalar_lea.vmem [#allocation1], 32
  %38 = vst [vmem:[%s37] ss:$4 sm:$0xff] %v29
  %v39 = vld.sshfl [vmem:[#allocation1] sm:$0xff pattern:$0x73625140]
  %v40 = vld.sshfl [vmem:[#allocation1 + $0x8] sm:$0xff pattern:$0x73625140]
  %v41 = vld.sshfl [vmem:[#allocation1 + $0x10] sm:$0xff pattern:$0x73625140]
  %v42 = vld.sshfl [vmem:[#allocation1 + $0x18] sm:$0xff pattern:$0x73625140]
  %v43 = vld.sshfl [vmem:[#allocation1 + $0x20] sm:$0xff pattern:$0x73625140]
  %v44 = vld.sshfl [vmem:[#allocation1 + $0x28] sm:$0xff pattern:$0x73625140]
  %v45 = vld.sshfl [vmem:[#allocation1 + $0x30] sm:$0xff pattern:$0x73625140]
  %v46 = vld.sshfl [vmem:[#allocation1 + $0x38] sm:$0xff pattern:$0x73625140]
  %47 = vst [vmem:[#allocation1] ss:$4 sm:$0xff] %v30
  %48 = vst [vmem:[%s37] ss:$4 sm:$0xff] %v31
  %v49 = vld.sshfl [vmem:[#allocation1] sm:$0xff pattern:$0x73625140]
  %v50 = vld.sshfl [vmem:[#allocation1 + $0x8] sm:$0xff pattern:$0x73625140]
  %v51 = vld.sshfl [vmem:[#allocation1 + $0x10] sm:$0xff pattern:$0x73625140]
  %v52 = vld.sshfl [vmem:[#allocation1 + $0x18] sm:$0xff pattern:$0x73625140]
  %v53 = vld.sshfl [vmem:[#allocation1 + $0x20] sm:$0xff pattern:$0x73625140]
  %v54 = vld.sshfl [vmem:[#allocation1 + $0x28] sm:$0xff pattern:$0x73625140]
  %v55 = vld.sshfl [vmem:[#allocation1 + $0x30] sm:$0xff pattern:$0x73625140]
  %v56 = vld.sshfl [vmem:[#allocation1 + $0x38] sm:$0xff pattern:$0x73625140]
  %vm73 = vcmask 1041408
  %v74 = vsel %vm73, %v39, 0.0
  %v75 = vsel %vm73, %v40, 0.0
  %v76 = vadd.f32 %v74, %v75
  %v77 = vsel %vm73, %v41, 0.0
  %v78 = vadd.f32 %v76, %v77
  %v79 = vsel %vm73, %v42, 0.0
  %v80 = vadd.f32 %v78, %v79
  %v81 = vsel %vm73, %v43, 0.0
  %v82 = vadd.f32 %v80, %v81
  %v83 = vsel %vm73, %v44, 0.0
  %v84 = vadd.f32 %v82, %v83
  %v85 = vsel %vm73, %v45, 0.0
  %v86 = vadd.f32 %v84, %v85
  %v87 = vsel %vm73, %v46, 0.0
  %v88 = vadd.f32 %v86, %v87
  %v89 = vsel %vm73, %v49, 0.0
  %v90 = vadd.f32 %v88, %v89
  %v91 = vsel %vm73, %v50, 0.0
  %v92 = vadd.f32 %v90, %v91
  %v93 = vsel %vm73, %v51, 0.0
  %v94 = vadd.f32 %v92, %v93
  %v95 = vsel %vm73, %v52, 0.0
  %v96 = vadd.f32 %v94, %v95
  %v97 = vsel %vm73, %v53, 0.0
  %v98 = vadd.f32 %v96, %v97
  %v99 = vsel %vm73, %v54, 0.0
  %v100 = vadd.f32 %v98, %v99
  %v101 = vsel %vm73, %v55, 0.0
  %v102 = vadd.f32 %v100, %v101
  %v103 = vsel %vm73, %v56, 0.0
  %v104 = vadd.f32 %v102, %v103
  %105 = vadd.xlane.f32.xlu0 %v104
  %v106 = vpop.xlane.xlu0 %105
  %v107 = vmul.f32 %v106, 0.0625
  %v108 = vsel %vm73, %v107, -inf
  %v109 = vrot.slane %v108, 4
  %v110 = vmax.f32 %v108, %v109
  %v111 = vrot.slane %v110, 2
  %v112 = vmax.f32 %v110, %v111
  %v113 = vrot.slane %v112, 1
  %v114 = vmax.f32 %v112, %v113
  %v115 = vsub.f32 %v107, %v114
  %v116 = vmul.f32 %v115, 1.442695
  %v117 = vpow.pop %v116
  %v118 = vsel %vm73, %v117, 0.0
  %v119 = vrot.slane %v118, 4
  %v120 = vadd.f32 %v118, %v119
  %v121 = vrot.slane %v120, 2
  %v122 = vadd.f32 %v120, %v121
  %v123 = vrot.slane %v122, 1
  %v124 = vadd.f32 %v122, %v123
  %v125 = vrcp.pop %v124
  %v126 = vmul.f32 %v117, %v125
  %131 = vst [vmem:[#allocation1] ss:$4 sm:$0xff] %v24
  %s132 = scalar_lea.vmem [#allocation1], 32
  %133 = vst [vmem:[%s132] ss:$4 sm:$0xff] %v25
  %v134 = vld.sshfl [vmem:[#allocation1] sm:$0xff pattern:$0x73625140]
  %v135 = vld.sshfl [vmem:[#allocation1 + $0x8] sm:$0xff pattern:$0x73625140]
  %v136 = vld.sshfl [vmem:[#allocation1 + $0x10] sm:$0xff pattern:$0x73625140]
  %v137 = vld.sshfl [vmem:[#allocation1 + $0x18] sm:$0xff pattern:$0x73625140]
  %v138 = vld.sshfl [vmem:[#allocation1 + $0x20] sm:$0xff pattern:$0x73625140]
  %v139 = vld.sshfl [vmem:[#allocation1 + $0x28] sm:$0xff pattern:$0x73625140]
  %v140 = vld.sshfl [vmem:[#allocation1 + $0x30] sm:$0xff pattern:$0x73625140]
  %v141 = vld.sshfl [vmem:[#allocation1 + $0x38] sm:$0xff pattern:$0x73625140]
  %142 = vst [vmem:[#allocation1] ss:$4 sm:$0xff] %v26
  %143 = vst [vmem:[%s132] ss:$4 sm:$0xff] %v27
  %v144 = vld.sshfl [vmem:[#allocation1] sm:$0xff pattern:$0x73625140]
  %v145 = vld.sshfl [vmem:[#allocation1 + $0x8] sm:$0xff pattern:$0x73625140]
  %v146 = vld.sshfl [vmem:[#allocation1 + $0x10] sm:$0xff pattern:$0x73625140]
  %v147 = vld.sshfl [vmem:[#allocation1 + $0x18] sm:$0xff pattern:$0x73625140]
  %v148 = vld.sshfl [vmem:[#allocation1 + $0x20] sm:$0xff pattern:$0x73625140]
  %v149 = vld.sshfl [vmem:[#allocation1 + $0x28] sm:$0xff pattern:$0x73625140]
  %v150 = vld.sshfl [vmem:[#allocation1 + $0x30] sm:$0xff pattern:$0x73625140]
  %v151 = vld.sshfl [vmem:[#allocation1 + $0x38] sm:$0xff pattern:$0x73625140]
  %v168 = vmul.f32 %v126, %v134
  %v169 = vmul.f32 %v126, %v135
  %v170 = vmul.f32 %v126, %v136
  %v171 = vmul.f32 %v126, %v137
  %v172 = vmul.f32 %v126, %v138
  %v173 = vmul.f32 %v126, %v139
  %v174 = vmul.f32 %v126, %v140
  %v175 = vmul.f32 %v126, %v141
  %v176 = vmul.f32 %v126, %v144
  %v177 = vmul.f32 %v126, %v145
  %v178 = vmul.f32 %v126, %v146
  %v179 = vmul.f32 %v126, %v147
  %v180 = vmul.f32 %v126, %v148
  %v181 = vmul.f32 %v126, %v149
  %v182 = vmul.f32 %v126, %v150
  %v183 = vmul.f32 %v126, %v151
  %v184 = vadd.f32 %v168, 0.0
  %v185 = vadd.f32 %v169, 0.0
  %v186 = vadd.f32 %v170, 0.0
  %v187 = vadd.f32 %v171, 0.0
  %v188 = vadd.f32 %v172, 0.0
  %v189 = vadd.f32 %v173, 0.0
  %v190 = vadd.f32 %v174, 0.0
  %v191 = vadd.f32 %v175, 0.0
  %v192 = vadd.f32 %v176, 0.0
  %v193 = vadd.f32 %v177, 0.0
  %v194 = vadd.f32 %v178, 0.0
  %v195 = vadd.f32 %v179, 0.0
  %v196 = vadd.f32 %v180, 0.0
  %v197 = vadd.f32 %v181, 0.0
  %v198 = vadd.f32 %v182, 0.0
  %v199 = vadd.f32 %v183, 0.0
  %s200 = scalar_lea.vmem %s1, 32
  %v201 = vld [vmem:[%s200] sm:$0xff]
  %v202 = vld [vmem:[%s200 + $0x8] sm:$0xff]
  %v203 = vld [vmem:[%s200 + $0x10] sm:$0xff]
  %v204 = vld [vmem:[%s200 + $0x18] sm:$0xff]
  %v205 = vmul.f32 %v20, %v201
  %v206 = vmul.f32 %v21, %v202
  %v207 = vmul.f32 %v22, %v203
  %v208 = vmul.f32 %v23, %v204
  %213 = vst [vmem:[#allocation1] ss:$4 sm:$0xff] %v205
  %s214 = scalar_lea.vmem [#allocation1], 32
  %215 = vst [vmem:[%s214] ss:$4 sm:$0xff] %v206
  %v216 = vld.sshfl [vmem:[#allocation1] sm:$0xff pattern:$0x73625140]
  %v217 = vld.sshfl [vmem:[#allocation1 + $0x8] sm:$0xff pattern:$0x73625140]
  %v218 = vld.sshfl [vmem:[#allocation1 + $0x10] sm:$0xff pattern:$0x73625140]
  %v219 = vld.sshfl [vmem:[#allocation1 + $0x18] sm:$0xff pattern:$0x73625140]
  %v220 = vld.sshfl [vmem:[#allocation1 + $0x20] sm:$0xff pattern:$0x73625140]
  %v221 = vld.sshfl [vmem:[#allocation1 + $0x28] sm:$0xff pattern:$0x73625140]
  %v222 = vld.sshfl [vmem:[#allocation1 + $0x30] sm:$0xff pattern:$0x73625140]
  %v223 = vld.sshfl [vmem:[#allocation1 + $0x38] sm:$0xff pattern:$0x73625140]
  %224 = vst [vmem:[#allocation1] ss:$4 sm:$0xff] %v207
  %225 = vst [vmem:[%s214] ss:$4 sm:$0xff] %v208
  %v226 = vld.sshfl [vmem:[#allocation1] sm:$0xff pattern:$0x73625140]
  %v227 = vld.sshfl [vmem:[#allocation1 + $0x8] sm:$0xff pattern:$0x73625140]
  %v228 = vld.sshfl [vmem:[#allocation1 + $0x10] sm:$0xff pattern:$0x73625140]
  %v229 = vld.sshfl [vmem:[#allocation1 + $0x18] sm:$0xff pattern:$0x73625140]
  %v230 = vld.sshfl [vmem:[#allocation1 + $0x20] sm:$0xff pattern:$0x73625140]
  %v231 = vld.sshfl [vmem:[#allocation1 + $0x28] sm:$0xff pattern:$0x73625140]
  %v232 = vld.sshfl [vmem:[#allocation1 + $0x30] sm:$0xff pattern:$0x73625140]
  %v233 = vld.sshfl [vmem:[#allocation1 + $0x38] sm:$0xff pattern:$0x73625140]
  %v250 = vsel %vm73, %v216, 0.0
  %v251 = vsel %vm73, %v217, 0.0
  %v252 = vadd.f32 %v250, %v251
  %v253 = vsel %vm73, %v218, 0.0
  %v254 = vadd.f32 %v252, %v253
  %v255 = vsel %vm73, %v219, 0.0
  %v256 = vadd.f32 %v254, %v255
  %v257 = vsel %vm73, %v220, 0.0
  %v258 = vadd.f32 %v256, %v257
  %v259 = vsel %vm73, %v221, 0.0
  %v260 = vadd.f32 %v258, %v259
  %v261 = vsel %vm73, %v222, 0.0
  %v262 = vadd.f32 %v260, %v261
  %v263 = vsel %vm73, %v223, 0.0
  %v264 = vadd.f32 %v262, %v263
  %v265 = vsel %vm73, %v226, 0.0
  %v266 = vadd.f32 %v264, %v265
  %v267 = vsel %vm73, %v227, 0.0
  %v268 = vadd.f32 %v266, %v267
  %v269 = vsel %vm73, %v228, 0.0
  %v270 = vadd.f32 %v268, %v269
  %v271 = vsel %vm73, %v229, 0.0
  %v272 = vadd.f32 %v270, %v271
  %v273 = vsel %vm73, %v230, 0.0
  %v274 = vadd.f32 %v272, %v273
  %v275 = vsel %vm73, %v231, 0.0
  %v276 = vadd.f32 %v274, %v275
  %v277 = vsel %vm73, %v232, 0.0
  %v278 = vadd.f32 %v276, %v277
  %v279 = vsel %vm73, %v233, 0.0
  %v280 = vadd.f32 %v278, %v279
  %281 = vadd.xlane.f32.xlu0 %v280
  %v282 = vpop.xlane.xlu0 %281
  %v283 = vmul.f32 %v282, 0.0625
  %v284 = vsel %vm73, %v283, -inf
  %v285 = vrot.slane %v284, 4
  %v286 = vmax.f32 %v284, %v285
  %v287 = vrot.slane %v286, 2
  %v288 = vmax.f32 %v286, %v287
  %v289 = vrot.slane %v288, 1
  %v290 = vmax.f32 %v288, %v289
  %v291 = vsub.f32 %v283, %v290
  %v292 = vmul.f32 %v291, 1.442695
  %v293 = vpow.pop %v292
  %v294 = vsel %vm73, %v293, 0.0
  %v295 = vrot.slane %v294, 4
  %v296 = vadd.f32 %v294, %v295
  %v297 = vrot.slane %v296, 2
  %v298 = vadd.f32 %v296, %v297
  %v299 = vrot.slane %v298, 1
  %v300 = vadd.f32 %v298, %v299
  %v301 = vrcp.pop %v300
  %v302 = vmul.f32 %v293, %v301
  %307 = vst [vmem:[#allocation1] ss:$4 sm:$0xff] %v201
  %s308 = scalar_lea.vmem [#allocation1], 32
  %309 = vst [vmem:[%s308] ss:$4 sm:$0xff] %v202
  %v310 = vld.sshfl [vmem:[#allocation1] sm:$0xff pattern:$0x73625140]
  %v311 = vld.sshfl [vmem:[#allocation1 + $0x8] sm:$0xff pattern:$0x73625140]
  %v312 = vld.sshfl [vmem:[#allocation1 + $0x10] sm:$0xff pattern:$0x73625140]
  %v313 = vld.sshfl [vmem:[#allocation1 + $0x18] sm:$0xff pattern:$0x73625140]
  %v314 = vld.sshfl [vmem:[#allocation1 + $0x20] sm:$0xff pattern:$0x73625140]
  %v315 = vld.sshfl [vmem:[#allocation1 + $0x28] sm:$0xff pattern:$0x73625140]
  %v316 = vld.sshfl [vmem:[#allocation1 + $0x30] sm:$0xff pattern:$0x73625140]
  %v317 = vld.sshfl [vmem:[#allocation1 + $0x38] sm:$0xff pattern:$0x73625140]
  %318 = vst [vmem:[#allocation1] ss:$4 sm:$0xff] %v203
  %319 = vst [vmem:[%s308] ss:$4 sm:$0xff] %v204
  %v320 = vld.sshfl [vmem:[#allocation1] sm:$0xff pattern:$0x73625140]
  %v321 = vld.sshfl [vmem:[#allocation1 + $0x8] sm:$0xff pattern:$0x73625140]
  %v322 = vld.sshfl [vmem:[#allocation1 + $0x10] sm:$0xff pattern:$0x73625140]
  %v323 = vld.sshfl [vmem:[#allocation1 + $0x18] sm:$0xff pattern:$0x73625140]
  %v324 = vld.sshfl [vmem:[#allocation1 + $0x20] sm:$0xff pattern:$0x73625140]
  %v325 = vld.sshfl [vmem:[#allocation1 + $0x28] sm:$0xff pattern:$0x73625140]
  %v326 = vld.sshfl [vmem:[#allocation1 + $0x30] sm:$0xff pattern:$0x73625140]
  %v327 = vld.sshfl [vmem:[#allocation1 + $0x38] sm:$0xff pattern:$0x73625140]
  %v344 = vmul.f32 %v302, %v310
  %v345 = vmul.f32 %v302, %v311
  %v346 = vmul.f32 %v302, %v312
  %v347 = vmul.f32 %v302, %v313
  %v348 = vmul.f32 %v302, %v314
  %v349 = vmul.f32 %v302, %v315
  %v350 = vmul.f32 %v302, %v316
  %v351 = vmul.f32 %v302, %v317
  %v352 = vmul.f32 %v302, %v320
  %v353 = vmul.f32 %v302, %v321
  %v354 = vmul.f32 %v302, %v322
  %v355 = vmul.f32 %v302, %v323
  %v356 = vmul.f32 %v302, %v324
  %v357 = vmul.f32 %v302, %v325
  %v358 = vmul.f32 %v302, %v326
  %v359 = vmul.f32 %v302, %v327
  %v360 = vadd.f32 %v184, %v344
  %v361 = vadd.f32 %v185, %v345
  %v362 = vadd.f32 %v186, %v346
  %v363 = vadd.f32 %v187, %v347
  %v364 = vadd.f32 %v188, %v348
  %v365 = vadd.f32 %v189, %v349
  %v366 = vadd.f32 %v190, %v350
  %v367 = vadd.f32 %v191, %v351
  %v368 = vadd.f32 %v192, %v352
  %v369 = vadd.f32 %v193, %v353
  %v370 = vadd.f32 %v194, %v354
  %v371 = vadd.f32 %v195, %v355
  %v372 = vadd.f32 %v196, %v356
  %v373 = vadd.f32 %v197, %v357
  %v374 = vadd.f32 %v198, %v358
  %v375 = vadd.f32 %v199, %v359
  %s376 = scalar_lea.vmem %s1, 64
  %v377 = vld [vmem:[%s376] sm:$0xff]
  %v378 = vld [vmem:[%s376 + $0x8] sm:$0xff]
  %v379 = vld [vmem:[%s376 + $0x10] sm:$0xff]
  %v380 = vld [vmem:[%s376 + $0x18] sm:$0xff]
  %v381 = vmul.f32 %v20, %v377
  %v382 = vmul.f32 %v21, %v378
  %v383 = vmul.f32 %v22, %v379
  %v384 = vmul.f32 %v23, %v380
  %389 = vst [vmem:[#allocation1] ss:$4 sm:$0xff] %v381
  %s390 = scalar_lea.vmem [#allocation1], 32
  %391 = vst [vmem:[%s390] ss:$4 sm:$0xff] %v382
  %v392 = vld.sshfl [vmem:[#allocation1] sm:$0xff pattern:$0x73625140]
  %v393 = vld.sshfl [vmem:[#allocation1 + $0x8] sm:$0xff pattern:$0x73625140]
  %v394 = vld.sshfl [vmem:[#allocation1 + $0x10] sm:$0xff pattern:$0x73625140]
  %v395 = vld.sshfl [vmem:[#allocation1 + $0x18] sm:$0xff pattern:$0x73625140]
  %v396 = vld.sshfl [vmem:[#allocation1 + $0x20] sm:$0xff pattern:$0x73625140]
  %v397 = vld.sshfl [vmem:[#allocation1 + $0x28] sm:$0xff pattern:$0x73625140]
  %v398 = vld.sshfl [vmem:[#allocation1 + $0x30] sm:$0xff pattern:$0x73625140]
  %v399 = vld.sshfl [vmem:[#allocation1 + $0x38] sm:$0xff pattern:$0x73625140]
  %400 = vst [vmem:[#allocation1] ss:$4 sm:$0xff] %v383
  %401 = vst [vmem:[%s390] ss:$4 sm:$0xff] %v384
  %v402 = vld.sshfl [vmem:[#allocation1] sm:$0xff pattern:$0x73625140]
  %v403 = vld.sshfl [vmem:[#allocation1 + $0x8] sm:$0xff pattern:$0x73625140]
  %v404 = vld.sshfl [vmem:[#allocation1 + $0x10] sm:$0xff pattern:$0x73625140]
  %v405 = vld.sshfl [vmem:[#allocation1 + $0x18] sm:$0xff pattern:$0x73625140]
  %v406 = vld.sshfl [vmem:[#allocation1 + $0x20] sm:$0xff pattern:$0x73625140]
  %v407 = vld.sshfl [vmem:[#allocation1 + $0x28] sm:$0xff pattern:$0x73625140]
  %v408 = vld.sshfl [vmem:[#allocation1 + $0x30] sm:$0xff pattern:$0x73625140]
  %v409 = vld.sshfl [vmem:[#allocation1 + $0x38] sm:$0xff pattern:$0x73625140]
  %v426 = vsel %vm73, %v392, 0.0
  %v427 = vsel %vm73, %v393, 0.0
  %v428 = vadd.f32 %v426, %v427
  %v429 = vsel %vm73, %v394, 0.0
  %v430 = vadd.f32 %v428, %v429
  %v431 = vsel %vm73, %v395, 0.0
  %v432 = vadd.f32 %v430, %v431
  %v433 = vsel %vm73, %v396, 0.0
  %v434 = vadd.f32 %v432, %v433
  %v435 = vsel %vm73, %v397, 0.0
  %v436 = vadd.f32 %v434, %v435
  %v437 = vsel %vm73, %v398, 0.0
  %v438 = vadd.f32 %v436, %v437
  %v439 = vsel %vm73, %v399, 0.0
  %v440 = vadd.f32 %v438, %v439
  %v441 = vsel %vm73, %v402, 0.0
  %v442 = vadd.f32 %v440, %v441
  %v443 = vsel %vm73, %v403, 0.0
  %v444 = vadd.f32 %v442, %v443
  %v445 = vsel %vm73, %v404, 0.0
  %v446 = vadd.f32 %v444, %v445
  %v447 = vsel %vm73, %v405, 0.0
  %v448 = vadd.f32 %v446, %v447
  %v449 = vsel %vm73, %v406, 0.0
  %v450 = vadd.f32 %v448, %v449
  %v451 = vsel %vm73, %v407, 0.0
  %v452 = vadd.f32 %v450, %v451
  %v453 = vsel %vm73, %v408, 0.0
  %v454 = vadd.f32 %v452, %v453
  %v455 = vsel %vm73, %v409, 0.0
  %v456 = vadd.f32 %v454, %v455
  %457 = vadd.xlane.f32.xlu0 %v456
  %v458 = vpop.xlane.xlu0 %457
  %v459 = vmul.f32 %v458, 0.0625
  %v460 = vsel %vm73, %v459, -inf
  %v461 = vrot.slane %v460, 4
  %v462 = vmax.f32 %v460, %v461
  %v463 = vrot.slane %v462, 2
  %v464 = vmax.f32 %v462, %v463
  %v465 = vrot.slane %v464, 1
  %v466 = vmax.f32 %v464, %v465
  %v467 = vsub.f32 %v459, %v466
  %v468 = vmul.f32 %v467, 1.442695
  %v469 = vpow.pop %v468
  %v470 = vsel %vm73, %v469, 0.0
  %v471 = vrot.slane %v470, 4
  %v472 = vadd.f32 %v470, %v471
  %v473 = vrot.slane %v472, 2
  %v474 = vadd.f32 %v472, %v473
  %v475 = vrot.slane %v474, 1
  %v476 = vadd.f32 %v474, %v475
  %v477 = vrcp.pop %v476
  %v478 = vmul.f32 %v469, %v477
  %483 = vst [vmem:[#allocation1] ss:$4 sm:$0xff] %v377
  %s484 = scalar_lea.vmem [#allocation1], 32
  %485 = vst [vmem:[%s484] ss:$4 sm:$0xff] %v378
  %v486 = vld.sshfl [vmem:[#allocation1] sm:$0xff pattern:$0x73625140]
  %v487 = vld.sshfl [vmem:[#allocation1 + $0x8] sm:$0xff pattern:$0x73625140]
  %v488 = vld.sshfl [vmem:[#allocation1 + $0x10] sm:$0xff pattern:$0x73625140]
  %v489 = vld.sshfl [vmem:[#allocation1 + $0x18] sm:$0xff pattern:$0x73625140]
  %v490 = vld.sshfl [vmem:[#allocation1 + $0x20] sm:$0xff pattern:$0x73625140]
  %v491 = vld.sshfl [vmem:[#allocation1 + $0x28] sm:$0xff pattern:$0x73625140]
  %v492 = vld.sshfl [vmem:[#allocation1 + $0x30] sm:$0xff pattern:$0x73625140]
  %v493 = vld.sshfl [vmem:[#allocation1 + $0x38] sm:$0xff pattern:$0x73625140]
  %494 = vst [vmem:[#allocation1] ss:$4 sm:$0xff] %v379
  %495 = vst [vmem:[%s484] ss:$4 sm:$0xff] %v380
  %v496 = vld.sshfl [vmem:[#allocation1] sm:$0xff pattern:$0x73625140]
  %v497 = vld.sshfl [vmem:[#allocation1 + $0x8] sm:$0xff pattern:$0x73625140]
  %v498 = vld.sshfl [vmem:[#allocation1 + $0x10] sm:$0xff pattern:$0x73625140]
  %v499 = vld.sshfl [vmem:[#allocation1 + $0x18] sm:$0xff pattern:$0x73625140]
  %v500 = vld.sshfl [vmem:[#allocation1 + $0x20] sm:$0xff pattern:$0x73625140]
  %v501 = vld.sshfl [vmem:[#allocation1 + $0x28] sm:$0xff pattern:$0x73625140]
  %v502 = vld.sshfl [vmem:[#allocation1 + $0x30] sm:$0xff pattern:$0x73625140]
  %v503 = vld.sshfl [vmem:[#allocation1 + $0x38] sm:$0xff pattern:$0x73625140]
  %v520 = vmul.f32 %v478, %v486
  %v521 = vmul.f32 %v478, %v487
  %v522 = vmul.f32 %v478, %v488
  %v523 = vmul.f32 %v478, %v489
  %v524 = vmul.f32 %v478, %v490
  %v525 = vmul.f32 %v478, %v491
  %v526 = vmul.f32 %v478, %v492
  %v527 = vmul.f32 %v478, %v493
  %v528 = vmul.f32 %v478, %v496
  %v529 = vmul.f32 %v478, %v497
  %v530 = vmul.f32 %v478, %v498
  %v531 = vmul.f32 %v478, %v499
  %v532 = vmul.f32 %v478, %v500
  %v533 = vmul.f32 %v478, %v501
  %v534 = vmul.f32 %v478, %v502
  %v535 = vmul.f32 %v478, %v503
  %v536 = vadd.f32 %v360, %v520
  %v537 = vadd.f32 %v361, %v521
  %v538 = vadd.f32 %v362, %v522
  %v539 = vadd.f32 %v363, %v523
  %v540 = vadd.f32 %v364, %v524
  %v541 = vadd.f32 %v365, %v525
  %v542 = vadd.f32 %v366, %v526
  %v543 = vadd.f32 %v367, %v527
  %v544 = vadd.f32 %v368, %v528
  %v545 = vadd.f32 %v369, %v529
  %v546 = vadd.f32 %v370, %v530
  %v547 = vadd.f32 %v371, %v531
  %v548 = vadd.f32 %v372, %v532
  %v549 = vadd.f32 %v373, %v533
  %v550 = vadd.f32 %v374, %v534
  %v551 = vadd.f32 %v375, %v535
  %s552 = scalar_lea.vmem %s1, 96
  %v553 = vld [vmem:[%s552] sm:$0xff]
  %v554 = vld [vmem:[%s552 + $0x8] sm:$0xff]
  %v555 = vld [vmem:[%s552 + $0x10] sm:$0xff]
  %v556 = vld [vmem:[%s552 + $0x18] sm:$0xff]
  %v557 = vmul.f32 %v20, %v553
  %v558 = vmul.f32 %v21, %v554
  %v559 = vmul.f32 %v22, %v555
  %v560 = vmul.f32 %v23, %v556
  %565 = vst [vmem:[#allocation1] ss:$4 sm:$0xff] %v557
  %s566 = scalar_lea.vmem [#allocation1], 32
  %567 = vst [vmem:[%s566] ss:$4 sm:$0xff] %v558
  %v568 = vld.sshfl [vmem:[#allocation1] sm:$0xff pattern:$0x73625140]
  %v569 = vld.sshfl [vmem:[#allocation1 + $0x8] sm:$0xff pattern:$0x73625140]
  %v570 = vld.sshfl [vmem:[#allocation1 + $0x10] sm:$0xff pattern:$0x73625140]
  %v571 = vld.sshfl [vmem:[#allocation1 + $0x18] sm:$0xff pattern:$0x73625140]
  %v572 = vld.sshfl [vmem:[#allocation1 + $0x20] sm:$0xff pattern:$0x73625140]
  %v573 = vld.sshfl [vmem:[#allocation1 + $0x28] sm:$0xff pattern:$0x73625140]
  %v574 = vld.sshfl [vmem:[#allocation1 + $0x30] sm:$0xff pattern:$0x73625140]
  %v575 = vld.sshfl [vmem:[#allocation1 + $0x38] sm:$0xff pattern:$0x73625140]
  %576 = vst [vmem:[#allocation1] ss:$4 sm:$0xff] %v559
  %577 = vst [vmem:[%s566] ss:$4 sm:$0xff] %v560
  %v578 = vld.sshfl [vmem:[#allocation1] sm:$0xff pattern:$0x73625140]
  %v579 = vld.sshfl [vmem:[#allocation1 + $0x8] sm:$0xff pattern:$0x73625140]
  %v580 = vld.sshfl [vmem:[#allocation1 + $0x10] sm:$0xff pattern:$0x73625140]
  %v581 = vld.sshfl [vmem:[#allocation1 + $0x18] sm:$0xff pattern:$0x73625140]
  %v582 = vld.sshfl [vmem:[#allocation1 + $0x20] sm:$0xff pattern:$0x73625140]
  %v583 = vld.sshfl [vmem:[#allocation1 + $0x28] sm:$0xff pattern:$0x73625140]
  %v584 = vld.sshfl [vmem:[#allocation1 + $0x30] sm:$0xff pattern:$0x73625140]
  %v585 = vld.sshfl [vmem:[#allocation1 + $0x38] sm:$0xff pattern:$0x73625140]
  %v602 = vsel %vm73, %v568, 0.0
  %v603 = vsel %vm73, %v569, 0.0
  %v604 = vadd.f32 %v602, %v603
  %v605 = vsel %vm73, %v570, 0.0
  %v606 = vadd.f32 %v604, %v605
  %v607 = vsel %vm73, %v571, 0.0
  %v608 = vadd.f32 %v606, %v607
  %v609 = vsel %vm73, %v572, 0.0
  %v610 = vadd.f32 %v608, %v609
  %v611 = vsel %vm73, %v573, 0.0
  %v612 = vadd.f32 %v610, %v611
  %v613 = vsel %vm73, %v574, 0.0
  %v614 = vadd.f32 %v612, %v613
  %v615 = vsel %vm73, %v575, 0.0
  %v616 = vadd.f32 %v614, %v615
  %v617 = vsel %vm73, %v578, 0.0
  %v618 = vadd.f32 %v616, %v617
  %v619 = vsel %vm73, %v579, 0.0
  %v620 = vadd.f32 %v618, %v619
  %v621 = vsel %vm73, %v580, 0.0
  %v622 = vadd.f32 %v620, %v621
  %v623 = vsel %vm73, %v581, 0.0
  %v624 = vadd.f32 %v622, %v623
  %v625 = vsel %vm73, %v582, 0.0
  %v626 = vadd.f32 %v624, %v625
  %v627 = vsel %vm73, %v583, 0.0
  %v628 = vadd.f32 %v626, %v627
  %v629 = vsel %vm73, %v584, 0.0
  %v630 = vadd.f32 %v628, %v629
  %v631 = vsel %vm73, %v585, 0.0
  %v632 = vadd.f32 %v630, %v631
  %633 = vadd.xlane.f32.xlu0 %v632
  %v634 = vpop.xlane.xlu0 %633
  %v635 = vmul.f32 %v634, 0.0625
  %v636 = vsel %vm73, %v635, -inf
  %v637 = vrot.slane %v636, 4
  %v638 = vmax.f32 %v636, %v637
  %v639 = vrot.slane %v638, 2
  %v640 = vmax.f32 %v638, %v639
  %v641 = vrot.slane %v640, 1
  %v642 = vmax.f32 %v640, %v641
  %v643 = vsub.f32 %v635, %v642
  %v644 = vmul.f32 %v643, 1.442695
  %v645 = vpow.pop %v644
  %v646 = vsel %vm73, %v645, 0.0
  %v647 = vrot.slane %v646, 4
  %v648 = vadd.f32 %v646, %v647
  %v649 = vrot.slane %v648, 2
  %v650 = vadd.f32 %v648, %v649
  %v651 = vrot.slane %v650, 1
  %v652 = vadd.f32 %v650, %v651
  %v653 = vrcp.pop %v652
  %v654 = vmul.f32 %v645, %v653
  %659 = vst [vmem:[#allocation1] ss:$4 sm:$0xff] %v553
  %s660 = scalar_lea.vmem [#allocation1], 32
  %661 = vst [vmem:[%s660] ss:$4 sm:$0xff] %v554
  %v662 = vld.sshfl [vmem:[#allocation1] sm:$0xff pattern:$0x73625140]
  %v663 = vld.sshfl [vmem:[#allocation1 + $0x8] sm:$0xff pattern:$0x73625140]
  %v664 = vld.sshfl [vmem:[#allocation1 + $0x10] sm:$0xff pattern:$0x73625140]
  %v665 = vld.sshfl [vmem:[#allocation1 + $0x18] sm:$0xff pattern:$0x73625140]
  %v666 = vld.sshfl [vmem:[#allocation1 + $0x20] sm:$0xff pattern:$0x73625140]
  %v667 = vld.sshfl [vmem:[#allocation1 + $0x28] sm:$0xff pattern:$0x73625140]
  %v668 = vld.sshfl [vmem:[#allocation1 + $0x30] sm:$0xff pattern:$0x73625140]
  %v669 = vld.sshfl [vmem:[#allocation1 + $0x38] sm:$0xff pattern:$0x73625140]
  %670 = vst [vmem:[#allocation1] ss:$4 sm:$0xff] %v555
  %671 = vst [vmem:[%s660] ss:$4 sm:$0xff] %v556
  %v672 = vld.sshfl [vmem:[#allocation1] sm:$0xff pattern:$0x73625140]
  %v673 = vld.sshfl [vmem:[#allocation1 + $0x8] sm:$0xff pattern:$0x73625140]
  %v674 = vld.sshfl [vmem:[#allocation1 + $0x10] sm:$0xff pattern:$0x73625140]
  %v675 = vld.sshfl [vmem:[#allocation1 + $0x18] sm:$0xff pattern:$0x73625140]
  %v676 = vld.sshfl [vmem:[#allocation1 + $0x20] sm:$0xff pattern:$0x73625140]
  %v677 = vld.sshfl [vmem:[#allocation1 + $0x28] sm:$0xff pattern:$0x73625140]
  %v678 = vld.sshfl [vmem:[#allocation1 + $0x30] sm:$0xff pattern:$0x73625140]
  %v679 = vld.sshfl [vmem:[#allocation1 + $0x38] sm:$0xff pattern:$0x73625140]
  %v696 = vmul.f32 %v654, %v662
  %v697 = vmul.f32 %v654, %v663
  %v698 = vmul.f32 %v654, %v664
  %v699 = vmul.f32 %v654, %v665
  %v700 = vmul.f32 %v654, %v666
  %v701 = vmul.f32 %v654, %v667
  %v702 = vmul.f32 %v654, %v668
  %v703 = vmul.f32 %v654, %v669
  %v704 = vmul.f32 %v654, %v672
  %v705 = vmul.f32 %v654, %v673
  %v706 = vmul.f32 %v654, %v674
  %v707 = vmul.f32 %v654, %v675
  %v708 = vmul.f32 %v654, %v676
  %v709 = vmul.f32 %v654, %v677
  %v710 = vmul.f32 %v654, %v678
  %v711 = vmul.f32 %v654, %v679
  %v712 = vadd.f32 %v536, %v696
  %v713 = vadd.f32 %v537, %v697
  %v714 = vadd.f32 %v538, %v698
  %v715 = vadd.f32 %v539, %v699
  %v716 = vadd.f32 %v540, %v700
  %v717 = vadd.f32 %v541, %v701
  %v718 = vadd.f32 %v542, %v702
  %v719 = vadd.f32 %v543, %v703
  %v720 = vadd.f32 %v544, %v704
  %v721 = vadd.f32 %v545, %v705
  %v722 = vadd.f32 %v546, %v706
  %v723 = vadd.f32 %v547, %v707
  %v724 = vadd.f32 %v548, %v708
  %v725 = vadd.f32 %v549, %v709
  %v726 = vadd.f32 %v550, %v710
  %v727 = vadd.f32 %v551, %v711
  %v744 = vrot.slane %v713, 6
  %v745 = vrot.slane %v714, 4
  %v746 = vrot.slane %v715, 2
  %v747 = vrot.slane %v717, 6
  %v748 = vrot.slane %v718, 4
  %v749 = vrot.slane %v719, 2
  %v750 = vrot.slane %v721, 6
  %v751 = vrot.slane %v722, 4
  %v752 = vrot.slane %v723, 2
  %v753 = vrot.slane %v725, 6
  %v754 = vrot.slane %v726, 4
  %v755 = vrot.slane %v727, 2
  %v756 = vsel %vm73, %v712, %v744
  %vm757 = vcmask 1045508
  %v758 = vsel %vm757, %v745, %v746
  %vm759 = vcmask 1043456
  %v760 = vsel %vm759, %v756, %v758
  %v761 = vsel %vm73, %v716, %v747
  %v762 = vsel %vm757, %v748, %v749
  %v763 = vsel %vm759, %v761, %v762
  %v764 = vsel %vm73, %v720, %v750
  %v765 = vsel %vm757, %v751, %v752
  %v766 = vsel %vm759, %v764, %v765
  %v767 = vsel %vm73, %v724, %v753
  %v768 = vsel %vm757, %v754, %v755
  %v769 = vsel %vm759, %v767, %v768
  %v774 = vadd.f32 %v553, %v760
  %v775 = vadd.f32 %v554, %v763
  %v776 = vadd.f32 %v555, %v766
  %v777 = vadd.f32 %v556, %v769
  %782 = vst [vmem:[#allocation1] ss:$4 sm:$0xff] %v774
  %s783 = scalar_lea.vmem [#allocation1], 32
  %784 = vst [vmem:[%s783] ss:$4 sm:$0xff] %v775
  %v785 = vld.sshfl [vmem:[#allocation1] sm:$0xff pattern:$0x73625140]
  %v786 = vld.sshfl [vmem:[#allocation1 + $0x8] sm:$0xff pattern:$0x73625140]
  %v787 = vld.sshfl [vmem:[#allocation1 + $0x10] sm:$0xff pattern:$0x73625140]
  %v788 = vld.sshfl [vmem:[#allocation1 + $0x18] sm:$0xff pattern:$0x73625140]
  %v789 = vld.sshfl [vmem:[#allocation1 + $0x20] sm:$0xff pattern:$0x73625140]
  %v790 = vld.sshfl [vmem:[#allocation1 + $0x28] sm:$0xff pattern:$0x73625140]
  %v791 = vld.sshfl [vmem:[#allocation1 + $0x30] sm:$0xff pattern:$0x73625140]
  %v792 = vld.sshfl [vmem:[#allocation1 + $0x38] sm:$0xff pattern:$0x73625140]
  %793 = vst [vmem:[#allocation1] ss:$4 sm:$0xff] %v776
  %794 = vst [vmem:[%s783] ss:$4 sm:$0xff] %v777
  %v795 = vld.sshfl [vmem:[#allocation1] sm:$0xff pattern:$0x73625140]
  %v796 = vld.sshfl [vmem:[#allocation1 + $0x8] sm:$0xff pattern:$0x73625140]
  %v797 = vld.sshfl [vmem:[#allocation1 + $0x10] sm:$0xff pattern:$0x73625140]
  %v798 = vld.sshfl [vmem:[#allocation1 + $0x18] sm:$0xff pattern:$0x73625140]
  %v799 = vld.sshfl [vmem:[#allocation1 + $0x20] sm:$0xff pattern:$0x73625140]
  %v800 = vld.sshfl [vmem:[#allocation1 + $0x28] sm:$0xff pattern:$0x73625140]
  %v801 = vld.sshfl [vmem:[#allocation1 + $0x30] sm:$0xff pattern:$0x73625140]
  %v802 = vld.sshfl [vmem:[#allocation1 + $0x38] sm:$0xff pattern:$0x73625140]
  %v819 = vsel %vm73, %v785, 0.0
  %v820 = vsel %vm73, %v786, 0.0
  %v821 = vadd.f32 %v819, %v820
  %v822 = vsel %vm73, %v787, 0.0
  %v823 = vadd.f32 %v821, %v822
  %v824 = vsel %vm73, %v788, 0.0
  %v825 = vadd.f32 %v823, %v824
  %v826 = vsel %vm73, %v789, 0.0
  %v827 = vadd.f32 %v825, %v826
  %v828 = vsel %vm73, %v790, 0.0
  %v829 = vadd.f32 %v827, %v828
  %v830 = vsel %vm73, %v791, 0.0
  %v831 = vadd.f32 %v829, %v830
  %v832 = vsel %vm73, %v792, 0.0
  %v833 = vadd.f32 %v831, %v832
  %v834 = vsel %vm73, %v795, 0.0
  %v835 = vadd.f32 %v833, %v834
  %v836 = vsel %vm73, %v796, 0.0
  %v837 = vadd.f32 %v835, %v836
  %v838 = vsel %vm73, %v797, 0.0
  %v839 = vadd.f32 %v837, %v838
  %v840 = vsel %vm73, %v798, 0.0
  %v841 = vadd.f32 %v839, %v840
  %v842 = vsel %vm73, %v799, 0.0
  %v843 = vadd.f32 %v841, %v842
  %v844 = vsel %vm73, %v800, 0.0
  %v845 = vadd.f32 %v843, %v844
  %v846 = vsel %vm73, %v801, 0.0
  %v847 = vadd.f32 %v845, %v846
  %v848 = vsel %vm73, %v802, 0.0
  %v849 = vadd.f32 %v847, %v848
  %850 = vadd.xlane.f32.xlu0 %v849
  %v851 = vpop.xlane.xlu0 %850
  %v852 = vrcp.pop 2048.0
  %v853 = vmul.f32 2048.0, %v852
  %v854 = vsub.f32 1.0, %v853
  %v855 = vmul.f32 %v852, %v854
  %v856 = vadd.f32 %v852, %v855
  %vm857 = vweird.f32 %v852
  %v858 = vsel %vm857, %v852, %v856
  %v859 = vmul.f32 %v851, %v858
  %v862 = vunpack.c.l.s4 269488144
  %v863 = vunpack.c.0.s8 %v862
  %v864 = vperm.slane %v859, %v863
  %v866 = vsub.f32 %v774, %v864
  %v867 = vsub.f32 %v775, %v864
  %v868 = vsub.f32 %v776, %v864
  %v869 = vsub.f32 %v777, %v864
  %v870 = vmul.f32 %v866, %v866
  %v871 = vmul.f32 %v867, %v867
  %v872 = vmul.f32 %v868, %v868
  %v873 = vmul.f32 %v869, %v869
  %878 = vst [vmem:[#allocation1] ss:$4 sm:$0xff] %v870
  %s879 = scalar_lea.vmem [#allocation1], 32
  %880 = vst [vmem:[%s879] ss:$4 sm:$0xff] %v871
  %v881 = vld.sshfl [vmem:[#allocation1] sm:$0xff pattern:$0x73625140]
  %v882 = vld.sshfl [vmem:[#allocation1 + $0x8] sm:$0xff pattern:$0x73625140]
  %v883 = vld.sshfl [vmem:[#allocation1 + $0x10] sm:$0xff pattern:$0x73625140]
  %v884 = vld.sshfl [vmem:[#allocation1 + $0x18] sm:$0xff pattern:$0x73625140]
  %v885 = vld.sshfl [vmem:[#allocation1 + $0x20] sm:$0xff pattern:$0x73625140]
  %v886 = vld.sshfl [vmem:[#allocation1 + $0x28] sm:$0xff pattern:$0x73625140]
  %v887 = vld.sshfl [vmem:[#allocation1 + $0x30] sm:$0xff pattern:$0x73625140]
  %v888 = vld.sshfl [vmem:[#allocation1 + $0x38] sm:$0xff pattern:$0x73625140]
  %889 = vst [vmem:[#allocation1] ss:$4 sm:$0xff] %v872
  %890 = vst [vmem:[%s879] ss:$4 sm:$0xff] %v873
  %v891 = vld.sshfl [vmem:[#allocation1] sm:$0xff pattern:$0x73625140]
  %v892 = vld.sshfl [vmem:[#allocation1 + $0x8] sm:$0xff pattern:$0x73625140]
  %v893 = vld.sshfl [vmem:[#allocation1 + $0x10] sm:$0xff pattern:$0x73625140]
  %v894 = vld.sshfl [vmem:[#allocation1 + $0x18] sm:$0xff pattern:$0x73625140]
  %v895 = vld.sshfl [vmem:[#allocation1 + $0x20] sm:$0xff pattern:$0x73625140]
  %v896 = vld.sshfl [vmem:[#allocation1 + $0x28] sm:$0xff pattern:$0x73625140]
  %v897 = vld.sshfl [vmem:[#allocation1 + $0x30] sm:$0xff pattern:$0x73625140]
  %v898 = vld.sshfl [vmem:[#allocation1 + $0x38] sm:$0xff pattern:$0x73625140]
  %v915 = vsel %vm73, %v881, 0.0
  %v916 = vsel %vm73, %v882, 0.0
  %v917 = vadd.f32 %v915, %v916
  %v918 = vsel %vm73, %v883, 0.0
  %v919 = vadd.f32 %v917, %v918
  %v920 = vsel %vm73, %v884, 0.0
  %v921 = vadd.f32 %v919, %v920
  %v922 = vsel %vm73, %v885, 0.0
  %v923 = vadd.f32 %v921, %v922
  %v924 = vsel %vm73, %v886, 0.0
  %v925 = vadd.f32 %v923, %v924
  %v926 = vsel %vm73, %v887, 0.0
  %v927 = vadd.f32 %v925, %v926
  %v928 = vsel %vm73, %v888, 0.0
  %v929 = vadd.f32 %v927, %v928
  %v930 = vsel %vm73, %v891, 0.0
  %v931 = vadd.f32 %v929, %v930
  %v932 = vsel %vm73, %v892, 0.0
  %v933 = vadd.f32 %v931, %v932
  %v934 = vsel %vm73, %v893, 0.0
  %v935 = vadd.f32 %v933, %v934
  %v936 = vsel %vm73, %v894, 0.0
  %v937 = vadd.f32 %v935, %v936
  %v938 = vsel %vm73, %v895, 0.0
  %v939 = vadd.f32 %v937, %v938
  %v940 = vsel %vm73, %v896, 0.0
  %v941 = vadd.f32 %v939, %v940
  %v942 = vsel %vm73, %v897, 0.0
  %v943 = vadd.f32 %v941, %v942
  %v944 = vsel %vm73, %v898, 0.0
  %v945 = vadd.f32 %v943, %v944
  %946 = vadd.xlane.f32.xlu0 %v945
  %v947 = vpop.xlane.xlu0 %946
  %v948 = vmul.f32 %v947, %v858
  %v949 = vadd.f32 %v948, 1e-05
  %v950 = vrsqrt.pop %v949
  %v951 = vmul.f32 %v950, %v949
  %v952 = vmul.f32 %v951, %v950
  %v953 = vmul.f32 0.5, %v952
  %v954 = vsub.f32 1.5, %v953
  %v955 = vmul.f32 %v950, %v954
  %vm956 = vweird.f32 %v949
  %vm957 = vweird.f32 %v950
  %vm958 = vmor %vm956, %vm957
  %v959 = vsel %vm958, %v950, %v955
  %v962 = vunpack.c.l.s4 269488144
  %v963 = vunpack.c.0.s8 %v962
  %v964 = vperm.slane %v959, %v963
  %v966 = vmul.f32 %v866, %v964
  %v967 = vmul.f32 %v867, %v964
  %v968 = vmul.f32 %v868, %v964
  %v969 = vmul.f32 %v869, %v964
  %v970 = vld [vmem:[%s3] sm:$0xff]
  %v971 = vld [vmem:[%s3 + $0x8] sm:$0xff]
  %v974 = vperm.slane %v970, 0
  %v975 = vperm.slane %v970, 1
  %v976 = vperm.slane %v970, 2
  %v977 = vperm.slane %v970, 3
  %v978 = vperm.slane %v970, 4
  %v979 = vperm.slane %v970, 5
  %v980 = vperm.slane %v970, 6
  %v981 = vperm.slane %v970, 7
  %v982 = vperm.slane %v971, 0
  %v983 = vperm.slane %v971, 1
  %v984 = vperm.slane %v971, 2
  %v985 = vperm.slane %v971, 3
  %v986 = vperm.slane %v971, 4
  %v987 = vperm.slane %v971, 5
  %v988 = vperm.slane %v971, 6
  %v989 = vperm.slane %v971, 7
  %v990 = vrot.slane %v975, 6
  %v991 = vrot.slane %v976, 4
  %v992 = vrot.slane %v977, 2
  %v993 = vrot.slane %v979, 6
  %v994 = vrot.slane %v980, 4
  %v995 = vrot.slane %v981, 2
  %v996 = vrot.slane %v983, 6
  %v997 = vrot.slane %v984, 4
  %v998 = vrot.slane %v985, 2
  %v999 = vrot.slane %v987, 6
  %v1000 = vrot.slane %v988, 4
  %v1001 = vrot.slane %v989, 2
  %v1002 = vsel %vm73, %v974, %v990
  %v1003 = vsel %vm757, %v991, %v992
  %v1004 = vsel %vm759, %v1002, %v1003
  %v1005 = vsel %vm73, %v978, %v993
  %v1006 = vsel %vm757, %v994, %v995
  %v1007 = vsel %vm759, %v1005, %v1006
  %v1008 = vsel %vm73, %v982, %v996
  %v1009 = vsel %vm757, %v997, %v998
  %v1010 = vsel %vm759, %v1008, %v1009
  %v1011 = vsel %vm73, %v986, %v999
  %v1012 = vsel %vm757, %v1000, %v1001
  %v1013 = vsel %vm759, %v1011, %v1012
  %v1018 = vmul.f32 %v966, %v1004
  %v1019 = vmul.f32 %v967, %v1007
  %v1020 = vmul.f32 %v968, %v1010
  %v1021 = vmul.f32 %v969, %v1013
  %v1022 = vld [vmem:[%s4] sm:$0xff]
  %v1023 = vld [vmem:[%s4 + $0x8] sm:$0xff]
  %v1026 = vperm.slane %v1022, 0
  %v1027 = vperm.slane %v1022, 1
  %v1028 = vperm.slane %v1022, 2
  %v1029 = vperm.slane %v1022, 3
  %v1030 = vperm.slane %v1022, 4
  %v1031 = vperm.slane %v1022, 5
  %v1032 = vperm.slane %v1022, 6
  %v1033 = vperm.slane %v1022, 7
  %v1034 = vperm.slane %v1023, 0
  %v1035 = vperm.slane %v1023, 1
  %v1036 = vperm.slane %v1023, 2
  %v1037 = vperm.slane %v1023, 3
  %v1038 = vperm.slane %v1023, 4
  %v1039 = vperm.slane %v1023, 5
  %v1040 = vperm.slane %v1023, 6
  %v1041 = vperm.slane %v1023, 7
  %v1042 = vrot.slane %v1027, 6
  %v1043 = vrot.slane %v1028, 4
  %v1044 = vrot.slane %v1029, 2
  %v1045 = vrot.slane %v1031, 6
  %v1046 = vrot.slane %v1032, 4
  %v1047 = vrot.slane %v1033, 2
  %v1048 = vrot.slane %v1035, 6
  %v1049 = vrot.slane %v1036, 4
  %v1050 = vrot.slane %v1037, 2
  %v1051 = vrot.slane %v1039, 6
  %v1052 = vrot.slane %v1040, 4
  %v1053 = vrot.slane %v1041, 2
  %v1054 = vsel %vm73, %v1026, %v1042
  %v1055 = vsel %vm757, %v1043, %v1044
  %v1056 = vsel %vm759, %v1054, %v1055
  %v1057 = vsel %vm73, %v1030, %v1045
  %v1058 = vsel %vm757, %v1046, %v1047
  %v1059 = vsel %vm759, %v1057, %v1058
  %v1060 = vsel %vm73, %v1034, %v1048
  %v1061 = vsel %vm757, %v1049, %v1050
  %v1062 = vsel %vm759, %v1060, %v1061
  %v1063 = vsel %vm73, %v1038, %v1051
  %v1064 = vsel %vm757, %v1052, %v1053
  %v1065 = vsel %vm759, %v1063, %v1064
  %v1070 = vadd.f32 %v1018, %v1056
  %v1071 = vadd.f32 %v1019, %v1059
  %v1072 = vadd.f32 %v1020, %v1062
  %v1073 = vadd.f32 %v1021, %v1065
  %v1074 = vld [vmem:[%s2] sm:$0xff]
  %v1075 = vld [vmem:[%s2 + $0x8] sm:$0xff]
  %v1076 = vld [vmem:[%s2 + $0x10] sm:$0xff]
  %v1077 = vld [vmem:[%s2 + $0x18] sm:$0xff]
  %v1078 = vadd.f32 %v1074, %v1070
  %v1079 = vadd.f32 %v1075, %v1071
  %v1080 = vadd.f32 %v1076, %v1072
  %v1081 = vadd.f32 %v1077, %v1073
  %1082 = vst [vmem:[%s5] sm:$0xff] %v1078
  %1083 = vst [vmem:[%s5 + $0x8] sm:$0xff] %v1079
  %1084 = vst [vmem:[%s5 + $0x10] sm:$0xff] %v1080
  %1085 = vst [vmem:[%s5 + $0x18] sm:$0xff] %v1081
  // Predicated region
  $region22: #{cell_forward.11} parent=0 // pred_check
    _
  $region23: #{cell_forward.11} parent=0 // pred_check_branch
    %1087 = sbr.rel (0) target = $region25
  $region24: #{cell_forward.11} parent=0 // pred_region
    _
  $region25: #{cell_forward.11} parent=0 // pred_fallthru
    _
  // Predicated region
  $region26: #{cell_forward.11} parent=0 // pred_check
    _
  $region27: #{cell_forward.11} parent=0 // pred_check_branch
    %1089 = sbr.rel (0) target = $region29
  $region28: #{cell_forward.11} parent=0 // pred_region
    _
  $region29: #{cell_forward.11} parent=0 // pred_fallthru
    _

// kernel: cell_forward.14
$region0: #{cell_forward.14}
  #allocation0 [shape = 'u32[]', space=smem, size = 0x4, offset = 0x4, fixed_abs, tag = 'smem constant byte address 0x4 - core index']
  #allocation1 [shape = 'u32[72,128]{1,0:T(1,128)}', space=vmem, size = 0x9000, scoped, tag = 'internal scratch']
  #allocation2 [shape = 'f32[8,256]{1,0:T(8,128)}', space=vmem, size = 0x2000, scoped, tag = 'scratch operand']
  %s0 = inlined_call_operand.vmem [shape: bf16[8,128], index: 0, kind: input, shape index: {}]
  %s1 = inlined_call_operand.vmem [shape: bf16[2,128,256], index: 1, kind: input, shape index: {}]
  %s2 = inlined_call_operand.vmem [shape: f32[8,1], index: 2, kind: input, shape index: {}]
  %s3 = inlined_call_operand.vmem [shape: f32[2,8,256], index: 3, kind: output, shape index: {}]
  %s4 = sld [smem:[#allocation0]]
  $region53: #{cell_forward.14} parent=0
    _
  %s6 = ssub.s32 1, %s4
  %s7 = scalar_select 0, %s6, %s4
  loop: start=0, step=1, limit=4
  $region2: #{cell_forward.14} parent=0 // loop_pre_header
    _
  $region3: #{cell_forward.14} parent=0 // loop_header
    %s9 = sphi 0, %s13
    %p10 = scmp.ge.s32.totalorder %s9, 4
    %s16 = sphi 0, %s42
    %s17 = sphi 0, %s38
    %s18 = sphi 0, %s34
    %s19 = sphi 0, %s30
    %s20 = sphi 0, %s16
    %s21 = sphi 0, %s17
    %s22 = sphi 0, %s18
    %s23 = sphi 0, %s19
    %s24 = sphi 0, %s20
    %s25 = sphi 0, %s21
    %s26 = sphi 0, %s22
    %s27 = sphi 0, %s23
    %s47 = sphi 0, %s49
    %s50 = sphi 0, %s47
    %s51 = sphi 0, %s50
    %s67 = sphi 0, %s51
    %s77 = sphi 0, %s79
    %s80 = sphi 0, %s77
    %s81 = sphi 0, %s80
    %s97 = sphi 0, %s81
    %s103 = sphi 0, %s105
    %s106 = sphi 0, %s103
    %s107 = sphi 0, %s106
    %s123 = sphi 0, %s107
    %s133 = sphi 0, %s135
    %s136 = sphi 0, %s133
    %s137 = sphi 0, %s136
    %s153 = sphi 0, %s137
  $region4: #{cell_forward.14} parent=0 // loop_header_branch
    %12 = sbr.rel (%p10) target = $region8
  $region5: #{cell_forward.14} parent=0 // loop_body
    %s14 = ssub.s32 %s9, 1
    %s15 = ssub.s32 %s9, 2
    %s28 = sadd.s32 1, %s19
    %p29 = scmp.ge.s32.totalorder %s28, 1
    %s30 = scalar_select %p29, 0, %s28
    %s31 = sadd.s32 1, %s18
    %s32 = scalar_select %p29, %s31, %s18
    %p33 = scmp.ge.s32.totalorder %s32, 1
    %s34 = scalar_select %p33, 0, %s32
    %s35 = sadd.s32 1, %s17
    %s36 = scalar_select %p33, %s35, %s17
    %p37 = scmp.ge.s32.totalorder %s36, 1
    %s38 = scalar_select %p37, 0, %s36
    %s39 = sadd.s32 1, %s16
    %s40 = scalar_select %p37, %s39, %s16
    %p41 = scmp.ge.s32.totalorder %s40, 2
    %s42 = scalar_select %p41, 0, %s40
    %s43 = ssub.s32 %s17, %s38
    %s44 = ssub.s32 %s19, %s30
    %s45 = sor.u32 %s43, %s44
    %p46 = scmp.eq.s32.totalorder %s45, 0
    %s48 = sadd.s32 %s47, 1
    %s49 = scalar_select %p46, %s47, %s48
    %p52 = pneg %p46
    %p53 = scmp.eq.s32.totalorder %s9, 1
    %p54 = por %p52, %p53
    %p55 = scmp.ne.s32.totalorder %s47, %s50
    %p56 = scmp.eq.s32.totalorder %s9, 0
    %p57 = por %p55, %p56
    %p58 = scmp.ne.s32.totalorder %s47, %s50
    %p59 = scmp.eq.s32.totalorder %s14, 1
    %p60 = por %p58, %p59
    %p61 = scmp.ne.s32.totalorder %s50, %s51
    %p62 = scmp.eq.s32.totalorder %s14, 0
    %p63 = por %p61, %p62
    %p64 = scmp.ne.s32.totalorder %s50, %s51
    %p65 = scmp.eq.s32.totalorder %s15, 1
    %p66 = por %p64, %p65
    %p68 = scmp.ne.s32.totalorder %s51, %s67
    %p69 = scmp.eq.s32.totalorder %s15, 0
    %p70 = por %p68, %p69
    %s71 = ssub.s32 %s16, %s42
    %s72 = ssub.s32 %s19, %s30
    %s73 = sor.u32 %s71, %s72
    %s74 = ssub.s32 %s18, %s34
    %s75 = sor.u32 %s73, %s74
    %p76 = scmp.eq.s32.totalorder %s75, 0
    %s78 = sadd.s32 %s77, 1
    %s79 = scalar_select %p76, %s77, %s78
    %p82 = pneg %p76
    %p83 = scmp.eq.s32.totalorder %s9, 1
    %p84 = por %p82, %p83
    %p85 = scmp.ne.s32.totalorder %s77, %s80
    %p86 = scmp.eq.s32.totalorder %s9, 0
    %p87 = por %p85, %p86
    %p88 = scmp.ne.s32.totalorder %s77, %s80
    %p89 = scmp.eq.s32.totalorder %s14, 1
    %p90 = por %p88, %p89
    %p91 = scmp.ne.s32.totalorder %s80, %s81
    %p92 = scmp.eq.s32.totalorder %s14, 0
    %p93 = por %p91, %p92
    %p94 = scmp.ne.s32.totalorder %s80, %s81
    %p95 = scmp.eq.s32.totalorder %s15, 1
    %p96 = por %p94, %p95
    %p98 = scmp.ne.s32.totalorder %s81, %s97
    %p99 = scmp.eq.s32.totalorder %s15, 0
    %p100 = por %p98, %p99
    %s101 = ssub.s32 %s17, %s38
    %p102 = scmp.eq.s32.totalorder %s101, 0
    %s104 = sadd.s32 %s103, 1
    %s105 = scalar_select %p102, %s103, %s104
    %p108 = pneg %p102
    %p109 = scmp.eq.s32.totalorder %s9, 1
    %p110 = por %p108, %p109
    %p111 = scmp.ne.s32.totalorder %s103, %s106
    %p112 = scmp.eq.s32.totalorder %s9, 0
    %p113 = por %p111, %p112
    %p114 = scmp.ne.s32.totalorder %s103, %s106
    %p115 = scmp.eq.s32.totalorder %s14, 1
    %p116 = por %p114, %p115
    %p117 = scmp.ne.s32.totalorder %s106, %s107
    %p118 = scmp.eq.s32.totalorder %s14, 0
    %p119 = por %p117, %p118
    %p120 = scmp.ne.s32.totalorder %s106, %s107
    %p121 = scmp.eq.s32.totalorder %s15, 1
    %p122 = por %p120, %p121
    %p124 = scmp.ne.s32.totalorder %s107, %s123
    %p125 = scmp.eq.s32.totalorder %s15, 0
    %p126 = por %p124, %p125
    %s127 = ssub.s32 %s16, %s42
    %s128 = ssub.s32 %s17, %s38
    %s129 = sor.u32 %s127, %s128
    %s130 = ssub.s32 %s18, %s34
    %s131 = sor.u32 %s129, %s130
    %p132 = scmp.eq.s32.totalorder %s131, 0
    %s134 = sadd.s32 %s133, 1
    %s135 = scalar_select %p132, %s133, %s134
    %p138 = pneg %p132
    %p139 = scmp.eq.s32.totalorder %s9, 1
    %p140 = por %p138, %p139
    %p141 = scmp.ne.s32.totalorder %s133, %s136
    %p142 = scmp.eq.s32.totalorder %s9, 0
    %p143 = por %p141, %p142
    %p144 = scmp.ne.s32.totalorder %s133, %s136
    %p145 = scmp.eq.s32.totalorder %s14, 1
    %p146 = por %p144, %p145
    %p147 = scmp.ne.s32.totalorder %s136, %s137
    %p148 = scmp.eq.s32.totalorder %s14, 0
    %p149 = por %p147, %p148
    %p150 = scmp.ne.s32.totalorder %s136, %s137
    %p151 = scmp.eq.s32.totalorder %s15, 1
    %p152 = por %p150, %p151
    %p154 = scmp.ne.s32.totalorder %s137, %s153
    %p155 = scmp.eq.s32.totalorder %s15, 0
    %p156 = por %p154, %p155
    %p157 = scmp.le.s32.totalorder 1, %s9
    %p158 = scmp.lt.s32.totalorder %s9, 3
    %p159 = pnand %p157, %p158
    %p160 = pneg %p159
    // Predicated region
    $region9: #{cell_forward.14} parent=5 // pred_check
      _
    $region10: #{cell_forward.14} parent=5 // pred_check_branch
      %162 = sbr.rel (%p159) target = $region12
    $region11: #{cell_forward.14} parent=5 // pred_region
      %s163 = ssub.s32 %s9, 1
      // Predicated region
      $region13: #{cell_forward.14} parent=11 // pred_check
        %p164 = pneg %p63
      $region14: #{cell_forward.14} parent=11 // pred_check_branch
        %166 = sbr.rel (%p164) target = $region16
      $region15: #{cell_forward.14} parent=11 // pred_region
        %p167 = scmp.lt.s32.totalorder %s21, 0
        %s168 = scalar_select %p167, %s21, 0
        %p169 = scmp.lt.s32.totalorder %s23, 0
        %s170 = scalar_select %p169, %s23, 0
        %s171 = sadd.s32 %s170, %s168
        %s172 = smul.addr %s171, 4
        %s173 = scalar_lea.vmem %s0, %s172
      $region16: #{cell_forward.14} parent=11 // pred_fallthru
        _
      // Predicated region
      $region17: #{cell_forward.14} parent=11 // pred_check
        %p174 = pneg %p119
      $region18: #{cell_forward.14} parent=11 // pred_check_branch
        %176 = sbr.rel (%p174) target = $region20
      $region19: #{cell_forward.14} parent=11 // pred_region
        %p177 = scmp.lt.s32.totalorder %s21, 0
        %s178 = scalar_select %p177, %s21, 0
        %s179 = smul.addr %s178, 8
        %s180 = scalar_lea.vmem %s2, %s179
      $region20: #{cell_forward.14} parent=11 // pred_fallthru
        _
    $region12: #{cell_forward.14} parent=5 // pred_fallthru
      _
    %p181 = scmp.lt.s32.totalorder %s9, 2
    // Predicated region
    $region21: #{cell_forward.14} parent=5 // pred_check
      %p182 = pneg %p181
    $region22: #{cell_forward.14} parent=5 // pred_check_branch
      %184 = sbr.rel (%p182) target = $region24
    $region23: #{cell_forward.14} parent=5 // pred_region
      // Predicated region
      $region25: #{cell_forward.14} parent=23 // pred_check
        %p185 = pneg %p87
      $region26: #{cell_forward.14} parent=23 // pred_check_branch
        %187 = sbr.rel (%p185) target = $region28
      $region27: #{cell_forward.14} parent=23 // pred_region
        %s188 = smul.u32 16, %s19
        %s189 = smul.u32 2, %s18
        %p190 = scmp.lt.s32.totalorder %s16, 1
        %s191 = scalar_select %p190, %s16, 1
        %p192 = scmp.lt.s32.totalorder %s188, 15
        %s193 = scalar_select %p192, %s188, 15
        %p194 = scmp.lt.s32.totalorder %s189, 1
        %s195 = scalar_select %p194, %s189, 1
        %s196 = smul.addr %s193, 2
        %s197 = sadd.s32 %s195, %s196
        %s198 = smul.addr %s191, 32
        %s199 = sadd.s32 %s197, %s198
        %s200 = smul.addr %s199, 4
        %s201 = scalar_lea.vmem %s1, %s200
        %s202 = smul.u32 16, %s19
        %s203 = smul.u32 2, %s18
      $region28: #{cell_forward.14} parent=23 // pred_fallthru
        _
    $region24: #{cell_forward.14} parent=5 // pred_fallthru
      _
    %p204 = scmp.le.s32.totalorder 1, %s9
    %p205 = scmp.lt.s32.totalorder %s9, 3
    %p206 = pnand %p204, %p205
    %p207 = pneg %p206
    // Predicated region
    $region29: #{cell_forward.14} parent=5 // pred_check
      _
    $region30: #{cell_forward.14} parent=5 // pred_check_branch
      %209 = sbr.rel (%p206) target = $region32
    $region31: #{cell_forward.14} parent=5 // pred_region
      %s210 = ssub.s32 %s9, 1
      %p211 = scmp.lt.s32.totalorder %s21, 0
      %s212 = scalar_select %p211, %s21, 0
      %p213 = scmp.lt.s32.totalorder %s23, 0
      %s214 = scalar_select %p213, %s23, 0
      %s215 = sadd.s32 %s214, %s212
      %s216 = smul.addr %s215, 4
      %s217 = scalar_lea.vmem %s0, %s216
      %p218 = pneg %p63
      %p219 = pneg %p60
      %s220 = smul.u32 16, %s23
      %s221 = smul.u32 2, %s22
      %p222 = scmp.lt.s32.totalorder %s20, 1
      %s223 = scalar_select %p222, %s20, 1
      %p224 = scmp.lt.s32.totalorder %s220, 15
      %s225 = scalar_select %p224, %s220, 15
      %p226 = scmp.lt.s32.totalorder %s221, 1
      %s227 = scalar_select %p226, %s221, 1
      %s228 = smul.addr %s225, 2
      %s229 = sadd.s32 %s227, %s228
      %s230 = smul.addr %s223, 32
      %s231 = sadd.s32 %s229, %s230
      %s232 = smul.addr %s231, 4
      %s233 = scalar_lea.vmem %s1, %s232
      %p234 = pneg %p93
      %p235 = pneg %p90
      %p236 = scmp.lt.s32.totalorder %s21, 0
      %s237 = scalar_select %p236, %s21, 0
      %s238 = smul.addr %s237, 8
      %s239 = scalar_lea.vmem %s2, %s238
      %p240 = pneg %p119
      %p241 = pneg %p116
      %p242 = pneg %p149
      %p243 = pneg %p146
      %s244 = smul.u32 2, %s22
      %p245 = scmp.lt.s32.totalorder %s20, 1
      %s246 = scalar_select %p245, %s20, 1
      %p247 = scmp.lt.s32.totalorder %s21, 0
      %s248 = scalar_select %p247, %s21, 0
      %p249 = scmp.lt.s32.totalorder %s244, 1
      %s250 = scalar_select %p249, %s244, 1
      %s251 = smul.addr %s248, 2
      %s252 = sadd.s32 %s250, %s251
      %s253 = smul.addr %s246, 2
      %s254 = sadd.s32 %s252, %s253
      %s255 = smul.addr %s254, 8
      %s256 = scalar_lea.vmem %s3, %s255
      %p257 = scmp.lt.s32.totalorder %s21, 0
      %s258 = scalar_select %p257, %s21, 0
      %p259 = scmp.lt.s32.totalorder %s23, 0
      %s260 = scalar_select %p259, %s23, 0
      %s261 = sadd.s32 %s260, %s258
      %s262 = smul.addr %s261, 4
      %s263 = scalar_lea.vmem %s0, %s262
      %s264 = smul.u32 16, %s23
      %s265 = smul.u32 2, %s22
      %p266 = scmp.lt.s32.totalorder %s20, 1
      %s267 = scalar_select %p266, %s20, 1
      %p268 = scmp.lt.s32.totalorder %s264, 15
      %s269 = scalar_select %p268, %s264, 15
      %p270 = scmp.lt.s32.totalorder %s265, 1
      %s271 = scalar_select %p270, %s265, 1
      %s272 = smul.addr %s269, 2
      %s273 = sadd.s32 %s271, %s272
      %s274 = smul.addr %s267, 32
      %s275 = sadd.s32 %s273, %s274
      %s276 = smul.addr %s275, 4
      %s277 = scalar_lea.vmem %s1, %s276
      %s278 = smul.u32 16, %s23
      %s279 = smul.u32 2, %s22
      %p280 = scmp.lt.s32.totalorder %s21, 0
      %s281 = scalar_select %p280, %s21, 0
      %s282 = smul.addr %s281, 8
      %s283 = scalar_lea.vmem %s2, %s282
      %s284 = smul.u32 2, %s22
      %p285 = scmp.lt.s32.totalorder %s20, 1
      %s286 = scalar_select %p285, %s20, 1
      %p287 = scmp.lt.s32.totalorder %s21, 0
      %s288 = scalar_select %p287, %s21, 0
      %p289 = scmp.lt.s32.totalorder %s284, 1
      %s290 = scalar_select %p289, %s284, 1
      %s291 = smul.addr %s288, 2
      %s292 = sadd.s32 %s290, %s291
      %s293 = smul.addr %s286, 2
      %s294 = sadd.s32 %s292, %s293
      %s295 = smul.addr %s294, 8
      %s296 = scalar_lea.vmem %s3, %s295
      %s297 = smul.u32 2, %s22
      %p298 = scmp.eq.s32.totalorder %s23, 0
      // Predicated region
      $region33: #{cell_forward.14} parent=31 // pred_check
        %p299 = pneg %p298
      $region34: #{cell_forward.14} parent=31 // pred_check_branch
        %301 = sbr.rel (%p299) target = $region36
      $region35: #{cell_forward.14} parent=31 // pred_region
        %302 = vst [vmem:[#allocation2] sm:$0xff] 0.0
        %303 = vst [vmem:[#allocation2 + $0x8] sm:$0xff] 0.0
      $region36: #{cell_forward.14} parent=31 // pred_fallthru
        _
      %v304 = vld [vmem:[#allocation2] sm:$0xff]
      %v305 = vld [vmem:[#allocation2 + $0x8] sm:$0xff]
      %v306 = vld [vmem:[%s263] sm:$0xf]
      %v307 = vld [vmem:[%s277] sm:$0xff]
      %v308 = vld [vmem:[%s277 + $0x8] sm:$0xff]
      %v309 = vld [vmem:[%s277 + $0x10] sm:$0xff]
      %v310 = vld [vmem:[%s277 + $0x18] sm:$0xff]
      %v311 = vld [vmem:[%s277 + $0x20] sm:$0xff]
      %v312 = vld [vmem:[%s277 + $0x28] sm:$0xff]
      %v313 = vld [vmem:[%s277 + $0x30] sm:$0xff]
      %v314 = vld [vmem:[%s277 + $0x38] sm:$0xff]
      %v315 = vld [vmem:[%s277 + $0x40] sm:$0xff]
      %v316 = vld [vmem:[%s277 + $0x48] sm:$0xff]
      %v317 = vld [vmem:[%s277 + $0x50] sm:$0xff]
      %v318 = vld [vmem:[%s277 + $0x58] sm:$0xff]
      %v319 = vld [vmem:[%s277 + $0x60] sm:$0xff]
      %v320 = vld [vmem:[%s277 + $0x68] sm:$0xff]
      %v321 = vld [vmem:[%s277 + $0x70] sm:$0xff]
      %v322 = vld [vmem:[%s277 + $0x78] sm:$0xff]
      %v339 = vunpack.c.l.b16 %v307
      %v340 = vunpack.c.h.b16 %v307
      %v341 = vunpack.c.l.b16 %v308
      %v342 = vunpack.c.h.b16 %v308
      %v343 = vunpack.c.l.b16 %v309
      %v344 = vunpack.c.h.b16 %v309
      %v345 = vunpack.c.l.b16 %v310
      %v346 = vunpack.c.h.b16 %v310
      %v347 = vunpack.c.l.b16 %v311
      %v348 = vunpack.c.h.b16 %v311
      %v349 = vunpack.c.l.b16 %v312
      %v350 = vunpack.c.h.b16 %v312
      %v351 = vunpack.c.l.b16 %v313
      %v352 = vunpack.c.h.b16 %v313
      %v353 = vunpack.c.l.b16 %v314
      %v354 = vunpack.c.h.b16 %v314
      %v355 = vunpack.c.l.b16 %v315
      %v356 = vunpack.c.h.b16 %v315
      %v357 = vunpack.c.l.b16 %v316
      %v358 = vunpack.c.h.b16 %v316
      %v359 = vunpack.c.l.b16 %v317
      %v360 = vunpack.c.h.b16 %v317
      %v361 = vunpack.c.l.b16 %v318
      %v362 = vunpack.c.h.b16 %v318
      %v363 = vunpack.c.l.b16 %v319
      %v364 = vunpack.c.h.b16 %v319
      %v365 = vunpack.c.l.b16 %v320
      %v366 = vunpack.c.h.b16 %v320
      %v367 = vunpack.c.l.b16 %v321
      %v368 = vunpack.c.h.b16 %v321
      %v369 = vunpack.c.l.b16 %v322
      %v370 = vunpack.c.h.b16 %v322
      %v371 = vpack.c.b16 %v341, %v339
      %v372 = vpack.c.b16 %v342, %v340
      %v373 = vpack.c.b16 %v345, %v343
      %v374 = vpack.c.b16 %v346, %v344
      %v375 = vpack.c.b16 %v349, %v347
      %v376 = vpack.c.b16 %v350, %v348
      %v377 = vpack.c.b16 %v353, %v351
      %v378 = vpack.c.b16 %v354, %v352
      %v379 = vpack.c.b16 %v357, %v355
      %v380 = vpack.c.b16 %v358, %v356
      %v381 = vpack.c.b16 %v361, %v359
      %v382 = vpack.c.b16 %v362, %v360
      %v383 = vpack.c.b16 %v365, %v363
      %v384 = vpack.c.b16 %v366, %v364
      %v385 = vpack.c.b16 %v369, %v367
      %v386 = vpack.c.b16 %v370, %v368
      %403 = vmatpush.bf16.msra.mxu0 %v385
      %404 = vmatpush.bf16.msra.mxu0 %v383
      %405 = vmatpush.bf16.msra.mxu0 %v381
      %406 = vmatpush.bf16.msra.mxu0 %v379
      %407 = vmatpush.bf16.msra.mxu0 %v377
      %408 = vmatpush.bf16.msra.mxu0 %v375
      %409 = vmatpush.bf16.msra.mxu0 %v373
      %410 = vmatpush.bf16.msra.mxu0 %v371
      %411 = vmatmul.bf16.gmra.mxu0 %v306
      %v412 = vpop.f32.mrf.mxu0
      %v413 = vadd.f32 0.0, %v412
      %v414 = vpop.f32.mrf.mxu0
      %415 = vdwg.mxu0
      %416 = vmatpush.bf16.msra.mxu0 %v386
      %417 = vmatpush.bf16.msra.mxu0 %v384
      %418 = vmatpush.bf16.msra.mxu0 %v382
      %419 = vmatpush.bf16.msra.mxu0 %v380
      %420 = vmatpush.bf16.msra.mxu0 %v378
      %421 = vmatpush.bf16.msra.mxu0 %v376
      %422 = vmatpush.bf16.msra.mxu0 %v374
      %423 = vmatpush.bf16.msra.mxu0 %v372
      %424 = vmatmul.bf16.gmra.mxu0 %v306
      %v425 = vpop.f32.mrf.mxu0
      %v426 = vadd.f32 0.0, %v425
      %v427 = vpop.f32.mrf.mxu0
      %428 = vdwg.mxu0
      %v429 = vadd.f32 %v304, %v413
      %v430 = vadd.f32 %v305, %v426
      %431 = vst [vmem:[#allocation2] sm:$0xff] %v429
      %432 = vst [vmem:[#allocation2 + $0x8] sm:$0xff] %v430
      // Predicated region
      $region37: #{cell_forward.14} parent=31 // pred_check
        %p433 = pneg %p298
      $region38: #{cell_forward.14} parent=31 // pred_check_branch
        %435 = sbr.rel (%p433) target = $region40
      $region39: #{cell_forward.14} parent=31 // pred_region
        %v436 = vld [vmem:[#allocation2] sm:$0xff]
        %v437 = vld [vmem:[#allocation2 + $0x8] sm:$0xff]
        %v438 = vld [vmem:[%s283] sm:$0xff]
        %440 = vset.pattern.permute.xlu0 0
        %441 = vperm.xlu0 %440, %v438
        %v442 = vpop.permute.xlu0 %441
        %v444 = vadd.f32 %v436, %v442
        %v445 = vadd.f32 %v437, %v442
        %446 = vst [vmem:[%s296] sm:$0xff] %v444
        %447 = vst [vmem:[%s296 + $0x8] sm:$0xff] %v445
      $region40: #{cell_forward.14} parent=31 // pred_fallthru
        _
      %s448 = smul.u32 2, %s22
      %p449 = scmp.lt.s32.totalorder %s20, 1
      %s450 = scalar_select %p449, %s20, 1
      %p451 = scmp.lt.s32.totalorder %s21, 0
      %s452 = scalar_select %p451, %s21, 0
      %p453 = scmp.lt.s32.totalorder %s448, 1
      %s454 = scalar_select %p453, %s448, 1
      %s455 = smul.addr %s452, 2
      %s456 = sadd.s32 %s454, %s455
      %s457 = smul.addr %s450, 2
      %s458 = sadd.s32 %s456, %s457
      %s459 = smul.addr %s458, 8
      %s460 = scalar_lea.vmem %s3, %s459
      // Predicated region
      $region41: #{cell_forward.14} parent=31 // pred_check
        %p461 = pneg %p146
      $region42: #{cell_forward.14} parent=31 // pred_check_branch
        %463 = sbr.rel (%p461) target = $region44
      $region43: #{cell_forward.14} parent=31 // pred_region
        %s464 = smul.u32 2, %s22
      $region44: #{cell_forward.14} parent=31 // pred_fallthru
        _
    $region32: #{cell_forward.14} parent=5 // pred_fallthru
      _
    %p465 = scmp.le.s32.totalorder 2, %s9
    // Predicated region
    $region45: #{cell_forward.14} parent=5 // pred_check
      %p466 = pneg %p465
    $region46: #{cell_forward.14} parent=5 // pred_check_branch
      %468 = sbr.rel (%p466) target = $region48
    $region47: #{cell_forward.14} parent=5 // pred_region
      %s469 = ssub.s32 %s9, 2
      // Predicated region
      $region49: #{cell_forward.14} parent=47 // pred_check
        %p470 = pneg %p152
      $region50: #{cell_forward.14} parent=47 // pred_check_branch
        %472 = sbr.rel (%p470) target = $region52
      $region51: #{cell_forward.14} parent=47 // pred_region
        %s473 = smul.u32 2, %s26
        %p474 = scmp.lt.s32.totalorder %s24, 1
        %s475 = scalar_select %p474, %s24, 1
        %p476 = scmp.lt.s32.totalorder %s25, 0
        %s477 = scalar_select %p476, %s25, 0
        %p478 = scmp.lt.s32.totalorder %s473, 1
        %s479 = scalar_select %p478, %s473, 1
        %s480 = smul.addr %s477, 2
        %s481 = sadd.s32 %s479, %s480
        %s482 = smul.addr %s475, 2
        %s483 = sadd.s32 %s481, %s482
        %s484 = smul.addr %s483, 8
        %s485 = scalar_lea.vmem %s3, %s484
      $region52: #{cell_forward.14} parent=47 // pred_fallthru
        _
    $region48: #{cell_forward.14} parent=5 // pred_fallthru
      _
  $region6: #{cell_forward.14} parent=0 // loop_footer
    %s13 = sadd.s32 1, %s9
  $region7: #{cell_forward.14} parent=0 // loop_footer_branch
    %8 = sbr.rel target = $region3
  $region8: #{cell_forward.14} parent=0 // loop_exit
    _

// kernel: cell_forward.13
$region0: #{cell_forward.13}
  #allocation0 [shape = 'u32[]', space=smem, size = 0x4, offset = 0x4, fixed_abs, tag = 'smem constant byte address 0x4 - core index']
  #allocation1 [shape = 'u32[72,128]{1,0:T(1,128)}', space=vmem, size = 0x9000, scoped, tag = 'internal scratch']
  #allocation2 [shape = 'f32[8,128]{1,0:T(8,128)}', space=vmem, size = 0x1000, scoped, tag = 'scratch operand']
  %s0 = inlined_call_operand.vmem [shape: bf16[8,512], index: 0, kind: input, shape index: {}]
  %s1 = inlined_call_operand.vmem [shape: bf16[2,512,128], index: 1, kind: input, shape index: {}]
  %s2 = inlined_call_operand.vmem [shape: f32[8,1], index: 2, kind: input, shape index: {}]
  %s3 = inlined_call_operand.vmem [shape: f32[2,8,128], index: 3, kind: output, shape index: {}]
  %s4 = sld [smem:[#allocation0]]
  $region53: #{cell_forward.13} parent=0
    _
  %s6 = ssub.s32 1, %s4
  %s7 = scalar_select 0, %s6, %s4
  loop: start=0, step=1, limit=4
  $region2: #{cell_forward.13} parent=0 // loop_pre_header
    _
  $region3: #{cell_forward.13} parent=0 // loop_header
    %s9 = sphi 0, %s13
    %p10 = scmp.ge.s32.totalorder %s9, 4
    %s16 = sphi 0, %s42
    %s17 = sphi 0, %s38
    %s18 = sphi 0, %s34
    %s19 = sphi 0, %s30
    %s20 = sphi 0, %s16
    %s21 = sphi 0, %s17
    %s22 = sphi 0, %s18
    %s23 = sphi 0, %s19
    %s24 = sphi 0, %s20
    %s25 = sphi 0, %s21
    %s26 = sphi 0, %s22
    %s27 = sphi 0, %s23
    %s47 = sphi 0, %s49
    %s50 = sphi 0, %s47
    %s51 = sphi 0, %s50
    %s67 = sphi 0, %s51
    %s77 = sphi 0, %s79
    %s80 = sphi 0, %s77
    %s81 = sphi 0, %s80
    %s97 = sphi 0, %s81
    %s103 = sphi 0, %s105
    %s106 = sphi 0, %s103
    %s107 = sphi 0, %s106
    %s123 = sphi 0, %s107
    %s133 = sphi 0, %s135
    %s136 = sphi 0, %s133
    %s137 = sphi 0, %s136
    %s153 = sphi 0, %s137
  $region4: #{cell_forward.13} parent=0 // loop_header_branch
    %12 = sbr.rel (%p10) target = $region8
  $region5: #{cell_forward.13} parent=0 // loop_body
    %s14 = ssub.s32 %s9, 1
    %s15 = ssub.s32 %s9, 2
    %s28 = sadd.s32 1, %s19
    %p29 = scmp.ge.s32.totalorder %s28, 1
    %s30 = scalar_select %p29, 0, %s28
    %s31 = sadd.s32 1, %s18
    %s32 = scalar_select %p29, %s31, %s18
    %p33 = scmp.ge.s32.totalorder %s32, 1
    %s34 = scalar_select %p33, 0, %s32
    %s35 = sadd.s32 1, %s17
    %s36 = scalar_select %p33, %s35, %s17
    %p37 = scmp.ge.s32.totalorder %s36, 1
    %s38 = scalar_select %p37, 0, %s36
    %s39 = sadd.s32 1, %s16
    %s40 = scalar_select %p37, %s39, %s16
    %p41 = scmp.ge.s32.totalorder %s40, 2
    %s42 = scalar_select %p41, 0, %s40
    %s43 = ssub.s32 %s17, %s38
    %s44 = ssub.s32 %s19, %s30
    %s45 = sor.u32 %s43, %s44
    %p46 = scmp.eq.s32.totalorder %s45, 0
    %s48 = sadd.s32 %s47, 1
    %s49 = scalar_select %p46, %s47, %s48
    %p52 = pneg %p46
    %p53 = scmp.eq.s32.totalorder %s9, 1
    %p54 = por %p52, %p53
    %p55 = scmp.ne.s32.totalorder %s47, %s50
    %p56 = scmp.eq.s32.totalorder %s9, 0
    %p57 = por %p55, %p56
    %p58 = scmp.ne.s32.totalorder %s47, %s50
    %p59 = scmp.eq.s32.totalorder %s14, 1
    %p60 = por %p58, %p59
    %p61 = scmp.ne.s32.totalorder %s50, %s51
    %p62 = scmp.eq.s32.totalorder %s14, 0
    %p63 = por %p61, %p62
    %p64 = scmp.ne.s32.totalorder %s50, %s51
    %p65 = scmp.eq.s32.totalorder %s15, 1
    %p66 = por %p64, %p65
    %p68 = scmp.ne.s32.totalorder %s51, %s67
    %p69 = scmp.eq.s32.totalorder %s15, 0
    %p70 = por %p68, %p69
    %s71 = ssub.s32 %s16, %s42
    %s72 = ssub.s32 %s19, %s30
    %s73 = sor.u32 %s71, %s72
    %s74 = ssub.s32 %s18, %s34
    %s75 = sor.u32 %s73, %s74
    %p76 = scmp.eq.s32.totalorder %s75, 0
    %s78 = sadd.s32 %s77, 1
    %s79 = scalar_select %p76, %s77, %s78
    %p82 = pneg %p76
    %p83 = scmp.eq.s32.totalorder %s9, 1
    %p84 = por %p82, %p83
    %p85 = scmp.ne.s32.totalorder %s77, %s80
    %p86 = scmp.eq.s32.totalorder %s9, 0
    %p87 = por %p85, %p86
    %p88 = scmp.ne.s32.totalorder %s77, %s80
    %p89 = scmp.eq.s32.totalorder %s14, 1
    %p90 = por %p88, %p89
    %p91 = scmp.ne.s32.totalorder %s80, %s81
    %p92 = scmp.eq.s32.totalorder %s14, 0
    %p93 = por %p91, %p92
    %p94 = scmp.ne.s32.totalorder %s80, %s81
    %p95 = scmp.eq.s32.totalorder %s15, 1
    %p96 = por %p94, %p95
    %p98 = scmp.ne.s32.totalorder %s81, %s97
    %p99 = scmp.eq.s32.totalorder %s15, 0
    %p100 = por %p98, %p99
    %s101 = ssub.s32 %s17, %s38
    %p102 = scmp.eq.s32.totalorder %s101, 0
    %s104 = sadd.s32 %s103, 1
    %s105 = scalar_select %p102, %s103, %s104
    %p108 = pneg %p102
    %p109 = scmp.eq.s32.totalorder %s9, 1
    %p110 = por %p108, %p109
    %p111 = scmp.ne.s32.totalorder %s103, %s106
    %p112 = scmp.eq.s32.totalorder %s9, 0
    %p113 = por %p111, %p112
    %p114 = scmp.ne.s32.totalorder %s103, %s106
    %p115 = scmp.eq.s32.totalorder %s14, 1
    %p116 = por %p114, %p115
    %p117 = scmp.ne.s32.totalorder %s106, %s107
    %p118 = scmp.eq.s32.totalorder %s14, 0
    %p119 = por %p117, %p118
    %p120 = scmp.ne.s32.totalorder %s106, %s107
    %p121 = scmp.eq.s32.totalorder %s15, 1
    %p122 = por %p120, %p121
    %p124 = scmp.ne.s32.totalorder %s107, %s123
    %p125 = scmp.eq.s32.totalorder %s15, 0
    %p126 = por %p124, %p125
    %s127 = ssub.s32 %s16, %s42
    %s128 = ssub.s32 %s17, %s38
    %s129 = sor.u32 %s127, %s128
    %s130 = ssub.s32 %s18, %s34
    %s131 = sor.u32 %s129, %s130
    %p132 = scmp.eq.s32.totalorder %s131, 0
    %s134 = sadd.s32 %s133, 1
    %s135 = scalar_select %p132, %s133, %s134
    %p138 = pneg %p132
    %p139 = scmp.eq.s32.totalorder %s9, 1
    %p140 = por %p138, %p139
    %p141 = scmp.ne.s32.totalorder %s133, %s136
    %p142 = scmp.eq.s32.totalorder %s9, 0
    %p143 = por %p141, %p142
    %p144 = scmp.ne.s32.totalorder %s133, %s136
    %p145 = scmp.eq.s32.totalorder %s14, 1
    %p146 = por %p144, %p145
    %p147 = scmp.ne.s32.totalorder %s136, %s137
    %p148 = scmp.eq.s32.totalorder %s14, 0
    %p149 = por %p147, %p148
    %p150 = scmp.ne.s32.totalorder %s136, %s137
    %p151 = scmp.eq.s32.totalorder %s15, 1
    %p152 = por %p150, %p151
    %p154 = scmp.ne.s32.totalorder %s137, %s153
    %p155 = scmp.eq.s32.totalorder %s15, 0
    %p156 = por %p154, %p155
    %p157 = scmp.le.s32.totalorder 1, %s9
    %p158 = scmp.lt.s32.totalorder %s9, 3
    %p159 = pnand %p157, %p158
    %p160 = pneg %p159
    // Predicated region
    $region9: #{cell_forward.13} parent=5 // pred_check
      _
    $region10: #{cell_forward.13} parent=5 // pred_check_branch
      %162 = sbr.rel (%p159) target = $region12
    $region11: #{cell_forward.13} parent=5 // pred_region
      %s163 = ssub.s32 %s9, 1
      // Predicated region
      $region13: #{cell_forward.13} parent=11 // pred_check
        %p164 = pneg %p63
      $region14: #{cell_forward.13} parent=11 // pred_check_branch
        %166 = sbr.rel (%p164) target = $region16
      $region15: #{cell_forward.13} parent=11 // pred_region
        %s167 = smul.u32 4, %s23
        %p168 = scmp.lt.s32.totalorder %s21, 0
        %s169 = scalar_select %p168, %s21, 0
        %p170 = scmp.lt.s32.totalorder %s167, 3
        %s171 = scalar_select %p170, %s167, 3
        %s172 = smul.addr %s169, 4
        %s173 = sadd.s32 %s171, %s172
        %s174 = smul.addr %s173, 4
        %s175 = scalar_lea.vmem %s0, %s174
        %s176 = smul.u32 4, %s23
      $region16: #{cell_forward.13} parent=11 // pred_fallthru
        _
      // Predicated region
      $region17: #{cell_forward.13} parent=11 // pred_check
        %p177 = pneg %p119
      $region18: #{cell_forward.13} parent=11 // pred_check_branch
        %179 = sbr.rel (%p177) target = $region20
      $region19: #{cell_forward.13} parent=11 // pred_region
        %p180 = scmp.lt.s32.totalorder %s21, 0
        %s181 = scalar_select %p180, %s21, 0
        %s182 = smul.addr %s181, 8
        %s183 = scalar_lea.vmem %s2, %s182
      $region20: #{cell_forward.13} parent=11 // pred_fallthru
        _
    $region12: #{cell_forward.13} parent=5 // pred_fallthru
      _
    %p184 = scmp.lt.s32.totalorder %s9, 2
    // Predicated region
    $region21: #{cell_forward.13} parent=5 // pred_check
      %p185 = pneg %p184
    $region22: #{cell_forward.13} parent=5 // pred_check_branch
      %187 = sbr.rel (%p185) target = $region24
    $region23: #{cell_forward.13} parent=5 // pred_region
      // Predicated region
      $region25: #{cell_forward.13} parent=23 // pred_check
        %p188 = pneg %p87
      $region26: #{cell_forward.13} parent=23 // pred_check_branch
        %190 = sbr.rel (%p188) target = $region28
      $region27: #{cell_forward.13} parent=23 // pred_region
        %s191 = smul.u32 64, %s19
        %p192 = scmp.lt.s32.totalorder %s16, 1
        %s193 = scalar_select %p192, %s16, 1
        %p194 = scmp.lt.s32.totalorder %s191, 63
        %s195 = scalar_select %p194, %s191, 63
        %p196 = scmp.lt.s32.totalorder %s18, 0
        %s197 = scalar_select %p196, %s18, 0
        %s198 = sadd.s32 %s197, %s195
        %s199 = smul.addr %s193, 64
        %s200 = sadd.s32 %s198, %s199
        %s201 = smul.addr %s200, 4
        %s202 = scalar_lea.vmem %s1, %s201
        %s203 = smul.u32 64, %s19
      $region28: #{cell_forward.13} parent=23 // pred_fallthru
        _
    $region24: #{cell_forward.13} parent=5 // pred_fallthru
      _
    %p204 = scmp.le.s32.totalorder 1, %s9
    %p205 = scmp.lt.s32.totalorder %s9, 3
    %p206 = pnand %p204, %p205
    %p207 = pneg %p206
    // Predicated region
    $region29: #{cell_forward.13} parent=5 // pred_check
      _
    $region30: #{cell_forward.13} parent=5 // pred_check_branch
      %209 = sbr.rel (%p206) target = $region32
    $region31: #{cell_forward.13} parent=5 // pred_region
      %s210 = ssub.s32 %s9, 1
      %s211 = smul.u32 4, %s23
      %p212 = scmp.lt.s32.totalorder %s21, 0
      %s213 = scalar_select %p212, %s21, 0
      %p214 = scmp.lt.s32.totalorder %s211, 3
      %s215 = scalar_select %p214, %s211, 3
      %s216 = smul.addr %s213, 4
      %s217 = sadd.s32 %s215, %s216
      %s218 = smul.addr %s217, 4
      %s219 = scalar_lea.vmem %s0, %s218
      %p220 = pneg %p63
      %p221 = pneg %p60
      %s222 = smul.u32 64, %s23
      %p223 = scmp.lt.s32.totalorder %s20, 1
      %s224 = scalar_select %p223, %s20, 1
      %p225 = scmp.lt.s32.totalorder %s222, 63
      %s226 = scalar_select %p225, %s222, 63
      %p227 = scmp.lt.s32.totalorder %s22, 0
      %s228 = scalar_select %p227, %s22, 0
      %s229 = sadd.s32 %s228, %s226
      %s230 = smul.addr %s224, 64
      %s231 = sadd.s32 %s229, %s230
      %s232 = smul.addr %s231, 4
      %s233 = scalar_lea.vmem %s1, %s232
      %p234 = pneg %p93
      %p235 = pneg %p90
      %p236 = scmp.lt.s32.totalorder %s21, 0
      %s237 = scalar_select %p236, %s21, 0
      %s238 = smul.addr %s237, 8
      %s239 = scalar_lea.vmem %s2, %s238
      %p240 = pneg %p119
      %p241 = pneg %p116
      %p242 = pneg %p149
      %p243 = pneg %p146
      %p244 = scmp.lt.s32.totalorder %s20, 1
      %s245 = scalar_select %p244, %s20, 1
      %p246 = scmp.lt.s32.totalorder %s21, 0
      %s247 = scalar_select %p246, %s21, 0
      %p248 = scmp.lt.s32.totalorder %s22, 0
      %s249 = scalar_select %p248, %s22, 0
      %s250 = sadd.s32 %s249, %s247
      %s251 = sadd.s32 %s250, %s245
      %s252 = smul.addr %s251, 8
      %s253 = scalar_lea.vmem %s3, %s252
      %s254 = smul.u32 4, %s23
      %p255 = scmp.lt.s32.totalorder %s21, 0
      %s256 = scalar_select %p255, %s21, 0
      %p257 = scmp.lt.s32.totalorder %s254, 3
      %s258 = scalar_select %p257, %s254, 3
      %s259 = smul.addr %s256, 4
      %s260 = sadd.s32 %s258, %s259
      %s261 = smul.addr %s260, 4
      %s262 = scalar_lea.vmem %s0, %s261
      %s263 = smul.u32 4, %s23
      %s264 = smul.u32 64, %s23
      %p265 = scmp.lt.s32.totalorder %s20, 1
      %s266 = scalar_select %p265, %s20, 1
      %p267 = scmp.lt.s32.totalorder %s264, 63
      %s268 = scalar_select %p267, %s264, 63
      %p269 = scmp.lt.s32.totalorder %s22, 0
      %s270 = scalar_select %p269, %s22, 0
      %s271 = sadd.s32 %s270, %s268
      %s272 = smul.addr %s266, 64
      %s273 = sadd.s32 %s271, %s272
      %s274 = smul.addr %s273, 4
      %s275 = scalar_lea.vmem %s1, %s274
      %s276 = smul.u32 64, %s23
      %p277 = scmp.lt.s32.totalorder %s21, 0
      %s278 = scalar_select %p277, %s21, 0
      %s279 = smul.addr %s278, 8
      %s280 = scalar_lea.vmem %s2, %s279
      %p281 = scmp.lt.s32.totalorder %s20, 1
      %s282 = scalar_select %p281, %s20, 1
      %p283 = scmp.lt.s32.totalorder %s21, 0
      %s284 = scalar_select %p283, %s21, 0
      %p285 = scmp.lt.s32.totalorder %s22, 0
      %s286 = scalar_select %p285, %s22, 0
      %s287 = sadd.s32 %s286, %s284
      %s288 = sadd.s32 %s287, %s282
      %s289 = smul.addr %s288, 8
      %s290 = scalar_lea.vmem %s3, %s289
      %p291 = scmp.eq.s32.totalorder %s23, 0
      // Predicated region
      $region33: #{cell_forward.13} parent=31 // pred_check
        %p292 = pneg %p291
      $region34: #{cell_forward.13} parent=31 // pred_check_branch
        %294 = sbr.rel (%p292) target = $region36
      $region35: #{cell_forward.13} parent=31 // pred_region
        %295 = vst [vmem:[#allocation2] sm:$0xff] 0.0
      $region36: #{cell_forward.13} parent=31 // pred_fallthru
        _
      %v296 = vld [vmem:[#allocation2] sm:$0xff]
      %v297 = vld [vmem:[%s262] sm:$0xff]
      %v298 = vld [vmem:[%s262 + $0x8] sm:$0xff]
      %v299 = vld [vmem:[%s275] sm:$0xf]
      %v300 = vld [vmem:[%s275 + $0x4] sm:$0xf]
      %v301 = vld [vmem:[%s275 + $0x8] sm:$0xf]
      %v302 = vld [vmem:[%s275 + $0xc] sm:$0xf]
      %v303 = vld [vmem:[%s275 + $0x10] sm:$0xf]
      %v304 = vld [vmem:[%s275 + $0x14] sm:$0xf]
      %v305 = vld [vmem:[%s275 + $0x18] sm:$0xf]
      %v306 = vld [vmem:[%s275 + $0x1c] sm:$0xf]
      %v307 = vld [vmem:[%s275 + $0x20] sm:$0xf]
      %v308 = vld [vmem:[%s275 + $0x24] sm:$0xf]
      %v309 = vld [vmem:[%s275 + $0x28] sm:$0xf]
      %v310 = vld [vmem:[%s275 + $0x2c] sm:$0xf]
      %v311 = vld [vmem:[%s275 + $0x30] sm:$0xf]
      %v312 = vld [vmem:[%s275 + $0x34] sm:$0xf]
      %v313 = vld [vmem:[%s275 + $0x38] sm:$0xf]
      %v314 = vld [vmem:[%s275 + $0x3c] sm:$0xf]
      %v315 = vld [vmem:[%s275 + $0x40] sm:$0xf]
      %v316 = vld [vmem:[%s275 + $0x44] sm:$0xf]
      %v317 = vld [vmem:[%s275 + $0x48] sm:$0xf]
      %v318 = vld [vmem:[%s275 + $0x4c] sm:$0xf]
      %v319 = vld [vmem:[%s275 + $0x50] sm:$0xf]
      %v320 = vld [vmem:[%s275 + $0x54] sm:$0xf]
      %v321 = vld [vmem:[%s275 + $0x58] sm:$0xf]
      %v322 = vld [vmem:[%s275 + $0x5c] sm:$0xf]
      %v323 = vld [vmem:[%s275 + $0x60] sm:$0xf]
      %v324 = vld [vmem:[%s275 + $0x64] sm:$0xf]
      %v325 = vld [vmem:[%s275 + $0x68] sm:$0xf]
      %v326 = vld [vmem:[%s275 + $0x6c] sm:$0xf]
      %v327 = vld [vmem:[%s275 + $0x70] sm:$0xf]
      %v328 = vld [vmem:[%s275 + $0x74] sm:$0xf]
      %v329 = vld [vmem:[%s275 + $0x78] sm:$0xf]
      %v330 = vld [vmem:[%s275 + $0x7c] sm:$0xf]
      %v331 = vld [vmem:[%s275 + $0x80] sm:$0xf]
      %v332 = vld [vmem:[%s275 + $0x84] sm:$0xf]
      %v333 = vld [vmem:[%s275 + $0x88] sm:$0xf]
      %v334 = vld [vmem:[%s275 + $0x8c] sm:$0xf]
      %v335 = vld [vmem:[%s275 + $0x90] sm:$0xf]
      %v336 = vld [vmem:[%s275 + $0x94] sm:$0xf]
      %v337 = vld [vmem:[%s275 + $0x98] sm:$0xf]
      %v338 = vld [vmem:[%s275 + $0x9c] sm:$0xf]
      %v339 = vld [vmem:[%s275 + $0xa0] sm:$0xf]
      %v340 = vld [vmem:[%s275 + $0xa4] sm:$0xf]
      %v341 = vld [vmem:[%s275 + $0xa8] sm:$0xf]
      %v342 = vld [vmem:[%s275 + $0xac] sm:$0xf]
      %v343 = vld [vmem:[%s275 + $0xb0] sm:$0xf]
      %v344 = vld [vmem:[%s275 + $0xb4] sm:$0xf]
      %v345 = vld [vmem:[%s275 + $0xb8] sm:$0xf]
      %v346 = vld [vmem:[%s275 + $0xbc] sm:$0xf]
      %v347 = vld [vmem:[%s275 + $0xc0] sm:$0xf]
      %v348 = vld [vmem:[%s275 + $0xc4] sm:$0xf]
      %v349 = vld [vmem:[%s275 + $0xc8] sm:$0xf]
      %v350 = vld [vmem:[%s275 + $0xcc] sm:$0xf]
      %v351 = vld [vmem:[%s275 + $0xd0] sm:$0xf]
      %v352 = vld [vmem:[%s275 + $0xd4] sm:$0xf]
      %v353 = vld [vmem:[%s275 + $0xd8] sm:$0xf]
      %v354 = vld [vmem:[%s275 + $0xdc] sm:$0xf]
      %v355 = vld [vmem:[%s275 + $0xe0] sm:$0xf]
      %v356 = vld [vmem:[%s275 + $0xe4] sm:$0xf]
      %v357 = vld [vmem:[%s275 + $0xe8] sm:$0xf]
      %v358 = vld [vmem:[%s275 + $0xec] sm:$0xf]
      %v359 = vld [vmem:[%s275 + $0xf0] sm:$0xf]
      %v360 = vld [vmem:[%s275 + $0xf4] sm:$0xf]
      %v361 = vld [vmem:[%s275 + $0xf8] sm:$0xf]
      %v362 = vld [vmem:[%s275 + $0xfc] sm:$0xf]
      %v365 = vunpack.c.l.b16 %v297
      %v366 = vunpack.c.h.b16 %v297
      %v367 = vunpack.c.l.b16 %v298
      %v368 = vunpack.c.h.b16 %v298
      %v369 = vpack.c.b16 %v365, %v365
      %v370 = vpack.c.b16 %v366, %v366
      %v371 = vpack.c.b16 %v367, %v367
      %v372 = vpack.c.b16 %v368, %v368
      %v441 = vunpack.c.l.b16 %v299
      %v442 = vunpack.c.l.b16 %v300
      %v443 = vunpack.c.l.b16 %v301
      %v444 = vunpack.c.l.b16 %v302
      %v445 = vunpack.c.l.b16 %v303
      %v446 = vunpack.c.l.b16 %v304
      %v447 = vunpack.c.l.b16 %v305
      %v448 = vunpack.c.l.b16 %v306
      %v449 = vunpack.c.l.b16 %v307
      %v450 = vunpack.c.l.b16 %v308
      %v451 = vunpack.c.l.b16 %v309
      %v452 = vunpack.c.l.b16 %v310
      %v453 = vunpack.c.l.b16 %v311
      %v454 = vunpack.c.l.b16 %v312
      %v455 = vunpack.c.l.b16 %v313
      %v456 = vunpack.c.l.b16 %v314
      %v457 = vunpack.c.l.b16 %v315
      %v458 = vunpack.c.l.b16 %v316
      %v459 = vunpack.c.l.b16 %v317
      %v460 = vunpack.c.l.b16 %v318
      %v461 = vunpack.c.l.b16 %v319
      %v462 = vunpack.c.l.b16 %v320
      %v463 = vunpack.c.l.b16 %v321
      %v464 = vunpack.c.l.b16 %v322
      %v465 = vunpack.c.l.b16 %v323
      %v466 = vunpack.c.l.b16 %v324
      %v467 = vunpack.c.l.b16 %v325
      %v468 = vunpack.c.l.b16 %v326
      %v469 = vunpack.c.l.b16 %v327
      %v470 = vunpack.c.l.b16 %v328
      %v471 = vunpack.c.l.b16 %v329
      %v472 = vunpack.c.l.b16 %v330
      %v473 = vunpack.c.l.b16 %v331
      %v474 = vunpack.c.l.b16 %v332
      %v475 = vunpack.c.l.b16 %v333
      %v476 = vunpack.c.l.b16 %v334
      %v477 = vunpack.c.l.b16 %v335
      %v478 = vunpack.c.l.b16 %v336
      %v479 = vunpack.c.l.b16 %v337
      %v480 = vunpack.c.l.b16 %v338
      %v481 = vunpack.c.l.b16 %v339
      %v482 = vunpack.c.l.b16 %v340
      %v483 = vunpack.c.l.b16 %v341
      %v484 = vunpack.c.l.b16 %v342
      %v485 = vunpack.c.l.b16 %v343
      %v486 = vunpack.c.l.b16 %v344
      %v487 = vunpack.c.l.b16 %v345
      %v488 = vunpack.c.l.b16 %v346
      %v489 = vunpack.c.l.b16 %v347
      %v490 = vunpack.c.l.b16 %v348
      %v491 = vunpack.c.l.b16 %v349
      %v492 = vunpack.c.l.b16 %v350
      %v493 = vunpack.c.l.b16 %v351
      %v494 = vunpack.c.l.b16 %v352
      %v495 = vunpack.c.l.b16 %v353
      %v496 = vunpack.c.l.b16 %v354
      %v497 = vunpack.c.l.b16 %v355
      %v498 = vunpack.c.l.b16 %v356
      %v499 = vunpack.c.l.b16 %v357
      %v500 = vunpack.c.l.b16 %v358
      %v501 = vunpack.c.l.b16 %v359
      %v502 = vunpack.c.l.b16 %v360
      %v503 = vunpack.c.l.b16 %v361
      %v504 = vunpack.c.l.b16 %v362
      %v505 = vpack.c.b16 %v442, %v441
      %v506 = vpack.c.b16 %v444, %v443
      %v507 = vpack.c.b16 %v446, %v445
      %v508 = vpack.c.b16 %v448, %v447
      %v509 = vpack.c.b16 %v450, %v449
      %v510 = vpack.c.b16 %v452, %v451
      %v511 = vpack.c.b16 %v454, %v453
      %v512 = vpack.c.b16 %v456, %v455
      %v513 = vpack.c.b16 %v458, %v457
      %v514 = vpack.c.b16 %v460, %v459
      %v515 = vpack.c.b16 %v462, %v461
      %v516 = vpack.c.b16 %v464, %v463
      %v517 = vpack.c.b16 %v466, %v465
      %v518 = vpack.c.b16 %v468, %v467
      %v519 = vpack.c.b16 %v470, %v469
      %v520 = vpack.c.b16 %v472, %v471
      %v521 = vpack.c.b16 %v474, %v473
      %v522 = vpack.c.b16 %v476, %v475
      %v523 = vpack.c.b16 %v478, %v477
      %v524 = vpack.c.b16 %v480, %v479
      %v525 = vpack.c.b16 %v482, %v481
      %v526 = vpack.c.b16 %v484, %v483
      %v527 = vpack.c.b16 %v486, %v485
      %v528 = vpack.c.b16 %v488, %v487
      %v529 = vpack.c.b16 %v490, %v489
      %v530 = vpack.c.b16 %v492, %v491
      %v531 = vpack.c.b16 %v494, %v493
      %v532 = vpack.c.b16 %v496, %v495
      %v533 = vpack.c.b16 %v498, %v497
      %v534 = vpack.c.b16 %v500, %v499
      %v535 = vpack.c.b16 %v502, %v501
      %v536 = vpack.c.b16 %v504, %v503
      %569 = vmatpush.bf16.msra.mxu0 %v512
      %570 = vmatpush.bf16.msra.mxu0 %v511
      %571 = vmatpush.bf16.msra.mxu0 %v510
      %572 = vmatpush.bf16.msra.mxu0 %v509
      %573 = vmatpush.bf16.msra.mxu0 %v508
      %574 = vmatpush.bf16.msra.mxu0 %v507
      %575 = vmatpush.bf16.msra.mxu0 %v506
      %576 = vmatpush.bf16.msra.mxu0 %v505
      %577 = vmatmul.bf16.gmra.mxu0 %v369
      %v578 = vpop.f32.mrf.mxu0
      %v579 = vadd.f32 0.0, %v578
      %v580 = vpop.f32.mrf.mxu0
      %581 = vdwg.mxu0
      %582 = vmatpush.bf16.msra.mxu0 %v520
      %583 = vmatpush.bf16.msra.mxu0 %v519
      %584 = vmatpush.bf16.msra.mxu0 %v518
      %585 = vmatpush.bf16.msra.mxu0 %v517
      %586 = vmatpush.bf16.msra.mxu0 %v516
      %587 = vmatpush.bf16.msra.mxu0 %v515
      %588 = vmatpush.bf16.msra.mxu0 %v514
      %589 = vmatpush.bf16.msra.mxu0 %v513
      %590 = vmatmul.bf16.gmra.mxu0 %v370
      %v591 = vpop.f32.mrf.mxu0
      %v592 = vadd.f32 %v579, %v591
      %v593 = vpop.f32.mrf.mxu0
      %594 = vdwg.mxu0
      %595 = vmatpush.bf16.msra.mxu0 %v528
      %596 = vmatpush.bf16.msra.mxu0 %v527
      %597 = vmatpush.bf16.msra.mxu0 %v526
      %598 = vmatpush.bf16.msra.mxu0 %v525
      %599 = vmatpush.bf16.msra.mxu0 %v524
      %600 = vmatpush.bf16.msra.mxu0 %v523
      %601 = vmatpush.bf16.msra.mxu0 %v522
      %602 = vmatpush.bf16.msra.mxu0 %v521
      %603 = vmatmul.bf16.gmra.mxu0 %v371
      %v604 = vpop.f32.mrf.mxu0
      %v605 = vadd.f32 %v592, %v604
      %v606 = vpop.f32.mrf.mxu0
      %607 = vdwg.mxu0
      %608 = vmatpush.bf16.msra.mxu0 %v536
      %609 = vmatpush.bf16.msra.mxu0 %v535
      %610 = vmatpush.bf16.msra.mxu0 %v534
      %611 = vmatpush.bf16.msra.mxu0 %v533
      %612 = vmatpush.bf16.msra.mxu0 %v532
      %613 = vmatpush.bf16.msra.mxu0 %v531
      %614 = vmatpush.bf16.msra.mxu0 %v530
      %615 = vmatpush.bf16.msra.mxu0 %v529
      %616 = vmatmul.bf16.gmra.mxu0 %v372
      %v617 = vpop.f32.mrf.mxu0
      %v618 = vadd.f32 %v605, %v617
      %v619 = vpop.f32.mrf.mxu0
      %620 = vdwg.mxu0
      %v621 = vadd.f32 %v296, %v618
      %622 = vst [vmem:[#allocation2] sm:$0xff] %v621
      // Predicated region
      $region37: #{cell_forward.13} parent=31 // pred_check
        %p623 = pneg %p291
      $region38: #{cell_forward.13} parent=31 // pred_check_branch
        %625 = sbr.rel (%p623) target = $region40
      $region39: #{cell_forward.13} parent=31 // pred_region
        %v626 = vld [vmem:[#allocation2] sm:$0xff]
        %v627 = vld [vmem:[%s280] sm:$0xff]
        %629 = vset.pattern.permute.xlu0 0
        %630 = vperm.xlu0 %629, %v627
        %v631 = vpop.permute.xlu0 %630
        %v633 = vadd.f32 %v626, %v631
        %634 = vst [vmem:[%s290] sm:$0xff] %v633
      $region40: #{cell_forward.13} parent=31 // pred_fallthru
        _
      %p635 = scmp.lt.s32.totalorder %s20, 1
      %s636 = scalar_select %p635, %s20, 1
      %p637 = scmp.lt.s32.totalorder %s21, 0
      %s638 = scalar_select %p637, %s21, 0
      %p639 = scmp.lt.s32.totalorder %s22, 0
      %s640 = scalar_select %p639, %s22, 0
      %s641 = sadd.s32 %s640, %s638
      %s642 = sadd.s32 %s641, %s636
      %s643 = smul.addr %s642, 8
      %s644 = scalar_lea.vmem %s3, %s643
      // Predicated region
      $region41: #{cell_forward.13} parent=31 // pred_check
        %p645 = pneg %p146
      $region42: #{cell_forward.13} parent=31 // pred_check_branch
        %647 = sbr.rel (%p645) target = $region44
      $region43: #{cell_forward.13} parent=31 // pred_region
        _
      $region44: #{cell_forward.13} parent=31 // pred_fallthru
        _
    $region32: #{cell_forward.13} parent=5 // pred_fallthru
      _
    %p648 = scmp.le.s32.totalorder 2, %s9
    // Predicated region
    $region45: #{cell_forward.13} parent=5 // pred_check
      %p649 = pneg %p648
    $region46: #{cell_forward.13} parent=5 // pred_check_branch
      %651 = sbr.rel (%p649) target = $region48
    $region47: #{cell_forward.13} parent=5 // pred_region
      %s652 = ssub.s32 %s9, 2
      // Predicated region
      $region49: #{cell_forward.13} parent=47 // pred_check
        %p653 = pneg %p152
      $region50: #{cell_forward.13} parent=47 // pred_check_branch
        %655 = sbr.rel (%p653) target = $region52
      $region51: #{cell_forward.13} parent=47 // pred_region
        %p656 = scmp.lt.s32.totalorder %s24, 1
        %s657 = scalar_select %p656, %s24, 1
        %p658 = scmp.lt.s32.totalorder %s25, 0
        %s659 = scalar_select %p658, %s25, 0
        %p660 = scmp.lt.s32.totalorder %s26, 0
        %s661 = scalar_select %p660, %s26, 0
        %s662 = sadd.s32 %s661, %s659
        %s663 = sadd.s32 %s662, %s657
        %s664 = smul.addr %s663, 8
        %s665 = scalar_lea.vmem %s3, %s664
      $region52: #{cell_forward.13} parent=47 // pred_fallthru
        _
    $region48: #{cell_forward.13} parent=5 // pred_fallthru
      _
  $region6: #{cell_forward.13} parent=0 // loop_footer
    %s13 = sadd.s32 1, %s9
  $region7: #{cell_forward.13} parent=0 // loop_footer_branch
    %8 = sbr.rel target = $region3
  $region8: #{cell_forward.13} parent=0 // loop_exit
    _

// kernel: cell_forward.15
$region0: #{cell_forward.15}
  #allocation0 [shape = 'u32[]', space=smem, size = 0x4, offset = 0x4, fixed_abs, tag = 'smem constant byte address 0x4 - core index']
  #allocation1 [shape = 'u32[72,128]{1,0:T(1,128)}', space=vmem, size = 0x9000, scoped, tag = 'internal scratch']
  %s0 = inlined_call_operand.vmem [shape: f32[16,256], index: 0, kind: input, shape index: {}]
  %s1 = inlined_call_operand.vmem [shape: f32[16,256], index: 1, kind: input, shape index: {}]
  %s2 = inlined_call_operand.vmem [shape: f32[16,256], index: 2, kind: input, shape index: {}]
  %s3 = inlined_call_operand.vmem [shape: f32[16,256], index: 3, kind: output, shape index: {}]
  %s4 = sld [smem:[#allocation0]]
  $region22: #{cell_forward.15} parent=0
    _
  %s6 = ssub.s32 1, %s4
  %s7 = scalar_select 0, %s6, %s4
  // Predicated region
  $region2: #{cell_forward.15} parent=0 // pred_check
    _
  $region3: #{cell_forward.15} parent=0 // pred_check_branch
    %9 = sbr.rel (0) target = $region5
  $region4: #{cell_forward.15} parent=0 // pred_region
    _
  $region5: #{cell_forward.15} parent=0 // pred_fallthru
    _
  // Predicated region
  $region6: #{cell_forward.15} parent=0 // pred_check
    _
  $region7: #{cell_forward.15} parent=0 // pred_check_branch
    %11 = sbr.rel (0) target = $region9
  $region8: #{cell_forward.15} parent=0 // pred_region
    _
  $region9: #{cell_forward.15} parent=0 // pred_fallthru
    _
  // Predicated region
  $region10: #{cell_forward.15} parent=0 // pred_check
    _
  $region11: #{cell_forward.15} parent=0 // pred_check_branch
    %13 = sbr.rel (0) target = $region13
  $region12: #{cell_forward.15} parent=0 // pred_region
    _
  $region13: #{cell_forward.15} parent=0 // pred_fallthru
    _
  %v14 = vld [vmem:[%s0] sm:$0xff]
  %v15 = vld [vmem:[%s0 + $0x8] sm:$0xff]
  %v16 = vld [vmem:[%s0 + $0x10] sm:$0xff]
  %v17 = vld [vmem:[%s0 + $0x18] sm:$0xff]
  %v18 = vld [vmem:[%s1] sm:$0xff]
  %v19 = vld [vmem:[%s1 + $0x8] sm:$0xff]
  %v20 = vld [vmem:[%s1 + $0x10] sm:$0xff]
  %v21 = vld [vmem:[%s1 + $0x18] sm:$0xff]
  %v22 = vadd.f32 %v14, %v18
  %v23 = vadd.f32 %v15, %v19
  %v24 = vadd.f32 %v16, %v20
  %v25 = vadd.f32 %v17, %v21
  %v26 = vadd.f32 %v22, %v23
  %27 = vadd.xlane.f32.xlu0 %v26
  %v28 = vpop.xlane.xlu0 %27
  %v29 = vadd.f32 %v24, %v25
  %30 = vadd.xlane.f32.xlu0 %v29
  %v31 = vpop.xlane.xlu0 %30
  %v32 = vrcp.pop 256.0
  %v33 = vmul.f32 256.0, %v32
  %v34 = vsub.f32 1.0, %v33
  %v35 = vmul.f32 %v32, %v34
  %v36 = vadd.f32 %v32, %v35
  %vm37 = vweird.f32 %v32
  %v38 = vsel %vm37, %v32, %v36
  %v39 = vmul.f32 %v28, %v38
  %v40 = vmul.f32 %v31, %v38
  %v41 = vsub.f32 %v22, %v39
  %v42 = vsub.f32 %v23, %v39
  %v43 = vsub.f32 %v24, %v40
  %v44 = vsub.f32 %v25, %v40
  %v45 = vmul.f32 %v41, %v41
  %v46 = vmul.f32 %v42, %v42
  %v47 = vmul.f32 %v43, %v43
  %v48 = vmul.f32 %v44, %v44
  %v49 = vadd.f32 %v45, %v46
  %50 = vadd.xlane.f32.xlu0 %v49
  %v51 = vpop.xlane.xlu0 %50
  %v52 = vadd.f32 %v47, %v48
  %53 = vadd.xlane.f32.xlu0 %v52
  %v54 = vpop.xlane.xlu0 %53
  %v55 = vmul.f32 %v51, %v38
  %v56 = vmul.f32 %v54, %v38
  %v57 = vadd.f32 %v55, 1e-05
  %v58 = vadd.f32 %v56, 1e-05
  %v59 = vrsqrt.pop %v57
  %v60 = vmul.f32 %v59, %v57
  %v61 = vmul.f32 %v60, %v59
  %v62 = vmul.f32 0.5, %v61
  %v63 = vsub.f32 1.5, %v62
  %v64 = vmul.f32 %v59, %v63
  %vm65 = vweird.f32 %v57
  %vm66 = vweird.f32 %v59
  %vm67 = vmor %vm65, %vm66
  %v68 = vsel %vm67, %v59, %v64
  %v69 = vrsqrt.pop %v58
  %v70 = vmul.f32 %v69, %v58
  %v71 = vmul.f32 %v70, %v69
  %v72 = vmul.f32 0.5, %v71
  %v73 = vsub.f32 1.5, %v72
  %v74 = vmul.f32 %v69, %v73
  %vm75 = vweird.f32 %v58
  %vm76 = vweird.f32 %v69
  %vm77 = vmor %vm75, %vm76
  %v78 = vsel %vm77, %v69, %v74
  %v79 = vmul.f32 %v41, %v68
  %v80 = vmul.f32 %v42, %v68
  %v81 = vmul.f32 %v43, %v78
  %v82 = vmul.f32 %v44, %v78
  %v83 = vsub.f32 0.0, %v79
  %v84 = vsub.f32 0.0, %v80
  %v85 = vsub.f32 0.0, %v81
  %v86 = vsub.f32 0.0, %v82
  %v87 = vmul.f32 %v83, 1.442695
  %v88 = vpow.pop %v87
  %v89 = vmul.f32 %v84, 1.442695
  %v90 = vpow.pop %v89
  %v91 = vmul.f32 %v85, 1.442695
  %v92 = vpow.pop %v91
  %v93 = vmul.f32 %v86, 1.442695
  %v94 = vpow.pop %v93
  %v95 = vadd.f32 %v88, 1.0
  %v96 = vadd.f32 %v90, 1.0
  %v97 = vadd.f32 %v92, 1.0
  %v98 = vadd.f32 %v94, 1.0
  %v99 = vrcp.pop %v95
  %v100 = vrcp.pop %v96
  %v101 = vrcp.pop %v97
  %v102 = vrcp.pop %v98
  %v103 = vld [vmem:[%s2] sm:$0xff]
  %v104 = vld [vmem:[%s2 + $0x8] sm:$0xff]
  %v105 = vld [vmem:[%s2 + $0x10] sm:$0xff]
  %v106 = vld [vmem:[%s2 + $0x18] sm:$0xff]
  %v107 = vtanh.pop %v103
  %v108 = vtanh.pop %v104
  %v109 = vtanh.pop %v105
  %v110 = vtanh.pop %v106
  %v111 = vmul.f32 %v99, %v107
  %v112 = vmul.f32 %v100, %v108
  %v113 = vmul.f32 %v101, %v109
  %v114 = vmul.f32 %v102, %v110
  %115 = vst [vmem:[%s3] sm:$0xff] %v111
  %116 = vst [vmem:[%s3 + $0x8] sm:$0xff] %v112
  %117 = vst [vmem:[%s3 + $0x10] sm:$0xff] %v113
  %118 = vst [vmem:[%s3 + $0x18] sm:$0xff] %v114
  // Predicated region
  $region14: #{cell_forward.15} parent=0 // pred_check
    _
  $region15: #{cell_forward.15} parent=0 // pred_check_branch
    %120 = sbr.rel (0) target = $region17
  $region16: #{cell_forward.15} parent=0 // pred_region
    _
  $region17: #{cell_forward.15} parent=0 // pred_fallthru
    _
  // Predicated region
  $region18: #{cell_forward.15} parent=0 // pred_check
    _
  $region19: #{cell_forward.15} parent=0 // pred_check_branch
    %122 = sbr.rel (0) target = $region21
  $region20: #{cell_forward.15} parent=0 // pred_region
    _
  $region21: #{cell_forward.15} parent=0 // pred_fallthru
    _

</llo_original>
